<compile_context>
chip_gen: v7x
topology: tpu7x:2x2x1
jax: 0.10.0
libtpu: 0.0.40
codegen_flags: <defaults>
</compile_context>

<pallas_src>
import functools

import jax
import jax.numpy as jnp
import numpy as np
from jax.experimental import pallas as pl
from jax.experimental.pallas import tpu as pltpu

# --- ACmix hyper-parameters (mirror the torch module defaults) --------------
IN_PLANES = 4
OUT_PLANES = 16
HEAD = 4
HEAD_DIM = OUT_PLANES // HEAD                       # 4
KERNEL_ATT = 7
KERNEL_CONV = 3
STRIDE = 1                                          # stride=1 path (h_out == h)
DILATION = 1
PAD_ATT = (DILATION * (KERNEL_ATT - 1) + 1) // 2    # 3
NTAP = KERNEL_ATT * KERNEL_ATT                      # 49
KC2 = KERNEL_CONV * KERNEL_CONV                     # 9
NCOL = HEAD_DIM * KC2 * KC2                         # 324

BATCH, HSIZE, WSIZE = 2, 16, 16


# ---------------------------------------------------------------------------
# Pallas kernel 1: fused projection  (qkv 1x1 conv, pe 1x1 conv, fc 1x1 conv)
# Layout inside the kernel: (channels, H*W) with H*W on the lane axis.
# ---------------------------------------------------------------------------
def _proj_kernel(x_ref, loc_ref, wqkv_ref, bqkv_ref, wp_ref, bp_ref, weff_ref,
                 qkv_ref, fconv_ref, pe_ref, *, cin, hw, nqkv):
    x = x_ref[0]                                   # (cin, hw)
    w = wqkv_ref[...]                              # (nqkv, cin)

    # q,k,v 1x1 convs merged: VPU broadcast-MACs (K=cin=4 -> skip the MXU).
    acc = jnp.zeros((nqkv, hw), jnp.float32)
    for ci in range(cin):
        acc = acc + w[:, ci:ci + 1] * x[ci:ci + 1, :]
    qkv = acc + bqkv_ref[...]                      # (nqkv, hw) + (nqkv, 1)
    qkv_ref[0] = qkv

    # positional-encoding 1x1 conv (K=2): broadcast-MACs as well.
    loc = loc_ref[...]                             # (2, hw)
    wp = wp_ref[...]                               # (head_dim, 2)
    pe = wp[:, 0:1] * loc[0:1, :] + wp[:, 1:2] * loc[1:2, :] + bp_ref[...]
    pe_ref[0] = pe                                 # (head_dim, hw)

    # fc 1x1 conv folded onto the qkv channel order: one MXU matmul, K=48.
    fconv_ref[0] = jnp.dot(weff_ref[...], qkv, preferred_element_type=jnp.float32)


def proj_pallas(x_f, loc, w_qkv, b_qkv, w_p, b_p, w_eff):
    B, CIN, HW = x_f.shape
    NQKV = w_qkv.shape[0]
    NEFF = w_eff.shape[0]
    HD = w_p.shape[0]
    kern = functools.partial(_proj_kernel, cin=CIN, hw=HW, nqkv=NQKV)
    return pl.pallas_call(
        kern,
        out_shape=(jax.ShapeDtypeStruct((B, NQKV, HW), jnp.float32),
                   jax.ShapeDtypeStruct((B, NEFF, HW), jnp.float32),
                   jax.ShapeDtypeStruct((B, HD, HW), jnp.float32)),
        grid=(B,),
        in_specs=[
            pl.BlockSpec((1, CIN, HW), lambda i: (i, 0, 0)),
            pl.BlockSpec((2, HW), lambda i: (0, 0)),
            pl.BlockSpec((NQKV, CIN), lambda i: (0, 0)),
            pl.BlockSpec((NQKV, 1), lambda i: (0, 0)),
            pl.BlockSpec((HD, 2), lambda i: (0, 0)),
            pl.BlockSpec((HD, 1), lambda i: (0, 0)),
            pl.BlockSpec((NEFF, NQKV), lambda i: (0, 0)),
        ],
        out_specs=(
            pl.BlockSpec((1, NQKV, HW), lambda i: (i, 0, 0)),
            pl.BlockSpec((1, NEFF, HW), lambda i: (i, 0, 0)),
            pl.BlockSpec((1, HD, HW), lambda i: (i, 0, 0)),
        ),
        compiler_params=pltpu.CompilerParams(dimension_semantics=("parallel",)),
    )(x_f, loc, w_qkv, b_qkv, w_p, b_p, w_eff)


# ---------------------------------------------------------------------------
# Pallas kernel 2: local-window attention + grouped dep_conv + rate mix
# All slabs are lane-dense (last dim = H*W = 256).
# ---------------------------------------------------------------------------
def _attn_conv_kernel(qkv_ref, kunf_ref, vunf_ref, rpe_ref, pe_ref, col_ref,
                      wblk_ref, rates_ref, o_ref, *, head, hd, scaling):
    q = qkv_ref[0, 0:head * hd, :] * scaling       # (16, hw), scaled once
    pe = pe_ref[0]                                 # (hd, hw)
    rpe = rpe_ref[0]                               # (hd, ntap, hw)

    out_heads = []
    for h in range(head):
        qh = q[h * hd:(h + 1) * hd, :]                        # (hd, hw)
        kh = kunf_ref[0, h * hd:(h + 1) * hd, :, :]           # (hd, ntap, hw)
        vh = vunf_ref[0, h * hd:(h + 1) * hd, :, :]           # (hd, ntap, hw)

        # hoisted tap-invariant term  sum_c q*pe  -> added once to all 49 taps
        s_pe = jnp.sum(qh * pe, axis=0, keepdims=True)        # (1, hw)

        # logits for all 49 taps as one lane-dense (ntap, hw) slab
        logits = jnp.sum(qh[:, None, :] * (kh - rpe), axis=0) + s_pe
        att = jnp.exp(logits - jnp.max(logits, axis=0, keepdims=True))
        att = att / jnp.sum(att, axis=0, keepdims=True)       # softmax over taps

        # weighted sum of v over the 49 taps, fused in the same head loop
        out_heads.append(jnp.sum(att[None, :, :] * vh, axis=1))   # (hd, hw)

    out_att = jnp.concatenate(out_heads, axis=0)               # (16, hw)

    # grouped 3x3 dep_conv as one MXU matmul with a block-diagonal weight
    out_conv = jnp.dot(wblk_ref[...], col_ref[0],
                       preferred_element_type=jnp.float32)     # (16, hw)

    o_ref[0] = rates_ref[0] * out_att + rates_ref[1] * out_conv


def attn_conv_pallas(qkv, k_unf, v_unf, rpe_unf, pe, col, w_blk, rates):
    B, NQKV, HW = qkv.shape
    NT = k_unf.shape[2]
    HD = pe.shape[1]
    kern = functools.partial(_attn_conv_kernel, head=HEAD, hd=HEAD_DIM,
                             scaling=float(HEAD_DIM) ** (-0.5))
    return pl.pallas_call(
        kern,
        out_shape=jax.ShapeDtypeStruct((B, OUT_PLANES, HW), jnp.float32),
        grid=(B,),
        in_specs=[
            pl.BlockSpec((1, NQKV, HW), lambda i: (i, 0, 0)),
            pl.BlockSpec((1, OUT_PLANES, NT, HW), lambda i: (i, 0, 0, 0)),
            pl.BlockSpec((1, OUT_PLANES, NT, HW), lambda i: (i, 0, 0, 0)),
            pl.BlockSpec((1, HD, NT, HW), lambda i: (0, 0, 0, 0)),
            pl.BlockSpec((1, HD, HW), lambda i: (i, 0, 0)),
            pl.BlockSpec((1, NCOL, HW), lambda i: (i, 0, 0)),
            pl.BlockSpec((OUT_PLANES, NCOL), lambda i: (0, 0)),
            pl.BlockSpec(memory_space=pltpu.MemorySpace.SMEM),   # rate1, rate2
        ],
        out_specs=pl.BlockSpec((1, OUT_PLANES, HW), lambda i: (i, 0, 0)),
        compiler_params=pltpu.CompilerParams(dimension_semantics=("parallel",)),
    )(qkv, k_unf, v_unf, rpe_unf, pe, col, w_blk, rates)


# ---------------------------------------------------------------------------
# Parameters (deterministic; mirrors shapes of the torch module's __init__)
# ---------------------------------------------------------------------------
def init_params(key):
    ks = jax.random.split(key, 10)

    def w(k, co, ci):
        return jax.random.normal(k, (co, ci), jnp.float32) * 0.1

    def b(k, co):
        return jax.random.normal(k, (co,), jnp.float32) * 0.05

    p = {
        "w1": w(ks[0], OUT_PLANES, IN_PLANES), "b1": b(ks[1], OUT_PLANES),
        "w2": w(ks[2], OUT_PLANES, IN_PLANES), "b2": b(ks[3], OUT_PLANES),
        "w3": w(ks[4], OUT_PLANES, IN_PLANES), "b3": b(ks[5], OUT_PLANES),
        "w_p": w(ks[6], HEAD_DIM, 2),          "b_p": b(ks[7], HEAD_DIM),
        "w_fc": w(ks[8], KC2, 3 * HEAD),                       # fc has no bias
        "rate1": jnp.float32(0.5), "rate2": jnp.float32(0.5),
    }
    # dep_conv weight exactly as reset_parameters(): identity shift kernels,
    # repeated over out_planes.  (dep_conv bias is set to None in the module.)
    kernel = np.zeros((KC2, KERNEL_CONV, KERNEL_CONV), np.float32)
    for i in range(KC2):
        kernel[i, i // KERNEL_CONV, i % KERNEL_CONV] = 1.0
    p["w_dep"] = jnp.asarray(np.tile(kernel[None], (OUT_PLANES, 1, 1, 1)))
    return p


# ---------------------------------------------------------------------------
# ACmix forward: 2 Pallas kernels + im2col / reshape glue (lane-dense slabs)
# ---------------------------------------------------------------------------
def acmix_forward(x, p):
    b, cin, H, W = x.shape
    HW = H * W

    # ---- host-side constant folding of small weights (exact permutation embeds) ----
    w_qkv = jnp.concatenate([p["w1"], p["w2"], p["w3"]], axis=0)        # (48, 4)
    b_qkv = jnp.concatenate([p["b1"], p["b2"], p["b3"]])[:, None]       # (48, 1)

    # W_eff (36, 48): f_conv[c*9+j, :] = sum_m w_fc[j, m] * qkv[part*16 + head*4 + c, :]
    eye_c = jnp.eye(HEAD_DIM, dtype=jnp.float32)                        # (c, c2)
    wf3 = p["w_fc"].reshape(KC2, 3, HEAD)                               # (j, part, head)
    w_eff = (eye_c[:, None, None, None, :]
             * wf3[None, :, :, :, None]).reshape(HEAD_DIM * KC2, 3 * OUT_PLANES)

    # W_blk (16, 324): block-diagonal dep_conv weight (group g = o // 4)
    eye_g = jnp.eye(HEAD_DIM, dtype=jnp.float32)                        # (g, g2)
    wg3 = p["w_dep"].reshape(HEAD_DIM, OUT_PLANES // HEAD_DIM, KC2 * KC2)
    w_blk = (eye_g[:, None, :, None] * wg3[:, :, None, :]).reshape(OUT_PLANES, NCOL)

    # position() flattened to (2, HW)
    loc_w = jnp.tile(jnp.linspace(-1.0, 1.0, W)[None, :], (H, 1))
    loc_h = jnp.tile(jnp.linspace(-1.0, 1.0, H)[:, None], (1, W))
    loc = jnp.stack([loc_w.reshape(HW), loc_h.reshape(HW)], axis=0).astype(jnp.float32)

    # ---- kernel 1: fused qkv / pe / fc projections (grid = (B,), parallel) ----
    x_f = x.reshape(b, cin, HW)                                          # pure reshape
    qkv, fconv, pe = proj_pallas(x_f, loc, w_qkv, b_qkv,
                                 p["w_p"], p["b_p"][:, None], w_eff)

    # ---- JAX glue: reflect-pad + 49-tap im2col (lane-dense (..,49,HW) slabs) ----
    def refl(a):
        return jnp.pad(a, [(0, 0)] * (a.ndim - 2) + [(PAD_ATT, PAD_ATT)] * 2,
                       mode="reflect")

    def unfold_att(a):          # (..., H+6, W+6) -> (..., 49, HW)
        slabs = [a[..., dy:dy + H, dx:dx + W]
                 for dy in range(KERNEL_ATT) for dx in range(KERNEL_ATT)]
        u = jnp.stack(slabs, axis=-3)
        return u.reshape(a.shape[:-2] + (NTAP, HW))

    k_sp = qkv[:, OUT_PLANES:2 * OUT_PLANES, :].reshape(b * HEAD, HEAD_DIM, H, W)
    v_sp = qkv[:, 2 * OUT_PLANES:3 * OUT_PLANES, :].reshape(b * HEAD, HEAD_DIM, H, W)
    pe_sp = pe[0].reshape(HEAD_DIM, H, W)

    k_unf = unfold_att(refl(k_sp)).reshape(b, OUT_PLANES, NTAP, HW)
    v_unf = unfold_att(refl(v_sp)).reshape(b, OUT_PLANES, NTAP, HW)
    rpe_unf = unfold_att(refl(pe_sp))[None]                              # (1, HD, 49, HW)

    # ---- JAX glue: zero-pad + 3x3 im2col for the grouped dep_conv ----
    f_sp = fconv.reshape(b, HEAD_DIM * KC2, H, W)
    f_pad = jnp.pad(f_sp, ((0, 0), (0, 0), (1, 1), (1, 1)))
    dep_slabs = [f_pad[:, :, ky:ky + H, kx:kx + W]
                 for ky in range(KERNEL_CONV) for kx in range(KERNEL_CONV)]
    col = jnp.stack(dep_slabs, axis=2).reshape(b, NCOL, HW)              # (b, 324, HW)

    # ---- kernel 2: attention + dep_conv + rate mix (grid = (B,), parallel) ----
    rates = jnp.stack([p["rate1"], p["rate2"]])
    out = attn_conv_pallas(qkv, k_unf, v_unf, rpe_unf, pe, col, w_blk, rates)
    return out.reshape(b, OUT_PLANES, H, W)


# ---------------------------------------------------------------------------
# Pure-JAX reference (mirrors the torch forward) for a correctness check
# ---------------------------------------------------------------------------
def reference_forward(x, p):
    P = jax.lax.Precision.HIGHEST
    b, cin, H, W = x.shape
    HW = H * W
    scaling = float(HEAD_DIM) ** (-0.5)

    def conv1x1(wm, bias):
        return jnp.einsum("oc,bchw->bohw", wm, x, precision=P) + bias[None, :, None, None]

    q = conv1x1(p["w1"], p["b1"])
    k = conv1x1(p["w2"], p["b2"])
    v = conv1x1(p["w3"], p["b3"])

    loc_w = jnp.tile(jnp.linspace(-1.0, 1.0, W)[None, :], (H, 1))
    loc_h = jnp.tile(jnp.linspace(-1.0, 1.0, H)[:, None], (1, W))
    loc = jnp.stack([loc_w, loc_h], 0)[None].astype(jnp.float32)         # (1,2,H,W)
    pe = (jnp.einsum("oc,bchw->bohw", p["w_p"], loc, precision=P)
          + p["b_p"][None, :, None, None])

    q_att = q.reshape(b * HEAD, HEAD_DIM, H, W) * scaling
    k_att = k.reshape(b * HEAD, HEAD_DIM, H, W)
    v_att = v.reshape(b * HEAD, HEAD_DIM, H, W)
    refl = lambda a: jnp.pad(a, ((0, 0), (0, 0), (PAD_ATT, PAD_ATT), (PAD_ATT, PAD_ATT)),
                             mode="reflect")
    k_pad, v_pad, pe_pad = refl(k_att), refl(v_att), refl(pe)

    unfold = lambda a: jnp.stack([a[:, :, dy:dy + H, dx:dx + W]
                                  for dy in range(KERNEL_ATT)
                                  for dx in range(KERNEL_ATT)], axis=2)
    unf_k, unf_rpe, unf_v = unfold(k_pad), unfold(pe_pad), unfold(v_pad)
    att = jnp.sum(q_att[:, :, None] * (unf_k + pe[:, :, None] - unf_rpe), axis=1)
    att = jax.nn.softmax(att, axis=1)
    out_att = jnp.sum(att[:, None] * unf_v, axis=2).reshape(b, OUT_PLANES, H, W)

    qkv = jnp.concatenate([q.reshape(b, HEAD, HEAD_DIM, HW),
                           k.reshape(b, HEAD, HEAD_DIM, HW),
                           v.reshape(b, HEAD, HEAD_DIM, HW)], axis=1)
    f_all = jnp.einsum("oc,bcds->bods", p["w_fc"], qkv, precision=P)     # (b,9,HD,HW)
    f_conv = jnp.transpose(f_all, (0, 2, 1, 3)).reshape(b, HEAD_DIM * 9, H, W)
    fpad = jnp.pad(f_conv, ((0, 0), (0, 0), (1, 1), (1, 1)))

    KC = KERNEL_CONV
    out_conv = jnp.zeros((b, OUT_PLANES, H, W), jnp.float32)
    for o in range(OUT_PLANES):
        g = o // HEAD
        acc = jnp.zeros((b, H, W), jnp.float32)
        for j in range(KC * KC):
            for ky in range(KC):
                for kx in range(KC):
                    acc = acc + p["w_dep"][o, j, ky, kx] * fpad[:, g * KC * KC + j,
                                                                ky:ky + H, kx:kx + W]
        out_conv = out_conv.at[:, o].set(acc)

    return p["rate1"] * out_att + p["rate2"] * out_conv


# ---------------------------------------------------------------------------
if __name__ == "__main__":
    key = jax.random.PRNGKey(0)
    pkey, xkey = jax.random.split(key)
    params = init_params(pkey)
    x = jax.random.normal(xkey, (BATCH, IN_PLANES, HSIZE, WSIZE), jnp.float32)

    out = jax.jit(acmix_forward)(x, params)
    out = jax.block_until_ready(out)
    assert out.shape == (BATCH, OUT_PLANES, HSIZE, WSIZE)
    assert bool(jnp.all(jnp.isfinite(out)))

    ref = jax.jit(reference_forward)(x, params)
    np.testing.assert_allclose(np.asarray(out), np.asarray(ref), rtol=2e-3, atol=2e-3)

    print("KERNEL_OK")
</pallas_src>

<mosaic_0001>
module attributes {stable_mosaic.version = 11 : i64} {
  func.func @_proj_kernel(%arg0: i32, %arg1: memref<1x4x256xf32, #tpu.memory_space<vmem>>, %arg2: memref<2x256xf32, #tpu.memory_space<vmem>>, %arg3: memref<48x4xf32, #tpu.memory_space<vmem>>, %arg4: memref<48x1xf32, #tpu.memory_space<vmem>>, %arg5: memref<4x2xf32, #tpu.memory_space<vmem>>, %arg6: memref<4x1xf32, #tpu.memory_space<vmem>>, %arg7: memref<36x48xf32, #tpu.memory_space<vmem>>, %arg8: memref<1x48x256xf32, #tpu.memory_space<vmem>>, %arg9: memref<1x36x256xf32, #tpu.memory_space<vmem>>, %arg10: memref<1x4x256xf32, #tpu.memory_space<vmem>>) attributes {dimension_semantics = [#tpu.dimension_semantics<parallel>], iteration_bounds = array<i64: 2>, scalar_prefetch = 0 : i64, scratch_operands = 0 : i64, tpu.core_type = #tpu.core_type<tc>, window_params = [{transform_indices = @transform_0, window_bounds = array<i64: 1, 4, 256>}, {pipeline_mode = #tpu.pipeline_mode<synchronous>, transform_indices = @transform_1, window_bounds = array<i64: 2, 256>}, {pipeline_mode = #tpu.pipeline_mode<synchronous>, transform_indices = @transform_2, window_bounds = array<i64: 48, 4>}, {pipeline_mode = #tpu.pipeline_mode<synchronous>, transform_indices = @transform_3, window_bounds = array<i64: 48, 1>}, {pipeline_mode = #tpu.pipeline_mode<synchronous>, transform_indices = @transform_4, window_bounds = array<i64: 4, 2>}, {pipeline_mode = #tpu.pipeline_mode<synchronous>, transform_indices = @transform_5, window_bounds = array<i64: 4, 1>}, {pipeline_mode = #tpu.pipeline_mode<synchronous>, transform_indices = @transform_6, window_bounds = array<i64: 36, 48>}, {transform_indices = @transform_7, window_bounds = array<i64: 1, 48, 256>}, {transform_indices = @transform_8, window_bounds = array<i64: 1, 36, 256>}, {transform_indices = @transform_9, window_bounds = array<i64: 1, 4, 256>}]} {
    %c0 = arith.constant 0 : index
    %c0_0 = arith.constant 0 : index
    %c0_1 = arith.constant 0 : index
    %0 = vector.load %arg1[%c0, %c0_0, %c0_1] : memref<1x4x256xf32, #tpu.memory_space<vmem>>, vector<1x4x256xf32>
    %1 = vector.shape_cast %0 : vector<1x4x256xf32> to vector<4x256xf32>
    %c0_2 = arith.constant 0 : index
    %c0_3 = arith.constant 0 : index
    %2 = vector.load %arg3[%c0_2, %c0_3] : memref<48x4xf32, #tpu.memory_space<vmem>>, vector<48x4xf32>
    %cst = arith.constant 0.000000e+00 : f32
    %3 = vector.broadcast %cst : f32 to vector<48x256xf32>
    %4 = vector.extract_strided_slice %2 {offsets = [0, 0], sizes = [48, 1], strides = [1, 1]} : vector<48x4xf32> to vector<48x1xf32>
    %5 = vector.extract_strided_slice %1 {offsets = [0, 0], sizes = [1, 256], strides = [1, 1]} : vector<4x256xf32> to vector<1x256xf32>
    %6 = vector.broadcast %4 : vector<48x1xf32> to vector<48x256xf32>
    %7 = vector.broadcast %5 : vector<1x256xf32> to vector<48x256xf32>
    %8 = arith.mulf %6, %7 : vector<48x256xf32>
    %9 = arith.addf %3, %8 : vector<48x256xf32>
    %10 = vector.extract_strided_slice %2 {offsets = [0, 1], sizes = [48, 1], strides = [1, 1]} : vector<48x4xf32> to vector<48x1xf32>
    %11 = vector.extract_strided_slice %1 {offsets = [1, 0], sizes = [1, 256], strides = [1, 1]} : vector<4x256xf32> to vector<1x256xf32>
    %12 = vector.broadcast %10 : vector<48x1xf32> to vector<48x256xf32>
    %13 = vector.broadcast %11 : vector<1x256xf32> to vector<48x256xf32>
    %14 = arith.mulf %12, %13 : vector<48x256xf32>
    %15 = arith.addf %9, %14 : vector<48x256xf32>
    %16 = vector.extract_strided_slice %2 {offsets = [0, 2], sizes = [48, 1], strides = [1, 1]} : vector<48x4xf32> to vector<48x1xf32>
    %17 = vector.extract_strided_slice %1 {offsets = [2, 0], sizes = [1, 256], strides = [1, 1]} : vector<4x256xf32> to vector<1x256xf32>
    %18 = vector.broadcast %16 : vector<48x1xf32> to vector<48x256xf32>
    %19 = vector.broadcast %17 : vector<1x256xf32> to vector<48x256xf32>
    %20 = arith.mulf %18, %19 : vector<48x256xf32>
    %21 = arith.addf %15, %20 : vector<48x256xf32>
    %22 = vector.extract_strided_slice %2 {offsets = [0, 3], sizes = [48, 1], strides = [1, 1]} : vector<48x4xf32> to vector<48x1xf32>
    %23 = vector.extract_strided_slice %1 {offsets = [3, 0], sizes = [1, 256], strides = [1, 1]} : vector<4x256xf32> to vector<1x256xf32>
    %24 = vector.broadcast %22 : vector<48x1xf32> to vector<48x256xf32>
    %25 = vector.broadcast %23 : vector<1x256xf32> to vector<48x256xf32>
    %26 = arith.mulf %24, %25 : vector<48x256xf32>
    %27 = arith.addf %21, %26 : vector<48x256xf32>
    %c0_4 = arith.constant 0 : index
    %c0_5 = arith.constant 0 : index
    %28 = vector.load %arg4[%c0_4, %c0_5] : memref<48x1xf32, #tpu.memory_space<vmem>>, vector<48x1xf32>
    %29 = vector.broadcast %28 : vector<48x1xf32> to vector<48x256xf32>
    %30 = arith.addf %27, %29 : vector<48x256xf32>
    %c0_6 = arith.constant 0 : index
    %c0_7 = arith.constant 0 : index
    %c0_8 = arith.constant 0 : index
    %31 = vector.load %arg8[%c0_6, %c0_7, %c0_8] : memref<1x48x256xf32, #tpu.memory_space<vmem>>, vector<1x48x256xf32>
    %32 = vector.shape_cast %31 : vector<1x48x256xf32> to vector<48x256xf32>
    %33 = vector.shape_cast %30 : vector<48x256xf32> to vector<1x48x256xf32>
    tpu.vector_store %arg8[%c0_6, %c0_7, %c0_8], %33 {strides = array<i32>} : memref<1x48x256xf32, #tpu.memory_space<vmem>>, vector<1x48x256xf32>,
    %c0_9 = arith.constant 0 : index
    %c0_10 = arith.constant 0 : index
    %34 = vector.load %arg2[%c0_9, %c0_10] : memref<2x256xf32, #tpu.memory_space<vmem>>, vector<2x256xf32>
    %c0_11 = arith.constant 0 : index
    %c0_12 = arith.constant 0 : index
    %35 = vector.load %arg5[%c0_11, %c0_12] : memref<4x2xf32, #tpu.memory_space<vmem>>, vector<4x2xf32>
    %36 = vector.extract_strided_slice %35 {offsets = [0, 0], sizes = [4, 1], strides = [1, 1]} : vector<4x2xf32> to vector<4x1xf32>
    %37 = vector.extract_strided_slice %34 {offsets = [0, 0], sizes = [1, 256], strides = [1, 1]} : vector<2x256xf32> to vector<1x256xf32>
    %38 = vector.broadcast %36 : vector<4x1xf32> to vector<4x256xf32>
    %39 = vector.broadcast %37 : vector<1x256xf32> to vector<4x256xf32>
    %40 = arith.mulf %38, %39 : vector<4x256xf32>
    %41 = vector.extract_strided_slice %35 {offsets = [0, 1], sizes = [4, 1], strides = [1, 1]} : vector<4x2xf32> to vector<4x1xf32>
    %42 = vector.extract_strided_slice %34 {offsets = [1, 0], sizes = [1, 256], strides = [1, 1]} : vector<2x256xf32> to vector<1x256xf32>
    %43 = vector.broadcast %41 : vector<4x1xf32> to vector<4x256xf32>
    %44 = vector.broadcast %42 : vector<1x256xf32> to vector<4x256xf32>
    %45 = arith.mulf %43, %44 : vector<4x256xf32>
    %46 = arith.addf %40, %45 : vector<4x256xf32>
    %c0_13 = arith.constant 0 : index
    %c0_14 = arith.constant 0 : index
    %47 = vector.load %arg6[%c0_13, %c0_14] : memref<4x1xf32, #tpu.memory_space<vmem>>, vector<4x1xf32>
    %48 = vector.broadcast %47 : vector<4x1xf32> to vector<4x256xf32>
    %49 = arith.addf %46, %48 : vector<4x256xf32>
    %c0_15 = arith.constant 0 : index
    %c0_16 = arith.constant 0 : index
    %c0_17 = arith.constant 0 : index
    %50 = vector.load %arg10[%c0_15, %c0_16, %c0_17] : memref<1x4x256xf32, #tpu.memory_space<vmem>>, vector<1x4x256xf32>
    %51 = vector.shape_cast %50 : vector<1x4x256xf32> to vector<4x256xf32>
    %52 = vector.shape_cast %49 : vector<4x256xf32> to vector<1x4x256xf32>
    tpu.vector_store %arg10[%c0_15, %c0_16, %c0_17], %52 {strides = array<i32>} : memref<1x4x256xf32, #tpu.memory_space<vmem>>, vector<1x4x256xf32>,
    %c0_18 = arith.constant 0 : index
    %c0_19 = arith.constant 0 : index
    %53 = vector.load %arg7[%c0_18, %c0_19] : memref<36x48xf32, #tpu.memory_space<vmem>>, vector<36x48xf32>
    %cst_20 = arith.constant dense<0.000000e+00> : vector<36x256xf32>
    %54 = tpu.matmul %53, %30, %cst_20 {dimension_numbers = #tpu.dot_dimension_numbers<[1], [0], [0], [1], [0, 0, 1, 1], [], []>} : vector<36x48xf32>, vector<48x256xf32>, vector<36x256xf32> -> vector<36x256xf32>
    %c0_21 = arith.constant 0 : index
    %c0_22 = arith.constant 0 : index
    %c0_23 = arith.constant 0 : index
    %55 = vector.load %arg9[%c0_21, %c0_22, %c0_23] : memref<1x36x256xf32, #tpu.memory_space<vmem>>, vector<1x36x256xf32>
    %56 = vector.shape_cast %55 : vector<1x36x256xf32> to vector<36x256xf32>
    %57 = vector.shape_cast %54 : vector<36x256xf32> to vector<1x36x256xf32>
    tpu.vector_store %arg9[%c0_21, %c0_22, %c0_23], %57 {strides = array<i32>} : memref<1x36x256xf32, #tpu.memory_space<vmem>>, vector<1x36x256xf32>,
    return
  }
  func.func @transform_0(%arg0: i32) -> (i32, i32, i32) {
    %c0_i32 = arith.constant 0 : i32
    %c0_i32_0 = arith.constant 0 : i32
    %c0_i32_1 = arith.constant 0 : i32
    return %arg0, %c0_i32, %c0_i32_0 : i32, i32, i32
  }
  func.func @transform_1(%arg0: i32) -> (i32, i32) {
    %c0_i32 = arith.constant 0 : i32
    %c0_i32_0 = arith.constant 0 : i32
    %c0_i32_1 = arith.constant 0 : i32
    return %c0_i32, %c0_i32_0 : i32, i32
  }
  func.func @transform_2(%arg0: i32) -> (i32, i32) {
    %c0_i32 = arith.constant 0 : i32
    %c0_i32_0 = arith.constant 0 : i32
    %c0_i32_1 = arith.constant 0 : i32
    return %c0_i32, %c0_i32_0 : i32, i32
  }
  func.func @transform_3(%arg0: i32) -> (i32, i32) {
    %c0_i32 = arith.constant 0 : i32
    %c0_i32_0 = arith.constant 0 : i32
    %c0_i32_1 = arith.constant 0 : i32
    return %c0_i32, %c0_i32_0 : i32, i32
  }
  func.func @transform_4(%arg0: i32) -> (i32, i32) {
    %c0_i32 = arith.constant 0 : i32
    %c0_i32_0 = arith.constant 0 : i32
    %c0_i32_1 = arith.constant 0 : i32
    return %c0_i32, %c0_i32_0 : i32, i32
  }
  func.func @transform_5(%arg0: i32) -> (i32, i32) {
    %c0_i32 = arith.constant 0 : i32
    %c0_i32_0 = arith.constant 0 : i32
    %c0_i32_1 = arith.constant 0 : i32
    return %c0_i32, %c0_i32_0 : i32, i32
  }
  func.func @transform_6(%arg0: i32) -> (i32, i32) {
    %c0_i32 = arith.constant 0 : i32
    %c0_i32_0 = arith.constant 0 : i32
    %c0_i32_1 = arith.constant 0 : i32
    return %c0_i32, %c0_i32_0 : i32, i32
  }
  func.func @transform_7(%arg0: i32) -> (i32, i32, i32) {
    %c0_i32 = arith.constant 0 : i32
    %c0_i32_0 = arith.constant 0 : i32
    %c0_i32_1 = arith.constant 0 : i32
    return %arg0, %c0_i32, %c0_i32_0 : i32, i32, i32
  }
  func.func @transform_8(%arg0: i32) -> (i32, i32, i32) {
    %c0_i32 = arith.constant 0 : i32
    %c0_i32_0 = arith.constant 0 : i32
    %c0_i32_1 = arith.constant 0 : i32
    return %arg0, %c0_i32, %c0_i32_0 : i32, i32, i32
  }
  func.func @transform_9(%arg0: i32) -> (i32, i32, i32) {
    %c0_i32 = arith.constant 0 : i32
    %c0_i32_0 = arith.constant 0 : i32
    %c0_i32_1 = arith.constant 0 : i32
    return %arg0, %c0_i32, %c0_i32_0 : i32, i32, i32
  }
}

module attributes {stable_mosaic.version = 11 : i64} {
  func.func @_attn_conv_kernel(%arg0: i32, %arg1: memref<1x48x256xf32, #tpu.memory_space<vmem>>, %arg2: memref<1x16x49x256xf32, #tpu.memory_space<vmem>>, %arg3: memref<1x16x49x256xf32, #tpu.memory_space<vmem>>, %arg4: memref<1x4x49x256xf32, #tpu.memory_space<vmem>>, %arg5: memref<1x4x256xf32, #tpu.memory_space<vmem>>, %arg6: memref<1x324x256xf32, #tpu.memory_space<vmem>>, %arg7: memref<16x324xf32, #tpu.memory_space<vmem>>, %arg8: memref<2xf32, #tpu.memory_space<smem>>, %arg9: memref<1x16x256xf32, #tpu.memory_space<vmem>>) attributes {dimension_semantics = [#tpu.dimension_semantics<parallel>], iteration_bounds = array<i64: 2>, scalar_prefetch = 0 : i64, scratch_operands = 0 : i64, tpu.core_type = #tpu.core_type<tc>, window_params = [{transform_indices = @transform_0, window_bounds = array<i64: 1, 48, 256>}, {transform_indices = @transform_1, window_bounds = array<i64: 1, 16, 49, 256>}, {transform_indices = @transform_2, window_bounds = array<i64: 1, 16, 49, 256>}, {pipeline_mode = #tpu.pipeline_mode<synchronous>, transform_indices = @transform_3, window_bounds = array<i64: 1, 4, 49, 256>}, {transform_indices = @transform_4, window_bounds = array<i64: 1, 4, 256>}, {transform_indices = @transform_5, window_bounds = array<i64: 1, 324, 256>}, {pipeline_mode = #tpu.pipeline_mode<synchronous>, transform_indices = @transform_6, window_bounds = array<i64: 16, 324>}, {transform_indices = @transform_7, window_bounds = array<i64: 2>}, {transform_indices = @transform_8, window_bounds = array<i64: 1, 16, 256>}]} {
    %c0 = arith.constant 0 : index
    %c0_0 = arith.constant 0 : index
    %c0_1 = arith.constant 0 : index
    %0 = vector.load %arg1[%c0, %c0_0, %c0_1] : memref<1x48x256xf32, #tpu.memory_space<vmem>>, vector<1x16x256xf32>
    %1 = vector.shape_cast %0 : vector<1x16x256xf32> to vector<16x256xf32>
    %cst = arith.constant 5.000000e-01 : f32
    %2 = vector.broadcast %cst : f32 to vector<16x256xf32>
    %3 = arith.mulf %1, %2 : vector<16x256xf32>
    %c0_2 = arith.constant 0 : index
    %c0_3 = arith.constant 0 : index
    %c0_4 = arith.constant 0 : index
    %4 = vector.load %arg5[%c0_2, %c0_3, %c0_4] : memref<1x4x256xf32, #tpu.memory_space<vmem>>, vector<1x4x256xf32>
    %5 = vector.shape_cast %4 : vector<1x4x256xf32> to vector<4x256xf32>
    %c0_5 = arith.constant 0 : index
    %c0_6 = arith.constant 0 : index
    %c0_7 = arith.constant 0 : index
    %c0_8 = arith.constant 0 : index
    %6 = vector.load %arg4[%c0_5, %c0_6, %c0_7, %c0_8] : memref<1x4x49x256xf32, #tpu.memory_space<vmem>>, vector<1x4x49x256xf32>
    %7 = vector.shape_cast %6 : vector<1x4x49x256xf32> to vector<4x49x256xf32>
    %8 = vector.extract_strided_slice %3 {offsets = [0, 0], sizes = [4, 256], strides = [1, 1]} : vector<16x256xf32> to vector<4x256xf32>
    %c0_9 = arith.constant 0 : index
    %c0_10 = arith.constant 0 : index
    %c0_11 = arith.constant 0 : index
    %c0_12 = arith.constant 0 : index
    %9 = vector.load %arg2[%c0_9, %c0_10, %c0_11, %c0_12] : memref<1x16x49x256xf32, #tpu.memory_space<vmem>>, vector<1x4x49x256xf32>
    %10 = vector.shape_cast %9 : vector<1x4x49x256xf32> to vector<4x49x256xf32>
    %c0_13 = arith.constant 0 : index
    %c0_14 = arith.constant 0 : index
    %c0_15 = arith.constant 0 : index
    %c0_16 = arith.constant 0 : index
    %11 = vector.load %arg3[%c0_13, %c0_14, %c0_15, %c0_16] : memref<1x16x49x256xf32, #tpu.memory_space<vmem>>, vector<1x4x49x256xf32>
    %12 = vector.shape_cast %11 : vector<1x4x49x256xf32> to vector<4x49x256xf32>
    %13 = arith.mulf %8, %5 : vector<4x256xf32>
    %cst_17 = arith.constant dense<0.000000e+00> : vector<256xf32>
    %14 = vector.multi_reduction <add>, %13, %cst_17 [0] : vector<4x256xf32> to vector<256xf32>
    %15 = vector.shape_cast %14 : vector<256xf32> to vector<1x256xf32>
    %16 = vector.shape_cast %8 : vector<4x256xf32> to vector<4x1x256xf32>
    %17 = arith.subf %10, %7 : vector<4x49x256xf32>
    %18 = vector.broadcast %16 : vector<4x1x256xf32> to vector<4x49x256xf32>
    %19 = arith.mulf %18, %17 : vector<4x49x256xf32>
    %cst_18 = arith.constant dense<0.000000e+00> : vector<49x256xf32>
    %20 = vector.multi_reduction <add>, %19, %cst_18 [0] : vector<4x49x256xf32> to vector<49x256xf32>
    %21 = vector.broadcast %15 : vector<1x256xf32> to vector<49x256xf32>
    %22 = arith.addf %20, %21 : vector<49x256xf32>
    %cst_19 = arith.constant dense<0xFF800000> : vector<256xf32>
    %23 = vector.multi_reduction <maximumf>, %22, %cst_19 [0] : vector<49x256xf32> to vector<256xf32>
    %24 = vector.shape_cast %23 : vector<256xf32> to vector<1x256xf32>
    %25 = vector.broadcast %24 : vector<1x256xf32> to vector<49x256xf32>
    %26 = arith.subf %22, %25 : vector<49x256xf32>
    %27 = math.exp %26 : vector<49x256xf32>
    %cst_20 = arith.constant dense<0.000000e+00> : vector<256xf32>
    %28 = vector.multi_reduction <add>, %27, %cst_20 [0] : vector<49x256xf32> to vector<256xf32>
    %29 = vector.shape_cast %28 : vector<256xf32> to vector<1x256xf32>
    %30 = vector.broadcast %29 : vector<1x256xf32> to vector<49x256xf32>
    %31 = arith.divf %27, %30 : vector<49x256xf32>
    %32 = vector.shape_cast %31 : vector<49x256xf32> to vector<1x49x256xf32>
    %33 = vector.broadcast %32 : vector<1x49x256xf32> to vector<4x49x256xf32>
    %34 = arith.mulf %33, %12 : vector<4x49x256xf32>
    %cst_21 = arith.constant dense<0.000000e+00> : vector<4x256xf32>
    %35 = vector.multi_reduction <add>, %34, %cst_21 [1] : vector<4x49x256xf32> to vector<4x256xf32>
    %36 = vector.extract_strided_slice %3 {offsets = [4, 0], sizes = [4, 256], strides = [1, 1]} : vector<16x256xf32> to vector<4x256xf32>
    %c0_22 = arith.constant 0 : index
    %c4 = arith.constant 4 : index
    %c0_23 = arith.constant 0 : index
    %c0_24 = arith.constant 0 : index
    %37 = vector.load %arg2[%c0_22, %c4, %c0_23, %c0_24] : memref<1x16x49x256xf32, #tpu.memory_space<vmem>>, vector<1x4x49x256xf32>
    %38 = vector.shape_cast %37 : vector<1x4x49x256xf32> to vector<4x49x256xf32>
    %c0_25 = arith.constant 0 : index
    %c4_26 = arith.constant 4 : index
    %c0_27 = arith.constant 0 : index
    %c0_28 = arith.constant 0 : index
    %39 = vector.load %arg3[%c0_25, %c4_26, %c0_27, %c0_28] : memref<1x16x49x256xf32, #tpu.memory_space<vmem>>, vector<1x4x49x256xf32>
    %40 = vector.shape_cast %39 : vector<1x4x49x256xf32> to vector<4x49x256xf32>
    %41 = arith.mulf %36, %5 : vector<4x256xf32>
    %cst_29 = arith.constant dense<0.000000e+00> : vector<256xf32>
    %42 = vector.multi_reduction <add>, %41, %cst_29 [0] : vector<4x256xf32> to vector<256xf32>
    %43 = vector.shape_cast %42 : vector<256xf32> to vector<1x256xf32>
    %44 = vector.shape_cast %36 : vector<4x256xf32> to vector<4x1x256xf32>
    %45 = arith.subf %38, %7 : vector<4x49x256xf32>
    %46 = vector.broadcast %44 : vector<4x1x256xf32> to vector<4x49x256xf32>
    %47 = arith.mulf %46, %45 : vector<4x49x256xf32>
    %cst_30 = arith.constant dense<0.000000e+00> : vector<49x256xf32>
    %48 = vector.multi_reduction <add>, %47, %cst_30 [0] : vector<4x49x256xf32> to vector<49x256xf32>
    %49 = vector.broadcast %43 : vector<1x256xf32> to vector<49x256xf32>
    %50 = arith.addf %48, %49 : vector<49x256xf32>
    %cst_31 = arith.constant dense<0xFF800000> : vector<256xf32>
    %51 = vector.multi_reduction <maximumf>, %50, %cst_31 [0] : vector<49x256xf32> to vector<256xf32>
    %52 = vector.shape_cast %51 : vector<256xf32> to vector<1x256xf32>
    %53 = vector.broadcast %52 : vector<1x256xf32> to vector<49x256xf32>
    %54 = arith.subf %50, %53 : vector<49x256xf32>
    %55 = math.exp %54 : vector<49x256xf32>
    %cst_32 = arith.constant dense<0.000000e+00> : vector<256xf32>
    %56 = vector.multi_reduction <add>, %55, %cst_32 [0] : vector<49x256xf32> to vector<256xf32>
    %57 = vector.shape_cast %56 : vector<256xf32> to vector<1x256xf32>
    %58 = vector.broadcast %57 : vector<1x256xf32> to vector<49x256xf32>
    %59 = arith.divf %55, %58 : vector<49x256xf32>
    %60 = vector.shape_cast %59 : vector<49x256xf32> to vector<1x49x256xf32>
    %61 = vector.broadcast %60 : vector<1x49x256xf32> to vector<4x49x256xf32>
    %62 = arith.mulf %61, %40 : vector<4x49x256xf32>
    %cst_33 = arith.constant dense<0.000000e+00> : vector<4x256xf32>
    %63 = vector.multi_reduction <add>, %62, %cst_33 [1] : vector<4x49x256xf32> to vector<4x256xf32>
    %64 = vector.extract_strided_slice %3 {offsets = [8, 0], sizes = [4, 256], strides = [1, 1]} : vector<16x256xf32> to vector<4x256xf32>
    %c0_34 = arith.constant 0 : index
    %c8 = arith.constant 8 : index
    %c0_35 = arith.constant 0 : index
    %c0_36 = arith.constant 0 : index
    %65 = vector.load %arg2[%c0_34, %c8, %c0_35, %c0_36] : memref<1x16x49x256xf32, #tpu.memory_space<vmem>>, vector<1x4x49x256xf32>
    %66 = vector.shape_cast %65 : vector<1x4x49x256xf32> to vector<4x49x256xf32>
    %c0_37 = arith.constant 0 : index
    %c8_38 = arith.constant 8 : index
    %c0_39 = arith.constant 0 : index
    %c0_40 = arith.constant 0 : index
    %67 = vector.load %arg3[%c0_37, %c8_38, %c0_39, %c0_40] : memref<1x16x49x256xf32, #tpu.memory_space<vmem>>, vector<1x4x49x256xf32>
    %68 = vector.shape_cast %67 : vector<1x4x49x256xf32> to vector<4x49x256xf32>
    %69 = arith.mulf %64, %5 : vector<4x256xf32>
    %cst_41 = arith.constant dense<0.000000e+00> : vector<256xf32>
    %70 = vector.multi_reduction <add>, %69, %cst_41 [0] : vector<4x256xf32> to vector<256xf32>
    %71 = vector.shape_cast %70 : vector<256xf32> to vector<1x256xf32>
    %72 = vector.shape_cast %64 : vector<4x256xf32> to vector<4x1x256xf32>
    %73 = arith.subf %66, %7 : vector<4x49x256xf32>
    %74 = vector.broadcast %72 : vector<4x1x256xf32> to vector<4x49x256xf32>
    %75 = arith.mulf %74, %73 : vector<4x49x256xf32>
    %cst_42 = arith.constant dense<0.000000e+00> : vector<49x256xf32>
    %76 = vector.multi_reduction <add>, %75, %cst_42 [0] : vector<4x49x256xf32> to vector<49x256xf32>
    %77 = vector.broadcast %71 : vector<1x256xf32> to vector<49x256xf32>
    %78 = arith.addf %76, %77 : vector<49x256xf32>
    %cst_43 = arith.constant dense<0xFF800000> : vector<256xf32>
    %79 = vector.multi_reduction <maximumf>, %78, %cst_43 [0] : vector<49x256xf32> to vector<256xf32>
    %80 = vector.shape_cast %79 : vector<256xf32> to vector<1x256xf32>
    %81 = vector.broadcast %80 : vector<1x256xf32> to vector<49x256xf32>
    %82 = arith.subf %78, %81 : vector<49x256xf32>
    %83 = math.exp %82 : vector<49x256xf32>
    %cst_44 = arith.constant dense<0.000000e+00> : vector<256xf32>
    %84 = vector.multi_reduction <add>, %83, %cst_44 [0] : vector<49x256xf32> to vector<256xf32>
    %85 = vector.shape_cast %84 : vector<256xf32> to vector<1x256xf32>
    %86 = vector.broadcast %85 : vector<1x256xf32> to vector<49x256xf32>
    %87 = arith.divf %83, %86 : vector<49x256xf32>
    %88 = vector.shape_cast %87 : vector<49x256xf32> to vector<1x49x256xf32>
    %89 = vector.broadcast %88 : vector<1x49x256xf32> to vector<4x49x256xf32>
    %90 = arith.mulf %89, %68 : vector<4x49x256xf32>
    %cst_45 = arith.constant dense<0.000000e+00> : vector<4x256xf32>
    %91 = vector.multi_reduction <add>, %90, %cst_45 [1] : vector<4x49x256xf32> to vector<4x256xf32>
    %92 = vector.extract_strided_slice %3 {offsets = [12, 0], sizes = [4, 256], strides = [1, 1]} : vector<16x256xf32> to vector<4x256xf32>
    %c0_46 = arith.constant 0 : index
    %c12 = arith.constant 12 : index
    %c0_47 = arith.constant 0 : index
    %c0_48 = arith.constant 0 : index
    %93 = vector.load %arg2[%c0_46, %c12, %c0_47, %c0_48] : memref<1x16x49x256xf32, #tpu.memory_space<vmem>>, vector<1x4x49x256xf32>
    %94 = vector.shape_cast %93 : vector<1x4x49x256xf32> to vector<4x49x256xf32>
    %c0_49 = arith.constant 0 : index
    %c12_50 = arith.constant 12 : index
    %c0_51 = arith.constant 0 : index
    %c0_52 = arith.constant 0 : index
    %95 = vector.load %arg3[%c0_49, %c12_50, %c0_51, %c0_52] : memref<1x16x49x256xf32, #tpu.memory_space<vmem>>, vector<1x4x49x256xf32>
    %96 = vector.shape_cast %95 : vector<1x4x49x256xf32> to vector<4x49x256xf32>
    %97 = arith.mulf %92, %5 : vector<4x256xf32>
    %cst_53 = arith.constant dense<0.000000e+00> : vector<256xf32>
    %98 = vector.multi_reduction <add>, %97, %cst_53 [0] : vector<4x256xf32> to vector<256xf32>
    %99 = vector.shape_cast %98 : vector<256xf32> to vector<1x256xf32>
    %100 = vector.shape_cast %92 : vector<4x256xf32> to vector<4x1x256xf32>
    %101 = arith.subf %94, %7 : vector<4x49x256xf32>
    %102 = vector.broadcast %100 : vector<4x1x256xf32> to vector<4x49x256xf32>
    %103 = arith.mulf %102, %101 : vector<4x49x256xf32>
    %cst_54 = arith.constant dense<0.000000e+00> : vector<49x256xf32>
    %104 = vector.multi_reduction <add>, %103, %cst_54 [0] : vector<4x49x256xf32> to vector<49x256xf32>
    %105 = vector.broadcast %99 : vector<1x256xf32> to vector<49x256xf32>
    %106 = arith.addf %104, %105 : vector<49x256xf32>
    %cst_55 = arith.constant dense<0xFF800000> : vector<256xf32>
    %107 = vector.multi_reduction <maximumf>, %106, %cst_55 [0] : vector<49x256xf32> to vector<256xf32>
    %108 = vector.shape_cast %107 : vector<256xf32> to vector<1x256xf32>
    %109 = vector.broadcast %108 : vector<1x256xf32> to vector<49x256xf32>
    %110 = arith.subf %106, %109 : vector<49x256xf32>
    %111 = math.exp %110 : vector<49x256xf32>
    %cst_56 = arith.constant dense<0.000000e+00> : vector<256xf32>
    %112 = vector.multi_reduction <add>, %111, %cst_56 [0] : vector<49x256xf32> to vector<256xf32>
    %113 = vector.shape_cast %112 : vector<256xf32> to vector<1x256xf32>
    %114 = vector.broadcast %113 : vector<1x256xf32> to vector<49x256xf32>
    %115 = arith.divf %111, %114 : vector<49x256xf32>
    %116 = vector.shape_cast %115 : vector<49x256xf32> to vector<1x49x256xf32>
    %117 = vector.broadcast %116 : vector<1x49x256xf32> to vector<4x49x256xf32>
    %118 = arith.mulf %117, %96 : vector<4x49x256xf32>
    %cst_57 = arith.constant dense<0.000000e+00> : vector<4x256xf32>
    %119 = vector.multi_reduction <add>, %118, %cst_57 [1] : vector<4x49x256xf32> to vector<4x256xf32>
    %120 = tpu.concatenate %35, %63, %91, %119 in 0 : vector<4x256xf32>, vector<4x256xf32>, vector<4x256xf32>, vector<4x256xf32> -> vector<16x256xf32>
    %c0_58 = arith.constant 0 : index
    %c0_59 = arith.constant 0 : index
    %121 = vector.load %arg7[%c0_58, %c0_59] : memref<16x324xf32, #tpu.memory_space<vmem>>, vector<16x324xf32>
    %c0_60 = arith.constant 0 : index
    %c0_61 = arith.constant 0 : index
    %c0_62 = arith.constant 0 : index
    %122 = vector.load %arg6[%c0_60, %c0_61, %c0_62] : memref<1x324x256xf32, #tpu.memory_space<vmem>>, vector<1x324x256xf32>
    %123 = vector.shape_cast %122 : vector<1x324x256xf32> to vector<324x256xf32>
    %cst_63 = arith.constant dense<0.000000e+00> : vector<16x256xf32>
    %124 = tpu.matmul %121, %123, %cst_63 {dimension_numbers = #tpu.dot_dimension_numbers<[1], [0], [0], [1], [0, 0, 1, 1], [], []>} : vector<16x324xf32>, vector<324x256xf32>, vector<16x256xf32> -> vector<16x256xf32>
    %c0_64 = arith.constant 0 : index
    %125 = memref.load %arg8[%c0_64] : memref<2xf32, #tpu.memory_space<smem>>
    %126 = vector.broadcast %125 : f32 to vector<16x256xf32>
    %127 = arith.mulf %126, %120 : vector<16x256xf32>
    %c1 = arith.constant 1 : index
    %128 = memref.load %arg8[%c1] : memref<2xf32, #tpu.memory_space<smem>>
    %129 = vector.broadcast %128 : f32 to vector<16x256xf32>
    %130 = arith.mulf %129, %124 : vector<16x256xf32>
    %131 = arith.addf %127, %130 : vector<16x256xf32>
    %c0_65 = arith.constant 0 : index
    %c0_66 = arith.constant 0 : index
    %c0_67 = arith.constant 0 : index
    %132 = vector.load %arg9[%c0_65, %c0_66, %c0_67] : memref<1x16x256xf32, #tpu.memory_space<vmem>>, vector<1x16x256xf32>
    %133 = vector.shape_cast %132 : vector<1x16x256xf32> to vector<16x256xf32>
    %134 = vector.shape_cast %131 : vector<16x256xf32> to vector<1x16x256xf32>
    tpu.vector_store %arg9[%c0_65, %c0_66, %c0_67], %134 {strides = array<i32>} : memref<1x16x256xf32, #tpu.memory_space<vmem>>, vector<1x16x256xf32>,
    return
  }
  func.func @transform_0(%arg0: i32) -> (i32, i32, i32) {
    %c0_i32 = arith.constant 0 : i32
    %c0_i32_0 = arith.constant 0 : i32
    %c0_i32_1 = arith.constant 0 : i32
    return %arg0, %c0_i32, %c0_i32_0 : i32, i32, i32
  }
  func.func @transform_1(%arg0: i32) -> (i32, i32, i32, i32) {
    %c0_i32 = arith.constant 0 : i32
    %c0_i32_0 = arith.constant 0 : i32
    %c0_i32_1 = arith.constant 0 : i32
    %c0_i32_2 = arith.constant 0 : i32
    return %arg0, %c0_i32, %c0_i32_0, %c0_i32_1 : i32, i32, i32, i32
  }
  func.func @transform_2(%arg0: i32) -> (i32, i32, i32, i32) {
    %c0_i32 = arith.constant 0 : i32
    %c0_i32_0 = arith.constant 0 : i32
    %c0_i32_1 = arith.constant 0 : i32
    %c0_i32_2 = arith.constant 0 : i32
    return %arg0, %c0_i32, %c0_i32_0, %c0_i32_1 : i32, i32, i32, i32
  }
  func.func @transform_3(%arg0: i32) -> (i32, i32, i32, i32) {
    %c0_i32 = arith.constant 0 : i32
    %c0_i32_0 = arith.constant 0 : i32
    %c0_i32_1 = arith.constant 0 : i32
    %c0_i32_2 = arith.constant 0 : i32
    %c0_i32_3 = arith.constant 0 : i32
    return %c0_i32, %c0_i32_0, %c0_i32_1, %c0_i32_2 : i32, i32, i32, i32
  }
  func.func @transform_4(%arg0: i32) -> (i32, i32, i32) {
    %c0_i32 = arith.constant 0 : i32
    %c0_i32_0 = arith.constant 0 : i32
    %c0_i32_1 = arith.constant 0 : i32
    return %arg0, %c0_i32, %c0_i32_0 : i32, i32, i32
  }
  func.func @transform_5(%arg0: i32) -> (i32, i32, i32) {
    %c0_i32 = arith.constant 0 : i32
    %c0_i32_0 = arith.constant 0 : i32
    %c0_i32_1 = arith.constant 0 : i32
    return %arg0, %c0_i32, %c0_i32_0 : i32, i32, i32
  }
  func.func @transform_6(%arg0: i32) -> (i32, i32) {
    %c0_i32 = arith.constant 0 : i32
    %c0_i32_0 = arith.constant 0 : i32
    %c0_i32_1 = arith.constant 0 : i32
    return %c0_i32, %c0_i32_0 : i32, i32
  }
  func.func @transform_7(%arg0: i32) -> i32 {
    %c0_i32 = arith.constant 0 : i32
    %c0_i32_0 = arith.constant 0 : i32
    return %c0_i32 : i32
  }
  func.func @transform_8(%arg0: i32) -> (i32, i32, i32) {
    %c0_i32 = arith.constant 0 : i32
    %c0_i32_0 = arith.constant 0 : i32
    %c0_i32_1 = arith.constant 0 : i32
    return %arg0, %c0_i32, %c0_i32_0 : i32, i32, i32
  }
}

</mosaic_0001>

<llo_original>
// kernel: tile.10
$region0: #{tile.10}
  #allocation0 [shape = 's32[1]{0}', space=sflag, size = 0x4, scoped, tag = 'scoped memory for tile.10']
  %s0 = inlined_call_operand.vmem [shape: f32[16], index: 0, kind: input, shape index: {}]
  %s1 = inlined_call_operand.vmem [shape: f32[16,1,1,16], index: 1, kind: output, shape index: {}]
  // Predicated region
  $region2: #{tile.10} parent=0 // pred_check
    _
  $region3: #{tile.10} parent=0 // pred_check_branch
    %3 = sbr.rel (0) target = $region5
  $region4: #{tile.10} parent=0 // pred_region
    _
  $region5: #{tile.10} parent=0 // pred_fallthru
    _
  %v4 = vld [vmem:[%s0] ss:$0 sm:$0xff]
  %5 = vst [vmem:[%s1] sm:$0xff] %v4
  %s6 = scalar_lea.vmem %s1, 8
  %7 = vst [vmem:[%s6] sm:$0xff] %v4

// kernel: tile.14
$region0: #{tile.14}
  %s0 = inlined_call_operand.vmem [shape: f32[16,1,1,16], index: 0, kind: input, shape index: {}]
  %s1 = inlined_call_operand.vmem [shape: f32[1,256], index: 1, kind: output, shape index: {}]
  $region1: #{tile.14} parent=0
    #allocation0 [shape = 'u8[8192]{0}', space=vmem, size = 0x2000, scoped, tag = 'scoped mem for output reshape']
    %s2 = smov 3
    %v3 = vld [vmem:[%s0] ss:$8 sm:%s2]
    %vm4 = vcmask 130048
    %5 = vst.msk [vmem:[#allocation0] ss:$8 sm:$0x3] %vm4, %v3
    %s6 = scalar_lea.vmem %s0, 7
    %s7 = smov 3
    %v8 = vld [vmem:[%s6] ss:$8 sm:%s7]
    %9 = vrot.lane.b32.xlu0 %v8, 112
    %v10 = vpop.permute.xlu0 %9
    %vm11 = vcmask 1048448
    %12 = vst.msk [vmem:[#allocation0] ss:$8 sm:$0x3] %vm11, %v10
    %s13 = scalar_lea.vmem %s0, 6
    %s14 = smov 3
    %v15 = vld [vmem:[%s13] ss:$8 sm:%s14]
    %16 = vrot.lane.b32.xlu0 %v15, 96
    %v17 = vpop.permute.xlu0 %16
    %vm18 = vcmask 917248
    %19 = vst.msk [vmem:[#allocation0] ss:$8 sm:$0x3] %vm18, %v17
    %s20 = scalar_lea.vmem %s0, 5
    %s21 = smov 3
    %v22 = vld [vmem:[%s20] ss:$8 sm:%s21]
    %23 = vrot.lane.b32.xlu0 %v22, 80
    %v24 = vpop.permute.xlu0 %23
    %vm25 = vcmask 786048
    %26 = vst.msk [vmem:[#allocation0] ss:$8 sm:$0x3] %vm25, %v24
    %s27 = scalar_lea.vmem %s0, 4
    %s28 = smov 3
    %v29 = vld [vmem:[%s27] ss:$8 sm:%s28]
    %30 = vrot.lane.b32.xlu0 %v29, 64
    %v31 = vpop.permute.xlu0 %30
    %vm32 = vcmask 654848
    %33 = vst.msk [vmem:[#allocation0] ss:$8 sm:$0x3] %vm32, %v31
    %s34 = scalar_lea.vmem %s0, 3
    %s35 = smov 3
    %v36 = vld [vmem:[%s34] ss:$8 sm:%s35]
    %37 = vrot.lane.b32.xlu0 %v36, 48
    %v38 = vpop.permute.xlu0 %37
    %vm39 = vcmask 523648
    %40 = vst.msk [vmem:[#allocation0] ss:$8 sm:$0x3] %vm39, %v38
    %s41 = scalar_lea.vmem %s0, 2
    %s42 = smov 3
    %v43 = vld [vmem:[%s41] ss:$8 sm:%s42]
    %44 = vrot.lane.b32.xlu0 %v43, 32
    %v45 = vpop.permute.xlu0 %44
    %vm46 = vcmask 392448
    %47 = vst.msk [vmem:[#allocation0] ss:$8 sm:$0x3] %vm46, %v45
    %s48 = scalar_lea.vmem %s0, 1
    %s49 = smov 3
    %v50 = vld [vmem:[%s48] ss:$8 sm:%s49]
    %51 = vrot.lane.b32.xlu0 %v50, 16
    %v52 = vpop.permute.xlu0 %51
    %vm53 = vcmask 261248
    %54 = vst.msk [vmem:[#allocation0] ss:$8 sm:$0x3] %vm53, %v52
    %s56 = sshllo.u32 0, 1
    %v58 = vld [vmem:[#allocation0] sm:%s56]
    %s59 = sshllo.u32 0, 1
    %60 = vst [vmem:[%s1] sm:%s59] %v58
    %s61 = scalar_lea.vmem [#allocation0], 8
    %v62 = vld [vmem:[%s61] sm:%s56]
    %s63 = sshllo.u32 0, 1
    %s64 = scalar_lea.vmem %s1, 1
    %65 = vst [vmem:[%s64] sm:%s63] %v62

// kernel: mul.34
$region0: #{mul.34}
  %s0 = inlined_call_operand.vmem [shape: f32[9,12], index: 0, kind: input, shape index: {}]
  %s1 = inlined_call_operand.vmem [shape: f32[9,3,4], index: 1, kind: output, shape index: {}]
  $region1: #{mul.34} parent=0
    #allocation0 [shape = 'u8[12288]{0}', space=vmem, size = 0x3000, scoped, tag = 'scoped mem for output reshape']
    %v2 = vld [vmem:[%s0] sm:$0xff]
    %vm3 = vcmask 72704
    %4 = vst.msk [vmem:[#allocation0] sm:$0xf] %vm3, %v2
    %s5 = scalar_lea.vmem [#allocation0], 4
    %6 = vst.msk [vmem:[%s5] sm:$0xf0] %vm3, %v2
    %s7 = scalar_lea.vmem %s0, 8
    %v8 = vld [vmem:[%s7] sm:$0xf]
    %vm9 = vcmask 72704
    %s10 = scalar_lea.vmem [#allocation0], 16
    %11 = vst.msk [vmem:[%s10] sm:$0xf] %vm9, %v8
    %s13 = sshllo.u32 0, 4
    %v15 = vld [vmem:[#allocation0] sm:%s13]
    %s16 = sshllo.u32 0, 4
    %17 = vst [vmem:[%s1] sm:%s16] %v15
    %s18 = scalar_lea.vmem [#allocation0], 8
    %v19 = vld [vmem:[%s18] sm:%s13]
    %s20 = sshllo.u32 0, 4
    %s21 = scalar_lea.vmem %s1, 4
    %22 = vst [vmem:[%s21] sm:%s20] %v19
    %s23 = scalar_lea.vmem [#allocation0], 16
    %v24 = vld [vmem:[%s23] sm:%s13]
    %s25 = sshllo.u32 0, 4
    %s26 = smul.addr 4, 2
    %s27 = scalar_lea.vmem %s1, %s26
    %28 = vst [vmem:[%s27] sm:%s25] %v24

// kernel: squeeze.1
$region0: #{squeeze.1}
  %s0 = inlined_call_operand.vmem [shape: f32[4,256], index: 0, kind: input, shape index: {}]
  %s1 = inlined_call_operand.vmem [shape: f32[4,16,16], index: 1, kind: output, shape index: {}]
  $region1: #{squeeze.1} parent=0
    #allocation0 [shape = 'u8[8192]{0}', space=vmem, size = 0x2000, scoped, tag = 'scoped mem for input reshape']
    %s3 = sshllo.u32 0, 4
    %s4 = scalar_lea.vmem %s0, 4
    %v5 = vld [vmem:[%s4] sm:%s3]
    %s6 = scalar_lea.vmem [#allocation0], 8
    %7 = vst [vmem:[%s6] sm:%s3] %v5
    %v8 = vld [vmem:[%s0] sm:%s3]
    %9 = vst [vmem:[#allocation0] sm:%s3] %v8
    %v10 = vld [vmem:[#allocation0] sm:$0xf]
    %vm11 = vcmask 130048
    %12 = vst.msk [vmem:[%s1] ss:$16 sm:$0x3] %vm11, %v10
    %13 = vst.msk [vmem:[%s1] ss:$16 sm:$0xc] %vm11, %v10
    %s14 = scalar_lea.vmem [#allocation0], 8
    %v15 = vld [vmem:[%s14] sm:$0xf]
    %vm16 = vcmask 130048
    %s17 = scalar_lea.vmem %s1, 8
    %18 = vst.msk [vmem:[%s17] ss:$16 sm:$0x3] %vm16, %v15
    %s19 = scalar_lea.vmem %s1, 8
    %20 = vst.msk [vmem:[%s19] ss:$16 sm:$0xc] %vm16, %v15
    %v21 = vld.sshfl [vmem:[#allocation0] sm:$0xff pattern:$0xb3a29180]
    %22 = vrot.lane.b32.xlu0 %v21, 112
    %v23 = vpop.permute.xlu0 %22
    %vm24 = vcmask 130048
    %s25 = scalar_lea.vmem %s1, 1
    %26 = vst.msk [vmem:[%s25] ss:$8 sm:$0xf] %vm24, %v23
    %s27 = scalar_lea.vmem %s1, 1
    %28 = vst.msk [vmem:[%s27] ss:$8 sm:$0xf0] %vm24, %v23
    %v29 = vld.sshfl [vmem:[#allocation0] sm:$0xff pattern:$0xb3a29180]
    %30 = vrot.lane.b32.xlu0 %v29, 96
    %v31 = vpop.permute.xlu0 %30
    %vm32 = vcmask 130048
    %s33 = scalar_lea.vmem %s1, 2
    %34 = vst.msk [vmem:[%s33] ss:$8 sm:$0xf] %vm32, %v31
    %s35 = scalar_lea.vmem %s1, 2
    %36 = vst.msk [vmem:[%s35] ss:$8 sm:$0xf0] %vm32, %v31
    %v37 = vld.sshfl [vmem:[#allocation0] sm:$0xff pattern:$0xb3a29180]
    %38 = vrot.lane.b32.xlu0 %v37, 80
    %v39 = vpop.permute.xlu0 %38
    %vm40 = vcmask 130048
    %s41 = scalar_lea.vmem %s1, 3
    %42 = vst.msk [vmem:[%s41] ss:$8 sm:$0xf] %vm40, %v39
    %s43 = scalar_lea.vmem %s1, 3
    %44 = vst.msk [vmem:[%s43] ss:$8 sm:$0xf0] %vm40, %v39
    %v45 = vld.sshfl [vmem:[#allocation0] sm:$0xff pattern:$0xb3a29180]
    %46 = vrot.lane.b32.xlu0 %v45, 64
    %v47 = vpop.permute.xlu0 %46
    %vm48 = vcmask 130048
    %s49 = scalar_lea.vmem %s1, 4
    %50 = vst.msk [vmem:[%s49] ss:$8 sm:$0xf] %vm48, %v47
    %s51 = scalar_lea.vmem %s1, 4
    %52 = vst.msk [vmem:[%s51] ss:$8 sm:$0xf0] %vm48, %v47
    %v53 = vld.sshfl [vmem:[#allocation0] sm:$0xff pattern:$0xb3a29180]
    %54 = vrot.lane.b32.xlu0 %v53, 48
    %v55 = vpop.permute.xlu0 %54
    %vm56 = vcmask 130048
    %s57 = scalar_lea.vmem %s1, 5
    %58 = vst.msk [vmem:[%s57] ss:$8 sm:$0xf] %vm56, %v55
    %s59 = scalar_lea.vmem %s1, 5
    %60 = vst.msk [vmem:[%s59] ss:$8 sm:$0xf0] %vm56, %v55
    %v61 = vld.sshfl [vmem:[#allocation0] sm:$0xff pattern:$0xb3a29180]
    %62 = vrot.lane.b32.xlu0 %v61, 32
    %v63 = vpop.permute.xlu0 %62
    %vm64 = vcmask 130048
    %s65 = scalar_lea.vmem %s1, 6
    %66 = vst.msk [vmem:[%s65] ss:$8 sm:$0xf] %vm64, %v63
    %s67 = scalar_lea.vmem %s1, 6
    %68 = vst.msk [vmem:[%s67] ss:$8 sm:$0xf0] %vm64, %v63
    %v69 = vld.sshfl [vmem:[#allocation0] sm:$0xff pattern:$0xb3a29180]
    %70 = vrot.lane.b32.xlu0 %v69, 16
    %v71 = vpop.permute.xlu0 %70
    %vm72 = vcmask 130048
    %s73 = scalar_lea.vmem %s1, 7
    %74 = vst.msk [vmem:[%s73] ss:$8 sm:$0xf] %vm72, %v71
    %s75 = scalar_lea.vmem %s1, 7
    %76 = vst.msk [vmem:[%s75] ss:$8 sm:$0xf0] %vm72, %v71

// kernel: mul.41
$region0: #{mul.41}
  %s0 = inlined_call_operand.vmem [shape: f32[16,9,3,3], index: 0, kind: input, shape index: {}]
  %s1 = inlined_call_operand.vmem [shape: f32[4,4,81], index: 1, kind: output, shape index: {}]
  $region1: #{mul.41} parent=0
    #allocation0 [shape = 'u8[331776]{0}', space=vmem, size = 0x51000, scoped, tag = 'scoped mem for output reshape']
    #allocation1 [shape = 'u8[110592]{0}', space=vmem, size = 0x1b000, scoped, tag = 'scoped mem for input reshape']
    %s3 = sshllo.u32 0, 4
    %s4 = smul.addr 4, 26
    %s5 = scalar_lea.vmem %s0, %s4
    %v6 = vld [vmem:[%s5] sm:%s3]
    %s7 = scalar_lea.vmem [#allocation1], 208
    %8 = vst [vmem:[%s7] sm:%s3] %v6
    %s9 = smul.addr 4, 25
    %s10 = scalar_lea.vmem %s0, %s9
    %v11 = vld [vmem:[%s10] sm:%s3]
    %s12 = scalar_lea.vmem [#allocation1], 200
    %13 = vst [vmem:[%s12] sm:%s3] %v11
    %s14 = smul.addr 4, 24
    %s15 = scalar_lea.vmem %s0, %s14
    %v16 = vld [vmem:[%s15] sm:%s3]
    %s17 = scalar_lea.vmem [#allocation1], 192
    %18 = vst [vmem:[%s17] sm:%s3] %v16
    %s19 = smul.addr 4, 23
    %s20 = scalar_lea.vmem %s0, %s19
    %v21 = vld [vmem:[%s20] sm:%s3]
    %s22 = scalar_lea.vmem [#allocation1], 184
    %23 = vst [vmem:[%s22] sm:%s3] %v21
    %s24 = smul.addr 4, 22
    %s25 = scalar_lea.vmem %s0, %s24
    %v26 = vld [vmem:[%s25] sm:%s3]
    %s27 = scalar_lea.vmem [#allocation1], 176
    %28 = vst [vmem:[%s27] sm:%s3] %v26
    %s29 = smul.addr 4, 21
    %s30 = scalar_lea.vmem %s0, %s29
    %v31 = vld [vmem:[%s30] sm:%s3]
    %s32 = scalar_lea.vmem [#allocation1], 168
    %33 = vst [vmem:[%s32] sm:%s3] %v31
    %s34 = smul.addr 4, 20
    %s35 = scalar_lea.vmem %s0, %s34
    %v36 = vld [vmem:[%s35] sm:%s3]
    %s37 = scalar_lea.vmem [#allocation1], 160
    %38 = vst [vmem:[%s37] sm:%s3] %v36
    %s39 = smul.addr 4, 19
    %s40 = scalar_lea.vmem %s0, %s39
    %v41 = vld [vmem:[%s40] sm:%s3]
    %s42 = scalar_lea.vmem [#allocation1], 152
    %43 = vst [vmem:[%s42] sm:%s3] %v41
    %s44 = smul.addr 4, 18
    %s45 = scalar_lea.vmem %s0, %s44
    %v46 = vld [vmem:[%s45] sm:%s3]
    %s47 = scalar_lea.vmem [#allocation1], 144
    %48 = vst [vmem:[%s47] sm:%s3] %v46
    %s49 = smul.addr 4, 17
    %s50 = scalar_lea.vmem %s0, %s49
    %v51 = vld [vmem:[%s50] sm:%s3]
    %s52 = scalar_lea.vmem [#allocation1], 136
    %53 = vst [vmem:[%s52] sm:%s3] %v51
    %s54 = smul.addr 4, 16
    %s55 = scalar_lea.vmem %s0, %s54
    %v56 = vld [vmem:[%s55] sm:%s3]
    %s57 = scalar_lea.vmem [#allocation1], 128
    %58 = vst [vmem:[%s57] sm:%s3] %v56
    %s59 = smul.addr 4, 15
    %s60 = scalar_lea.vmem %s0, %s59
    %v61 = vld [vmem:[%s60] sm:%s3]
    %s62 = scalar_lea.vmem [#allocation1], 120
    %63 = vst [vmem:[%s62] sm:%s3] %v61
    %s64 = smul.addr 4, 14
    %s65 = scalar_lea.vmem %s0, %s64
    %v66 = vld [vmem:[%s65] sm:%s3]
    %s67 = scalar_lea.vmem [#allocation1], 112
    %68 = vst [vmem:[%s67] sm:%s3] %v66
    %s69 = smul.addr 4, 13
    %s70 = scalar_lea.vmem %s0, %s69
    %v71 = vld [vmem:[%s70] sm:%s3]
    %s72 = scalar_lea.vmem [#allocation1], 104
    %73 = vst [vmem:[%s72] sm:%s3] %v71
    %s74 = smul.addr 4, 12
    %s75 = scalar_lea.vmem %s0, %s74
    %v76 = vld [vmem:[%s75] sm:%s3]
    %s77 = scalar_lea.vmem [#allocation1], 96
    %78 = vst [vmem:[%s77] sm:%s3] %v76
    %s79 = smul.addr 4, 11
    %s80 = scalar_lea.vmem %s0, %s79
    %v81 = vld [vmem:[%s80] sm:%s3]
    %s82 = scalar_lea.vmem [#allocation1], 88
    %83 = vst [vmem:[%s82] sm:%s3] %v81
    %s84 = smul.addr 4, 10
    %s85 = scalar_lea.vmem %s0, %s84
    %v86 = vld [vmem:[%s85] sm:%s3]
    %s87 = scalar_lea.vmem [#allocation1], 80
    %88 = vst [vmem:[%s87] sm:%s3] %v86
    %s89 = smul.addr 4, 9
    %s90 = scalar_lea.vmem %s0, %s89
    %v91 = vld [vmem:[%s90] sm:%s3]
    %s92 = scalar_lea.vmem [#allocation1], 72
    %93 = vst [vmem:[%s92] sm:%s3] %v91
    %s94 = smul.addr 4, 8
    %s95 = scalar_lea.vmem %s0, %s94
    %v96 = vld [vmem:[%s95] sm:%s3]
    %s97 = scalar_lea.vmem [#allocation1], 64
    %98 = vst [vmem:[%s97] sm:%s3] %v96
    %s99 = smul.addr 4, 7
    %s100 = scalar_lea.vmem %s0, %s99
    %v101 = vld [vmem:[%s100] sm:%s3]
    %s102 = scalar_lea.vmem [#allocation1], 56
    %103 = vst [vmem:[%s102] sm:%s3] %v101
    %s104 = smul.addr 4, 6
    %s105 = scalar_lea.vmem %s0, %s104
    %v106 = vld [vmem:[%s105] sm:%s3]
    %s107 = scalar_lea.vmem [#allocation1], 48
    %108 = vst [vmem:[%s107] sm:%s3] %v106
    %s109 = smul.addr 4, 5
    %s110 = scalar_lea.vmem %s0, %s109
    %v111 = vld [vmem:[%s110] sm:%s3]
    %s112 = scalar_lea.vmem [#allocation1], 40
    %113 = vst [vmem:[%s112] sm:%s3] %v111
    %s114 = smul.addr 4, 4
    %s115 = scalar_lea.vmem %s0, %s114
    %v116 = vld [vmem:[%s115] sm:%s3]
    %s117 = scalar_lea.vmem [#allocation1], 32
    %118 = vst [vmem:[%s117] sm:%s3] %v116
    %s119 = smul.addr 4, 3
    %s120 = scalar_lea.vmem %s0, %s119
    %v121 = vld [vmem:[%s120] sm:%s3]
    %s122 = scalar_lea.vmem [#allocation1], 24
    %123 = vst [vmem:[%s122] sm:%s3] %v121
    %s124 = smul.addr 4, 2
    %s125 = scalar_lea.vmem %s0, %s124
    %v126 = vld [vmem:[%s125] sm:%s3]
    %s127 = scalar_lea.vmem [#allocation1], 16
    %128 = vst [vmem:[%s127] sm:%s3] %v126
    %s129 = scalar_lea.vmem %s0, 4
    %v130 = vld [vmem:[%s129] sm:%s3]
    %s131 = scalar_lea.vmem [#allocation1], 8
    %132 = vst [vmem:[%s131] sm:%s3] %v130
    %v133 = vld [vmem:[%s0] sm:%s3]
    %134 = vst [vmem:[#allocation1] sm:%s3] %v133
    %v135 = vld [vmem:[#allocation1] sm:$0x7]
    %vm136 = vcmask 31744
    %137 = vst.msk [vmem:[#allocation0] ss:$8 sm:$0x7] %vm136, %v135
    %s138 = scalar_lea.vmem [#allocation1], 8
    %v139 = vld [vmem:[%s138] sm:$0x7]
    %vm140 = vcmask 31744
    %s141 = scalar_lea.vmem [#allocation0], 24
    %142 = vst.msk [vmem:[%s141] ss:$8 sm:$0x7] %vm140, %v139
    %s143 = scalar_lea.vmem [#allocation1], 16
    %v144 = vld [vmem:[%s143] sm:$0x7]
    %vm145 = vcmask 31744
    %s146 = scalar_lea.vmem [#allocation0], 48
    %147 = vst.msk [vmem:[%s146] ss:$8 sm:$0x7] %vm145, %v144
    %s148 = scalar_lea.vmem [#allocation1], 24
    %v149 = vld [vmem:[%s148] sm:$0x7]
    %vm150 = vcmask 31744
    %s151 = scalar_lea.vmem [#allocation0], 72
    %152 = vst.msk [vmem:[%s151] ss:$8 sm:$0x7] %vm150, %v149
    %s153 = scalar_lea.vmem [#allocation1], 32
    %v154 = vld [vmem:[%s153] sm:$0x7]
    %vm155 = vcmask 31744
    %s156 = scalar_lea.vmem [#allocation0], 96
    %157 = vst.msk [vmem:[%s156] ss:$8 sm:$0x7] %vm155, %v154
    %s158 = scalar_lea.vmem [#allocation1], 40
    %v159 = vld [vmem:[%s158] sm:$0x7]
    %vm160 = vcmask 31744
    %s161 = scalar_lea.vmem [#allocation0], 120
    %162 = vst.msk [vmem:[%s161] ss:$8 sm:$0x7] %vm160, %v159
    %s163 = scalar_lea.vmem [#allocation1], 48
    %v164 = vld [vmem:[%s163] sm:$0x7]
    %vm165 = vcmask 31744
    %s166 = scalar_lea.vmem [#allocation0], 144
    %167 = vst.msk [vmem:[%s166] ss:$8 sm:$0x7] %vm165, %v164
    %s168 = scalar_lea.vmem [#allocation1], 56
    %v169 = vld [vmem:[%s168] sm:$0x7]
    %vm170 = vcmask 31744
    %s171 = scalar_lea.vmem [#allocation0], 168
    %172 = vst.msk [vmem:[%s171] ss:$8 sm:$0x7] %vm170, %v169
    %s173 = scalar_lea.vmem [#allocation1], 64
    %v174 = vld [vmem:[%s173] sm:$0x7]
    %vm175 = vcmask 31744
    %s176 = scalar_lea.vmem [#allocation0], 192
    %177 = vst.msk [vmem:[%s176] ss:$8 sm:$0x7] %vm175, %v174
    %s178 = scalar_lea.vmem [#allocation1], 72
    %v179 = vld [vmem:[%s178] sm:$0x7]
    %vm180 = vcmask 31744
    %s181 = scalar_lea.vmem [#allocation0], 216
    %182 = vst.msk [vmem:[%s181] ss:$8 sm:$0x7] %vm180, %v179
    %s183 = scalar_lea.vmem [#allocation1], 80
    %v184 = vld [vmem:[%s183] sm:$0x7]
    %vm185 = vcmask 31744
    %s186 = scalar_lea.vmem [#allocation0], 240
    %187 = vst.msk [vmem:[%s186] ss:$8 sm:$0x7] %vm185, %v184
    %s188 = scalar_lea.vmem [#allocation1], 88
    %v189 = vld [vmem:[%s188] sm:$0x7]
    %vm190 = vcmask 31744
    %s191 = scalar_lea.vmem [#allocation0], 264
    %192 = vst.msk [vmem:[%s191] ss:$8 sm:$0x7] %vm190, %v189
    %s193 = scalar_lea.vmem [#allocation1], 96
    %v194 = vld [vmem:[%s193] sm:$0x7]
    %vm195 = vcmask 31744
    %s196 = scalar_lea.vmem [#allocation0], 288
    %197 = vst.msk [vmem:[%s196] ss:$8 sm:$0x7] %vm195, %v194
    %s198 = scalar_lea.vmem [#allocation1], 104
    %v199 = vld [vmem:[%s198] sm:$0x7]
    %vm200 = vcmask 31744
    %s201 = scalar_lea.vmem [#allocation0], 312
    %202 = vst.msk [vmem:[%s201] ss:$8 sm:$0x7] %vm200, %v199
    %s203 = scalar_lea.vmem [#allocation1], 112
    %v204 = vld [vmem:[%s203] sm:$0x7]
    %vm205 = vcmask 31744
    %s206 = scalar_lea.vmem [#allocation0], 336
    %207 = vst.msk [vmem:[%s206] ss:$8 sm:$0x7] %vm205, %v204
    %s208 = scalar_lea.vmem [#allocation1], 120
    %v209 = vld [vmem:[%s208] sm:$0x7]
    %vm210 = vcmask 31744
    %s211 = scalar_lea.vmem [#allocation0], 360
    %212 = vst.msk [vmem:[%s211] ss:$8 sm:$0x7] %vm210, %v209
    %s213 = scalar_lea.vmem [#allocation1], 128
    %v214 = vld [vmem:[%s213] sm:$0x7]
    %vm215 = vcmask 31744
    %s216 = scalar_lea.vmem [#allocation0], 384
    %217 = vst.msk [vmem:[%s216] ss:$8 sm:$0x7] %vm215, %v214
    %s218 = scalar_lea.vmem [#allocation1], 136
    %v219 = vld [vmem:[%s218] sm:$0x7]
    %vm220 = vcmask 31744
    %s221 = scalar_lea.vmem [#allocation0], 408
    %222 = vst.msk [vmem:[%s221] ss:$8 sm:$0x7] %vm220, %v219
    %s223 = scalar_lea.vmem [#allocation1], 144
    %v224 = vld [vmem:[%s223] sm:$0x7]
    %vm225 = vcmask 31744
    %s226 = scalar_lea.vmem [#allocation0], 432
    %227 = vst.msk [vmem:[%s226] ss:$8 sm:$0x7] %vm225, %v224
    %s228 = scalar_lea.vmem [#allocation1], 152
    %v229 = vld [vmem:[%s228] sm:$0x7]
    %vm230 = vcmask 31744
    %s231 = scalar_lea.vmem [#allocation0], 456
    %232 = vst.msk [vmem:[%s231] ss:$8 sm:$0x7] %vm230, %v229
    %s233 = scalar_lea.vmem [#allocation1], 160
    %v234 = vld [vmem:[%s233] sm:$0x7]
    %vm235 = vcmask 31744
    %s236 = scalar_lea.vmem [#allocation0], 480
    %237 = vst.msk [vmem:[%s236] ss:$8 sm:$0x7] %vm235, %v234
    %s238 = scalar_lea.vmem [#allocation1], 168
    %v239 = vld [vmem:[%s238] sm:$0x7]
    %vm240 = vcmask 31744
    %s241 = scalar_lea.vmem [#allocation0], 504
    %242 = vst.msk [vmem:[%s241] ss:$8 sm:$0x7] %vm240, %v239
    %s243 = scalar_lea.vmem [#allocation1], 176
    %v244 = vld [vmem:[%s243] sm:$0x7]
    %vm245 = vcmask 31744
    %s246 = scalar_lea.vmem [#allocation0], 528
    %247 = vst.msk [vmem:[%s246] ss:$8 sm:$0x7] %vm245, %v244
    %s248 = scalar_lea.vmem [#allocation1], 184
    %v249 = vld [vmem:[%s248] sm:$0x7]
    %vm250 = vcmask 31744
    %s251 = scalar_lea.vmem [#allocation0], 552
    %252 = vst.msk [vmem:[%s251] ss:$8 sm:$0x7] %vm250, %v249
    %s253 = scalar_lea.vmem [#allocation1], 192
    %v254 = vld [vmem:[%s253] sm:$0x7]
    %vm255 = vcmask 31744
    %s256 = scalar_lea.vmem [#allocation0], 576
    %257 = vst.msk [vmem:[%s256] ss:$8 sm:$0x7] %vm255, %v254
    %s258 = scalar_lea.vmem [#allocation1], 200
    %v259 = vld [vmem:[%s258] sm:$0x7]
    %vm260 = vcmask 31744
    %s261 = scalar_lea.vmem [#allocation0], 600
    %262 = vst.msk [vmem:[%s261] ss:$8 sm:$0x7] %vm260, %v259
    %s263 = scalar_lea.vmem [#allocation1], 208
    %v264 = vld [vmem:[%s263] sm:$0x7]
    %vm265 = vcmask 31744
    %s266 = scalar_lea.vmem [#allocation0], 624
    %267 = vst.msk [vmem:[%s266] ss:$8 sm:$0x7] %vm265, %v264
    %v268 = vld.sshfl [vmem:[#allocation1] sm:$0xff pattern:$0xaaa98210]
    %s269 = scalar_lea.vmem [#allocation1], 10
    %v270 = vld [vmem:[%s269] sm:$0xc0]
    %vm271 = vcmask 1047558
    %v272 = vsel %vm271, %v270, %v268
    %273 = vrot.lane.b32.xlu0 %v272, 124
    %v274 = vpop.permute.xlu0 %273
    %vm275 = vcmask 31744
    %s276 = scalar_lea.vmem [#allocation0], 1
    %277 = vst.msk [vmem:[%s276] ss:$8 sm:$0xf] %vm275, %v274
    %s278 = scalar_lea.vmem [#allocation0], 1
    %279 = vst.msk [vmem:[%s278] ss:$8 sm:$0xf0] %vm275, %v274
    %s280 = scalar_lea.vmem [#allocation1], 18
    %v281 = vld.sshfl [vmem:[%s280] sm:$0xff pattern:$0xfffe8760]
    %s282 = scalar_lea.vmem [#allocation1], 4294967294
    %s283 = smov 192
    %v284 = vld [vmem:[%s282] ss:$6 sm:%s283]
    %vm285 = vcmask 1047558
    %v286 = vsel %vm285, %v284, %v281
    %287 = vrot.lane.b32.xlu0 %v286, 124
    %v288 = vpop.permute.xlu0 %287
    %vm289 = vcmask 31744
    %s290 = scalar_lea.vmem [#allocation0], 65
    %291 = vst.msk [vmem:[%s290] ss:$8 sm:$0xf] %vm289, %v288
    %s292 = scalar_lea.vmem [#allocation0], 65
    %293 = vst.msk [vmem:[%s292] ss:$8 sm:$0xf0] %vm289, %v288
    %s294 = scalar_lea.vmem [#allocation1], 41
    %v295 = vld.sshfl [vmem:[%s294] sm:$0xff pattern:$0xfff98710]
    %s296 = scalar_lea.vmem [#allocation1], 51
    %v297 = vld [vmem:[%s296] sm:$0xc0]
    %vm298 = vcmask 1047558
    %v299 = vsel %vm298, %v297, %v295
    %300 = vrot.lane.b32.xlu0 %v299, 124
    %v301 = vpop.permute.xlu0 %300
    %vm302 = vcmask 31744
    %s303 = scalar_lea.vmem [#allocation0], 129
    %304 = vst.msk [vmem:[%s303] ss:$8 sm:$0xf] %vm302, %v301
    %s305 = scalar_lea.vmem [#allocation0], 129
    %306 = vst.msk [vmem:[%s305] ss:$8 sm:$0xf0] %vm302, %v301
    %s307 = scalar_lea.vmem [#allocation1], 64
    %v308 = vld.sshfl [vmem:[%s307] sm:$0xff pattern:$0xaaa98210]
    %s309 = scalar_lea.vmem [#allocation1], 74
    %v310 = vld [vmem:[%s309] sm:$0xc0]
    %vm311 = vcmask 1047558
    %v312 = vsel %vm311, %v310, %v308
    %313 = vrot.lane.b32.xlu0 %v312, 124
    %v314 = vpop.permute.xlu0 %313
    %vm315 = vcmask 31744
    %s316 = scalar_lea.vmem [#allocation0], 193
    %317 = vst.msk [vmem:[%s316] ss:$8 sm:$0xf] %vm315, %v314
    %s318 = scalar_lea.vmem [#allocation0], 193
    %319 = vst.msk [vmem:[%s318] ss:$8 sm:$0xf0] %vm315, %v314
    %s320 = scalar_lea.vmem [#allocation1], 82
    %v321 = vld.sshfl [vmem:[%s320] sm:$0xff pattern:$0xfffe8760]
    %s322 = scalar_lea.vmem [#allocation1], 62
    %s323 = smov 192
    %v324 = vld [vmem:[%s322] ss:$6 sm:%s323]
    %vm325 = vcmask 1047558
    %v326 = vsel %vm325, %v324, %v321
    %327 = vrot.lane.b32.xlu0 %v326, 124
    %v328 = vpop.permute.xlu0 %327
    %vm329 = vcmask 31744
    %s330 = scalar_lea.vmem [#allocation0], 257
    %331 = vst.msk [vmem:[%s330] ss:$8 sm:$0xf] %vm329, %v328
    %s332 = scalar_lea.vmem [#allocation0], 257
    %333 = vst.msk [vmem:[%s332] ss:$8 sm:$0xf0] %vm329, %v328
    %s334 = scalar_lea.vmem [#allocation1], 105
    %v335 = vld.sshfl [vmem:[%s334] sm:$0xff pattern:$0xfff98710]
    %s336 = scalar_lea.vmem [#allocation1], 115
    %v337 = vld [vmem:[%s336] sm:$0xc0]
    %vm338 = vcmask 1047558
    %v339 = vsel %vm338, %v337, %v335
    %340 = vrot.lane.b32.xlu0 %v339, 124
    %v341 = vpop.permute.xlu0 %340
    %vm342 = vcmask 31744
    %s343 = scalar_lea.vmem [#allocation0], 321
    %344 = vst.msk [vmem:[%s343] ss:$8 sm:$0xf] %vm342, %v341
    %s345 = scalar_lea.vmem [#allocation0], 321
    %346 = vst.msk [vmem:[%s345] ss:$8 sm:$0xf0] %vm342, %v341
    %s347 = scalar_lea.vmem [#allocation1], 128
    %v348 = vld.sshfl [vmem:[%s347] sm:$0xff pattern:$0xaaa98210]
    %s349 = scalar_lea.vmem [#allocation1], 138
    %v350 = vld [vmem:[%s349] sm:$0xc0]
    %vm351 = vcmask 1047558
    %v352 = vsel %vm351, %v350, %v348
    %353 = vrot.lane.b32.xlu0 %v352, 124
    %v354 = vpop.permute.xlu0 %353
    %vm355 = vcmask 31744
    %s356 = scalar_lea.vmem [#allocation0], 385
    %357 = vst.msk [vmem:[%s356] ss:$8 sm:$0xf] %vm355, %v354
    %s358 = scalar_lea.vmem [#allocation0], 385
    %359 = vst.msk [vmem:[%s358] ss:$8 sm:$0xf0] %vm355, %v354
    %s360 = scalar_lea.vmem [#allocation1], 146
    %v361 = vld.sshfl [vmem:[%s360] sm:$0xff pattern:$0xfffe8760]
    %s362 = scalar_lea.vmem [#allocation1], 126
    %s363 = smov 192
    %v364 = vld [vmem:[%s362] ss:$6 sm:%s363]
    %vm365 = vcmask 1047558
    %v366 = vsel %vm365, %v364, %v361
    %367 = vrot.lane.b32.xlu0 %v366, 124
    %v368 = vpop.permute.xlu0 %367
    %vm369 = vcmask 31744
    %s370 = scalar_lea.vmem [#allocation0], 449
    %371 = vst.msk [vmem:[%s370] ss:$8 sm:$0xf] %vm369, %v368
    %s372 = scalar_lea.vmem [#allocation0], 449
    %373 = vst.msk [vmem:[%s372] ss:$8 sm:$0xf0] %vm369, %v368
    %s374 = scalar_lea.vmem [#allocation1], 169
    %v375 = vld.sshfl [vmem:[%s374] sm:$0xff pattern:$0xfff98710]
    %s376 = scalar_lea.vmem [#allocation1], 179
    %v377 = vld [vmem:[%s376] sm:$0xc0]
    %vm378 = vcmask 1047558
    %v379 = vsel %vm378, %v377, %v375
    %380 = vrot.lane.b32.xlu0 %v379, 124
    %v381 = vpop.permute.xlu0 %380
    %vm382 = vcmask 31744
    %s383 = scalar_lea.vmem [#allocation0], 513
    %384 = vst.msk [vmem:[%s383] ss:$8 sm:$0xf] %vm382, %v381
    %s385 = scalar_lea.vmem [#allocation0], 513
    %386 = vst.msk [vmem:[%s385] ss:$8 sm:$0xf0] %vm382, %v381
    %s387 = scalar_lea.vmem [#allocation1], 192
    %v388 = vld.sshfl [vmem:[%s387] sm:$0xff pattern:$0xaaa98210]
    %s389 = scalar_lea.vmem [#allocation1], 202
    %v390 = vld [vmem:[%s389] sm:$0xc0]
    %vm391 = vcmask 1047558
    %v392 = vsel %vm391, %v390, %v388
    %393 = vrot.lane.b32.xlu0 %v392, 124
    %v394 = vpop.permute.xlu0 %393
    %vm395 = vcmask 31744
    %s396 = scalar_lea.vmem [#allocation0], 577
    %397 = vst.msk [vmem:[%s396] ss:$8 sm:$0xf] %vm395, %v394
    %s398 = scalar_lea.vmem [#allocation0], 577
    %399 = vst.msk [vmem:[%s398] ss:$8 sm:$0xf0] %vm395, %v394
    %s400 = scalar_lea.vmem [#allocation1], 210
    %v401 = vld [vmem:[%s400] sm:$0x1]
    %402 = vrot.lane.b32.xlu0 %v401, 124
    %v403 = vpop.permute.xlu0 %402
    %vm404 = vcmask 31744
    %s405 = scalar_lea.vmem [#allocation0], 641
    %406 = vst.msk [vmem:[%s405] sm:$0x1] %vm404, %v403
    %v407 = vld.sshfl [vmem:[#allocation1] sm:$0xff pattern:$0xaaa98210]
    %s408 = scalar_lea.vmem [#allocation1], 10
    %v409 = vld [vmem:[%s408] sm:$0xc0]
    %vm410 = vcmask 1047558
    %v411 = vsel %vm410, %v409, %v407
    %412 = vrot.lane.b32.xlu0 %v411, 120
    %v413 = vpop.permute.xlu0 %412
    %vm414 = vcmask 31744
    %s415 = scalar_lea.vmem [#allocation0], 2
    %416 = vst.msk [vmem:[%s415] ss:$8 sm:$0xf] %vm414, %v413
    %s417 = scalar_lea.vmem [#allocation0], 2
    %418 = vst.msk [vmem:[%s417] ss:$8 sm:$0xf0] %vm414, %v413
    %s419 = scalar_lea.vmem [#allocation1], 18
    %v420 = vld.sshfl [vmem:[%s419] sm:$0xff pattern:$0xfffe8760]
    %s421 = scalar_lea.vmem [#allocation1], 4294967294
    %s422 = smov 192
    %v423 = vld [vmem:[%s421] ss:$6 sm:%s422]
    %vm424 = vcmask 1047558
    %v425 = vsel %vm424, %v423, %v420
    %426 = vrot.lane.b32.xlu0 %v425, 120
    %v427 = vpop.permute.xlu0 %426
    %vm428 = vcmask 31744
    %s429 = scalar_lea.vmem [#allocation0], 66
    %430 = vst.msk [vmem:[%s429] ss:$8 sm:$0xf] %vm428, %v427
    %s431 = scalar_lea.vmem [#allocation0], 66
    %432 = vst.msk [vmem:[%s431] ss:$8 sm:$0xf0] %vm428, %v427
    %s433 = scalar_lea.vmem [#allocation1], 41
    %v434 = vld.sshfl [vmem:[%s433] sm:$0xff pattern:$0xfff98710]
    %s435 = scalar_lea.vmem [#allocation1], 51
    %v436 = vld [vmem:[%s435] sm:$0xc0]
    %vm437 = vcmask 1047558
    %v438 = vsel %vm437, %v436, %v434
    %439 = vrot.lane.b32.xlu0 %v438, 120
    %v440 = vpop.permute.xlu0 %439
    %vm441 = vcmask 31744
    %s442 = scalar_lea.vmem [#allocation0], 130
    %443 = vst.msk [vmem:[%s442] ss:$8 sm:$0xf] %vm441, %v440
    %s444 = scalar_lea.vmem [#allocation0], 130
    %445 = vst.msk [vmem:[%s444] ss:$8 sm:$0xf0] %vm441, %v440
    %s446 = scalar_lea.vmem [#allocation1], 64
    %v447 = vld.sshfl [vmem:[%s446] sm:$0xff pattern:$0xaaa98210]
    %s448 = scalar_lea.vmem [#allocation1], 74
    %v449 = vld [vmem:[%s448] sm:$0xc0]
    %vm450 = vcmask 1047558
    %v451 = vsel %vm450, %v449, %v447
    %452 = vrot.lane.b32.xlu0 %v451, 120
    %v453 = vpop.permute.xlu0 %452
    %vm454 = vcmask 31744
    %s455 = scalar_lea.vmem [#allocation0], 194
    %456 = vst.msk [vmem:[%s455] ss:$8 sm:$0xf] %vm454, %v453
    %s457 = scalar_lea.vmem [#allocation0], 194
    %458 = vst.msk [vmem:[%s457] ss:$8 sm:$0xf0] %vm454, %v453
    %s459 = scalar_lea.vmem [#allocation1], 82
    %v460 = vld.sshfl [vmem:[%s459] sm:$0xff pattern:$0xfffe8760]
    %s461 = scalar_lea.vmem [#allocation1], 62
    %s462 = smov 192
    %v463 = vld [vmem:[%s461] ss:$6 sm:%s462]
    %vm464 = vcmask 1047558
    %v465 = vsel %vm464, %v463, %v460
    %466 = vrot.lane.b32.xlu0 %v465, 120
    %v467 = vpop.permute.xlu0 %466
    %vm468 = vcmask 31744
    %s469 = scalar_lea.vmem [#allocation0], 258
    %470 = vst.msk [vmem:[%s469] ss:$8 sm:$0xf] %vm468, %v467
    %s471 = scalar_lea.vmem [#allocation0], 258
    %472 = vst.msk [vmem:[%s471] ss:$8 sm:$0xf0] %vm468, %v467
    %s473 = scalar_lea.vmem [#allocation1], 105
    %v474 = vld.sshfl [vmem:[%s473] sm:$0xff pattern:$0xfff98710]
    %s475 = scalar_lea.vmem [#allocation1], 115
    %v476 = vld [vmem:[%s475] sm:$0xc0]
    %vm477 = vcmask 1047558
    %v478 = vsel %vm477, %v476, %v474
    %479 = vrot.lane.b32.xlu0 %v478, 120
    %v480 = vpop.permute.xlu0 %479
    %vm481 = vcmask 31744
    %s482 = scalar_lea.vmem [#allocation0], 322
    %483 = vst.msk [vmem:[%s482] ss:$8 sm:$0xf] %vm481, %v480
    %s484 = scalar_lea.vmem [#allocation0], 322
    %485 = vst.msk [vmem:[%s484] ss:$8 sm:$0xf0] %vm481, %v480
    %s486 = scalar_lea.vmem [#allocation1], 128
    %v487 = vld.sshfl [vmem:[%s486] sm:$0xff pattern:$0xaaa98210]
    %s488 = scalar_lea.vmem [#allocation1], 138
    %v489 = vld [vmem:[%s488] sm:$0xc0]
    %vm490 = vcmask 1047558
    %v491 = vsel %vm490, %v489, %v487
    %492 = vrot.lane.b32.xlu0 %v491, 120
    %v493 = vpop.permute.xlu0 %492
    %vm494 = vcmask 31744
    %s495 = scalar_lea.vmem [#allocation0], 386
    %496 = vst.msk [vmem:[%s495] ss:$8 sm:$0xf] %vm494, %v493
    %s497 = scalar_lea.vmem [#allocation0], 386
    %498 = vst.msk [vmem:[%s497] ss:$8 sm:$0xf0] %vm494, %v493
    %s499 = scalar_lea.vmem [#allocation1], 146
    %v500 = vld.sshfl [vmem:[%s499] sm:$0xff pattern:$0xfffe8760]
    %s501 = scalar_lea.vmem [#allocation1], 126
    %s502 = smov 192
    %v503 = vld [vmem:[%s501] ss:$6 sm:%s502]
    %vm504 = vcmask 1047558
    %v505 = vsel %vm504, %v503, %v500
    %506 = vrot.lane.b32.xlu0 %v505, 120
    %v507 = vpop.permute.xlu0 %506
    %vm508 = vcmask 31744
    %s509 = scalar_lea.vmem [#allocation0], 450
    %510 = vst.msk [vmem:[%s509] ss:$8 sm:$0xf] %vm508, %v507
    %s511 = scalar_lea.vmem [#allocation0], 450
    %512 = vst.msk [vmem:[%s511] ss:$8 sm:$0xf0] %vm508, %v507
    %s513 = scalar_lea.vmem [#allocation1], 169
    %v514 = vld.sshfl [vmem:[%s513] sm:$0xff pattern:$0xfff98710]
    %s515 = scalar_lea.vmem [#allocation1], 179
    %v516 = vld [vmem:[%s515] sm:$0xc0]
    %vm517 = vcmask 1047558
    %v518 = vsel %vm517, %v516, %v514
    %519 = vrot.lane.b32.xlu0 %v518, 120
    %v520 = vpop.permute.xlu0 %519
    %vm521 = vcmask 31744
    %s522 = scalar_lea.vmem [#allocation0], 514
    %523 = vst.msk [vmem:[%s522] ss:$8 sm:$0xf] %vm521, %v520
    %s524 = scalar_lea.vmem [#allocation0], 514
    %525 = vst.msk [vmem:[%s524] ss:$8 sm:$0xf0] %vm521, %v520
    %s526 = scalar_lea.vmem [#allocation1], 192
    %v527 = vld.sshfl [vmem:[%s526] sm:$0xff pattern:$0xaaa98210]
    %s528 = scalar_lea.vmem [#allocation1], 202
    %v529 = vld [vmem:[%s528] sm:$0xc0]
    %vm530 = vcmask 1047558
    %v531 = vsel %vm530, %v529, %v527
    %532 = vrot.lane.b32.xlu0 %v531, 120
    %v533 = vpop.permute.xlu0 %532
    %vm534 = vcmask 31744
    %s535 = scalar_lea.vmem [#allocation0], 578
    %536 = vst.msk [vmem:[%s535] ss:$8 sm:$0xf] %vm534, %v533
    %s537 = scalar_lea.vmem [#allocation0], 578
    %538 = vst.msk [vmem:[%s537] ss:$8 sm:$0xf0] %vm534, %v533
    %s539 = scalar_lea.vmem [#allocation1], 210
    %v540 = vld [vmem:[%s539] sm:$0x1]
    %541 = vrot.lane.b32.xlu0 %v540, 120
    %v542 = vpop.permute.xlu0 %541
    %vm543 = vcmask 31744
    %s544 = scalar_lea.vmem [#allocation0], 642
    %545 = vst.msk [vmem:[%s544] sm:$0x1] %vm543, %v542
    %v546 = vld.sshfl [vmem:[#allocation1] sm:$0xff pattern:$0xaaa98210]
    %s547 = scalar_lea.vmem [#allocation1], 10
    %v548 = vld [vmem:[%s547] sm:$0xc0]
    %vm549 = vcmask 1047558
    %v550 = vsel %vm549, %v548, %v546
    %551 = vrot.lane.b32.xlu0 %v550, 116
    %v552 = vpop.permute.xlu0 %551
    %vm553 = vcmask 31744
    %s554 = scalar_lea.vmem [#allocation0], 3
    %555 = vst.msk [vmem:[%s554] ss:$8 sm:$0xf] %vm553, %v552
    %s556 = scalar_lea.vmem [#allocation0], 3
    %557 = vst.msk [vmem:[%s556] ss:$8 sm:$0xf0] %vm553, %v552
    %s558 = scalar_lea.vmem [#allocation1], 18
    %v559 = vld.sshfl [vmem:[%s558] sm:$0xff pattern:$0xfffe8760]
    %s560 = scalar_lea.vmem [#allocation1], 4294967294
    %s561 = smov 192
    %v562 = vld [vmem:[%s560] ss:$6 sm:%s561]
    %vm563 = vcmask 1047558
    %v564 = vsel %vm563, %v562, %v559
    %565 = vrot.lane.b32.xlu0 %v564, 116
    %v566 = vpop.permute.xlu0 %565
    %vm567 = vcmask 31744
    %s568 = scalar_lea.vmem [#allocation0], 67
    %569 = vst.msk [vmem:[%s568] ss:$8 sm:$0xf] %vm567, %v566
    %s570 = scalar_lea.vmem [#allocation0], 67
    %571 = vst.msk [vmem:[%s570] ss:$8 sm:$0xf0] %vm567, %v566
    %s572 = scalar_lea.vmem [#allocation1], 41
    %v573 = vld.sshfl [vmem:[%s572] sm:$0xff pattern:$0xfff98710]
    %s574 = scalar_lea.vmem [#allocation1], 51
    %v575 = vld [vmem:[%s574] sm:$0xc0]
    %vm576 = vcmask 1047558
    %v577 = vsel %vm576, %v575, %v573
    %578 = vrot.lane.b32.xlu0 %v577, 116
    %v579 = vpop.permute.xlu0 %578
    %vm580 = vcmask 31744
    %s581 = scalar_lea.vmem [#allocation0], 131
    %582 = vst.msk [vmem:[%s581] ss:$8 sm:$0xf] %vm580, %v579
    %s583 = scalar_lea.vmem [#allocation0], 131
    %584 = vst.msk [vmem:[%s583] ss:$8 sm:$0xf0] %vm580, %v579
    %s585 = scalar_lea.vmem [#allocation1], 64
    %v586 = vld.sshfl [vmem:[%s585] sm:$0xff pattern:$0xaaa98210]
    %s587 = scalar_lea.vmem [#allocation1], 74
    %v588 = vld [vmem:[%s587] sm:$0xc0]
    %vm589 = vcmask 1047558
    %v590 = vsel %vm589, %v588, %v586
    %591 = vrot.lane.b32.xlu0 %v590, 116
    %v592 = vpop.permute.xlu0 %591
    %vm593 = vcmask 31744
    %s594 = scalar_lea.vmem [#allocation0], 195
    %595 = vst.msk [vmem:[%s594] ss:$8 sm:$0xf] %vm593, %v592
    %s596 = scalar_lea.vmem [#allocation0], 195
    %597 = vst.msk [vmem:[%s596] ss:$8 sm:$0xf0] %vm593, %v592
    %s598 = scalar_lea.vmem [#allocation1], 82
    %v599 = vld.sshfl [vmem:[%s598] sm:$0xff pattern:$0xfffe8760]
    %s600 = scalar_lea.vmem [#allocation1], 62
    %s601 = smov 192
    %v602 = vld [vmem:[%s600] ss:$6 sm:%s601]
    %vm603 = vcmask 1047558
    %v604 = vsel %vm603, %v602, %v599
    %605 = vrot.lane.b32.xlu0 %v604, 116
    %v606 = vpop.permute.xlu0 %605
    %vm607 = vcmask 31744
    %s608 = scalar_lea.vmem [#allocation0], 259
    %609 = vst.msk [vmem:[%s608] ss:$8 sm:$0xf] %vm607, %v606
    %s610 = scalar_lea.vmem [#allocation0], 259
    %611 = vst.msk [vmem:[%s610] ss:$8 sm:$0xf0] %vm607, %v606
    %s612 = scalar_lea.vmem [#allocation1], 105
    %v613 = vld.sshfl [vmem:[%s612] sm:$0xff pattern:$0xfff98710]
    %s614 = scalar_lea.vmem [#allocation1], 115
    %v615 = vld [vmem:[%s614] sm:$0xc0]
    %vm616 = vcmask 1047558
    %v617 = vsel %vm616, %v615, %v613
    %618 = vrot.lane.b32.xlu0 %v617, 116
    %v619 = vpop.permute.xlu0 %618
    %vm620 = vcmask 31744
    %s621 = scalar_lea.vmem [#allocation0], 323
    %622 = vst.msk [vmem:[%s621] ss:$8 sm:$0xf] %vm620, %v619
    %s623 = scalar_lea.vmem [#allocation0], 323
    %624 = vst.msk [vmem:[%s623] ss:$8 sm:$0xf0] %vm620, %v619
    %s625 = scalar_lea.vmem [#allocation1], 128
    %v626 = vld.sshfl [vmem:[%s625] sm:$0xff pattern:$0xaaa98210]
    %s627 = scalar_lea.vmem [#allocation1], 138
    %v628 = vld [vmem:[%s627] sm:$0xc0]
    %vm629 = vcmask 1047558
    %v630 = vsel %vm629, %v628, %v626
    %631 = vrot.lane.b32.xlu0 %v630, 116
    %v632 = vpop.permute.xlu0 %631
    %vm633 = vcmask 31744
    %s634 = scalar_lea.vmem [#allocation0], 387
    %635 = vst.msk [vmem:[%s634] ss:$8 sm:$0xf] %vm633, %v632
    %s636 = scalar_lea.vmem [#allocation0], 387
    %637 = vst.msk [vmem:[%s636] ss:$8 sm:$0xf0] %vm633, %v632
    %s638 = scalar_lea.vmem [#allocation1], 146
    %v639 = vld.sshfl [vmem:[%s638] sm:$0xff pattern:$0xfffe8760]
    %s640 = scalar_lea.vmem [#allocation1], 126
    %s641 = smov 192
    %v642 = vld [vmem:[%s640] ss:$6 sm:%s641]
    %vm643 = vcmask 1047558
    %v644 = vsel %vm643, %v642, %v639
    %645 = vrot.lane.b32.xlu0 %v644, 116
    %v646 = vpop.permute.xlu0 %645
    %vm647 = vcmask 31744
    %s648 = scalar_lea.vmem [#allocation0], 451
    %649 = vst.msk [vmem:[%s648] ss:$8 sm:$0xf] %vm647, %v646
    %s650 = scalar_lea.vmem [#allocation0], 451
    %651 = vst.msk [vmem:[%s650] ss:$8 sm:$0xf0] %vm647, %v646
    %s652 = scalar_lea.vmem [#allocation1], 169
    %v653 = vld.sshfl [vmem:[%s652] sm:$0xff pattern:$0xfff98710]
    %s654 = scalar_lea.vmem [#allocation1], 179
    %v655 = vld [vmem:[%s654] sm:$0xc0]
    %vm656 = vcmask 1047558
    %v657 = vsel %vm656, %v655, %v653
    %658 = vrot.lane.b32.xlu0 %v657, 116
    %v659 = vpop.permute.xlu0 %658
    %vm660 = vcmask 31744
    %s661 = scalar_lea.vmem [#allocation0], 515
    %662 = vst.msk [vmem:[%s661] ss:$8 sm:$0xf] %vm660, %v659
    %s663 = scalar_lea.vmem [#allocation0], 515
    %664 = vst.msk [vmem:[%s663] ss:$8 sm:$0xf0] %vm660, %v659
    %s665 = scalar_lea.vmem [#allocation1], 192
    %v666 = vld.sshfl [vmem:[%s665] sm:$0xff pattern:$0xaaa98210]
    %s667 = scalar_lea.vmem [#allocation1], 202
    %v668 = vld [vmem:[%s667] sm:$0xc0]
    %vm669 = vcmask 1047558
    %v670 = vsel %vm669, %v668, %v666
    %671 = vrot.lane.b32.xlu0 %v670, 116
    %v672 = vpop.permute.xlu0 %671
    %vm673 = vcmask 31744
    %s674 = scalar_lea.vmem [#allocation0], 579
    %675 = vst.msk [vmem:[%s674] ss:$8 sm:$0xf] %vm673, %v672
    %s676 = scalar_lea.vmem [#allocation0], 579
    %677 = vst.msk [vmem:[%s676] ss:$8 sm:$0xf0] %vm673, %v672
    %s678 = scalar_lea.vmem [#allocation1], 210
    %v679 = vld [vmem:[%s678] sm:$0x1]
    %680 = vrot.lane.b32.xlu0 %v679, 116
    %v681 = vpop.permute.xlu0 %680
    %vm682 = vcmask 31744
    %s683 = scalar_lea.vmem [#allocation0], 643
    %684 = vst.msk [vmem:[%s683] sm:$0x1] %vm682, %v681
    %s686 = sshllo.u32 0, 4
    %v688 = vld [vmem:[#allocation0] sm:%s686]
    %s689 = sshllo.u32 0, 4
    %690 = vst [vmem:[%s1] sm:%s689] %v688
    %s691 = scalar_lea.vmem [#allocation0], 8
    %v692 = vld [vmem:[%s691] sm:%s686]
    %s693 = sshllo.u32 0, 4
    %s694 = scalar_lea.vmem %s1, 4
    %695 = vst [vmem:[%s694] sm:%s693] %v692
    %s696 = scalar_lea.vmem [#allocation0], 16
    %v697 = vld [vmem:[%s696] sm:%s686]
    %s698 = sshllo.u32 0, 4
    %s699 = smul.addr 4, 2
    %s700 = scalar_lea.vmem %s1, %s699
    %701 = vst [vmem:[%s700] sm:%s698] %v697
    %s702 = scalar_lea.vmem [#allocation0], 24
    %v703 = vld [vmem:[%s702] sm:%s686]
    %s704 = sshllo.u32 0, 4
    %s705 = smul.addr 4, 3
    %s706 = scalar_lea.vmem %s1, %s705
    %707 = vst [vmem:[%s706] sm:%s704] %v703
    %s708 = scalar_lea.vmem [#allocation0], 32
    %v709 = vld [vmem:[%s708] sm:%s686]
    %s710 = sshllo.u32 0, 4
    %s711 = smul.addr 4, 4
    %s712 = scalar_lea.vmem %s1, %s711
    %713 = vst [vmem:[%s712] sm:%s710] %v709
    %s714 = scalar_lea.vmem [#allocation0], 40
    %v715 = vld [vmem:[%s714] sm:%s686]
    %s716 = sshllo.u32 0, 4
    %s717 = smul.addr 4, 5
    %s718 = scalar_lea.vmem %s1, %s717
    %719 = vst [vmem:[%s718] sm:%s716] %v715
    %s720 = scalar_lea.vmem [#allocation0], 48
    %v721 = vld [vmem:[%s720] sm:%s686]
    %s722 = sshllo.u32 0, 4
    %s723 = smul.addr 4, 6
    %s724 = scalar_lea.vmem %s1, %s723
    %725 = vst [vmem:[%s724] sm:%s722] %v721
    %s726 = scalar_lea.vmem [#allocation0], 56
    %v727 = vld [vmem:[%s726] sm:%s686]
    %s728 = sshllo.u32 0, 4
    %s729 = smul.addr 4, 7
    %s730 = scalar_lea.vmem %s1, %s729
    %731 = vst [vmem:[%s730] sm:%s728] %v727
    %s732 = scalar_lea.vmem [#allocation0], 64
    %v733 = vld [vmem:[%s732] sm:%s686]
    %s734 = sshllo.u32 0, 4
    %s735 = smul.addr 4, 8
    %s736 = scalar_lea.vmem %s1, %s735
    %737 = vst [vmem:[%s736] sm:%s734] %v733
    %s738 = scalar_lea.vmem [#allocation0], 72
    %v739 = vld [vmem:[%s738] sm:%s686]
    %s740 = sshllo.u32 0, 4
    %s741 = smul.addr 4, 9
    %s742 = scalar_lea.vmem %s1, %s741
    %743 = vst [vmem:[%s742] sm:%s740] %v739
    %s744 = scalar_lea.vmem [#allocation0], 80
    %v745 = vld [vmem:[%s744] sm:%s686]
    %s746 = sshllo.u32 0, 4
    %s747 = smul.addr 4, 10
    %s748 = scalar_lea.vmem %s1, %s747
    %749 = vst [vmem:[%s748] sm:%s746] %v745
    %s750 = scalar_lea.vmem [#allocation0], 88
    %v751 = vld [vmem:[%s750] sm:%s686]
    %s752 = sshllo.u32 0, 4
    %s753 = smul.addr 4, 11
    %s754 = scalar_lea.vmem %s1, %s753
    %755 = vst [vmem:[%s754] sm:%s752] %v751
    %s756 = scalar_lea.vmem [#allocation0], 96
    %v757 = vld [vmem:[%s756] sm:%s686]
    %s758 = sshllo.u32 0, 4
    %s759 = smul.addr 4, 12
    %s760 = scalar_lea.vmem %s1, %s759
    %761 = vst [vmem:[%s760] sm:%s758] %v757
    %s762 = scalar_lea.vmem [#allocation0], 104
    %v763 = vld [vmem:[%s762] sm:%s686]
    %s764 = sshllo.u32 0, 4
    %s765 = smul.addr 4, 13
    %s766 = scalar_lea.vmem %s1, %s765
    %767 = vst [vmem:[%s766] sm:%s764] %v763
    %s768 = scalar_lea.vmem [#allocation0], 112
    %v769 = vld [vmem:[%s768] sm:%s686]
    %s770 = sshllo.u32 0, 4
    %s771 = smul.addr 4, 14
    %s772 = scalar_lea.vmem %s1, %s771
    %773 = vst [vmem:[%s772] sm:%s770] %v769
    %s774 = scalar_lea.vmem [#allocation0], 120
    %v775 = vld [vmem:[%s774] sm:%s686]
    %s776 = sshllo.u32 0, 4
    %s777 = smul.addr 4, 15
    %s778 = scalar_lea.vmem %s1, %s777
    %779 = vst [vmem:[%s778] sm:%s776] %v775
    %s780 = scalar_lea.vmem [#allocation0], 128
    %v781 = vld [vmem:[%s780] sm:%s686]
    %s782 = sshllo.u32 0, 4
    %s783 = smul.addr 4, 16
    %s784 = scalar_lea.vmem %s1, %s783
    %785 = vst [vmem:[%s784] sm:%s782] %v781
    %s786 = scalar_lea.vmem [#allocation0], 136
    %v787 = vld [vmem:[%s786] sm:%s686]
    %s788 = sshllo.u32 0, 4
    %s789 = smul.addr 4, 17
    %s790 = scalar_lea.vmem %s1, %s789
    %791 = vst [vmem:[%s790] sm:%s788] %v787
    %s792 = scalar_lea.vmem [#allocation0], 144
    %v793 = vld [vmem:[%s792] sm:%s686]
    %s794 = sshllo.u32 0, 4
    %s795 = smul.addr 4, 18
    %s796 = scalar_lea.vmem %s1, %s795
    %797 = vst [vmem:[%s796] sm:%s794] %v793
    %s798 = scalar_lea.vmem [#allocation0], 152
    %v799 = vld [vmem:[%s798] sm:%s686]
    %s800 = sshllo.u32 0, 4
    %s801 = smul.addr 4, 19
    %s802 = scalar_lea.vmem %s1, %s801
    %803 = vst [vmem:[%s802] sm:%s800] %v799
    %s804 = scalar_lea.vmem [#allocation0], 160
    %v805 = vld [vmem:[%s804] sm:%s686]
    %s806 = sshllo.u32 0, 4
    %s807 = smul.addr 4, 20
    %s808 = scalar_lea.vmem %s1, %s807
    %809 = vst [vmem:[%s808] sm:%s806] %v805
    %s810 = scalar_lea.vmem [#allocation0], 168
    %v811 = vld [vmem:[%s810] sm:%s686]
    %s812 = sshllo.u32 0, 4
    %s813 = smul.addr 4, 21
    %s814 = scalar_lea.vmem %s1, %s813
    %815 = vst [vmem:[%s814] sm:%s812] %v811
    %s816 = scalar_lea.vmem [#allocation0], 176
    %v817 = vld [vmem:[%s816] sm:%s686]
    %s818 = sshllo.u32 0, 4
    %s819 = smul.addr 4, 22
    %s820 = scalar_lea.vmem %s1, %s819
    %821 = vst [vmem:[%s820] sm:%s818] %v817
    %s822 = scalar_lea.vmem [#allocation0], 184
    %v823 = vld [vmem:[%s822] sm:%s686]
    %s824 = sshllo.u32 0, 4
    %s825 = smul.addr 4, 23
    %s826 = scalar_lea.vmem %s1, %s825
    %827 = vst [vmem:[%s826] sm:%s824] %v823
    %s828 = scalar_lea.vmem [#allocation0], 192
    %v829 = vld [vmem:[%s828] sm:%s686]
    %s830 = sshllo.u32 0, 4
    %s831 = smul.addr 4, 24
    %s832 = scalar_lea.vmem %s1, %s831
    %833 = vst [vmem:[%s832] sm:%s830] %v829
    %s834 = scalar_lea.vmem [#allocation0], 200
    %v835 = vld [vmem:[%s834] sm:%s686]
    %s836 = sshllo.u32 0, 4
    %s837 = smul.addr 4, 25
    %s838 = scalar_lea.vmem %s1, %s837
    %839 = vst [vmem:[%s838] sm:%s836] %v835
    %s840 = scalar_lea.vmem [#allocation0], 208
    %v841 = vld [vmem:[%s840] sm:%s686]
    %s842 = sshllo.u32 0, 4
    %s843 = smul.addr 4, 26
    %s844 = scalar_lea.vmem %s1, %s843
    %845 = vst [vmem:[%s844] sm:%s842] %v841
    %s846 = scalar_lea.vmem [#allocation0], 216
    %v847 = vld [vmem:[%s846] sm:%s686]
    %s848 = sshllo.u32 0, 4
    %s849 = smul.addr 4, 27
    %s850 = scalar_lea.vmem %s1, %s849
    %851 = vst [vmem:[%s850] sm:%s848] %v847
    %s852 = scalar_lea.vmem [#allocation0], 224
    %v853 = vld [vmem:[%s852] sm:%s686]
    %s854 = sshllo.u32 0, 4
    %s855 = smul.addr 4, 28
    %s856 = scalar_lea.vmem %s1, %s855
    %857 = vst [vmem:[%s856] sm:%s854] %v853
    %s858 = scalar_lea.vmem [#allocation0], 232
    %v859 = vld [vmem:[%s858] sm:%s686]
    %s860 = sshllo.u32 0, 4
    %s861 = smul.addr 4, 29
    %s862 = scalar_lea.vmem %s1, %s861
    %863 = vst [vmem:[%s862] sm:%s860] %v859
    %s864 = scalar_lea.vmem [#allocation0], 240
    %v865 = vld [vmem:[%s864] sm:%s686]
    %s866 = sshllo.u32 0, 4
    %s867 = smul.addr 4, 30
    %s868 = scalar_lea.vmem %s1, %s867
    %869 = vst [vmem:[%s868] sm:%s866] %v865
    %s870 = scalar_lea.vmem [#allocation0], 248
    %v871 = vld [vmem:[%s870] sm:%s686]
    %s872 = sshllo.u32 0, 4
    %s873 = smul.addr 4, 31
    %s874 = scalar_lea.vmem %s1, %s873
    %875 = vst [vmem:[%s874] sm:%s872] %v871
    %s876 = scalar_lea.vmem [#allocation0], 256
    %v877 = vld [vmem:[%s876] sm:%s686]
    %s878 = sshllo.u32 0, 4
    %s879 = smul.addr 4, 32
    %s880 = scalar_lea.vmem %s1, %s879
    %881 = vst [vmem:[%s880] sm:%s878] %v877
    %s882 = scalar_lea.vmem [#allocation0], 264
    %v883 = vld [vmem:[%s882] sm:%s686]
    %s884 = sshllo.u32 0, 4
    %s885 = smul.addr 4, 33
    %s886 = scalar_lea.vmem %s1, %s885
    %887 = vst [vmem:[%s886] sm:%s884] %v883
    %s888 = scalar_lea.vmem [#allocation0], 272
    %v889 = vld [vmem:[%s888] sm:%s686]
    %s890 = sshllo.u32 0, 4
    %s891 = smul.addr 4, 34
    %s892 = scalar_lea.vmem %s1, %s891
    %893 = vst [vmem:[%s892] sm:%s890] %v889
    %s894 = scalar_lea.vmem [#allocation0], 280
    %v895 = vld [vmem:[%s894] sm:%s686]
    %s896 = sshllo.u32 0, 4
    %s897 = smul.addr 4, 35
    %s898 = scalar_lea.vmem %s1, %s897
    %899 = vst [vmem:[%s898] sm:%s896] %v895
    %s900 = scalar_lea.vmem [#allocation0], 288
    %v901 = vld [vmem:[%s900] sm:%s686]
    %s902 = sshllo.u32 0, 4
    %s903 = smul.addr 4, 36
    %s904 = scalar_lea.vmem %s1, %s903
    %905 = vst [vmem:[%s904] sm:%s902] %v901
    %s906 = scalar_lea.vmem [#allocation0], 296
    %v907 = vld [vmem:[%s906] sm:%s686]
    %s908 = sshllo.u32 0, 4
    %s909 = smul.addr 4, 37
    %s910 = scalar_lea.vmem %s1, %s909
    %911 = vst [vmem:[%s910] sm:%s908] %v907
    %s912 = scalar_lea.vmem [#allocation0], 304
    %v913 = vld [vmem:[%s912] sm:%s686]
    %s914 = sshllo.u32 0, 4
    %s915 = smul.addr 4, 38
    %s916 = scalar_lea.vmem %s1, %s915
    %917 = vst [vmem:[%s916] sm:%s914] %v913
    %s918 = scalar_lea.vmem [#allocation0], 312
    %v919 = vld [vmem:[%s918] sm:%s686]
    %s920 = sshllo.u32 0, 4
    %s921 = smul.addr 4, 39
    %s922 = scalar_lea.vmem %s1, %s921
    %923 = vst [vmem:[%s922] sm:%s920] %v919
    %s924 = scalar_lea.vmem [#allocation0], 320
    %v925 = vld [vmem:[%s924] sm:%s686]
    %s926 = sshllo.u32 0, 4
    %s927 = smul.addr 4, 40
    %s928 = scalar_lea.vmem %s1, %s927
    %929 = vst [vmem:[%s928] sm:%s926] %v925
    %s930 = scalar_lea.vmem [#allocation0], 328
    %v931 = vld [vmem:[%s930] sm:%s686]
    %s932 = sshllo.u32 0, 4
    %s933 = smul.addr 4, 41
    %s934 = scalar_lea.vmem %s1, %s933
    %935 = vst [vmem:[%s934] sm:%s932] %v931
    %s936 = scalar_lea.vmem [#allocation0], 336
    %v937 = vld [vmem:[%s936] sm:%s686]
    %s938 = sshllo.u32 0, 4
    %s939 = smul.addr 4, 42
    %s940 = scalar_lea.vmem %s1, %s939
    %941 = vst [vmem:[%s940] sm:%s938] %v937
    %s942 = scalar_lea.vmem [#allocation0], 344
    %v943 = vld [vmem:[%s942] sm:%s686]
    %s944 = sshllo.u32 0, 4
    %s945 = smul.addr 4, 43
    %s946 = scalar_lea.vmem %s1, %s945
    %947 = vst [vmem:[%s946] sm:%s944] %v943
    %s948 = scalar_lea.vmem [#allocation0], 352
    %v949 = vld [vmem:[%s948] sm:%s686]
    %s950 = sshllo.u32 0, 4
    %s951 = smul.addr 4, 44
    %s952 = scalar_lea.vmem %s1, %s951
    %953 = vst [vmem:[%s952] sm:%s950] %v949
    %s954 = scalar_lea.vmem [#allocation0], 360
    %v955 = vld [vmem:[%s954] sm:%s686]
    %s956 = sshllo.u32 0, 4
    %s957 = smul.addr 4, 45
    %s958 = scalar_lea.vmem %s1, %s957
    %959 = vst [vmem:[%s958] sm:%s956] %v955
    %s960 = scalar_lea.vmem [#allocation0], 368
    %v961 = vld [vmem:[%s960] sm:%s686]
    %s962 = sshllo.u32 0, 4
    %s963 = smul.addr 4, 46
    %s964 = scalar_lea.vmem %s1, %s963
    %965 = vst [vmem:[%s964] sm:%s962] %v961
    %s966 = scalar_lea.vmem [#allocation0], 376
    %v967 = vld [vmem:[%s966] sm:%s686]
    %s968 = sshllo.u32 0, 4
    %s969 = smul.addr 4, 47
    %s970 = scalar_lea.vmem %s1, %s969
    %971 = vst [vmem:[%s970] sm:%s968] %v967
    %s972 = scalar_lea.vmem [#allocation0], 384
    %v973 = vld [vmem:[%s972] sm:%s686]
    %s974 = sshllo.u32 0, 4
    %s975 = smul.addr 4, 48
    %s976 = scalar_lea.vmem %s1, %s975
    %977 = vst [vmem:[%s976] sm:%s974] %v973
    %s978 = scalar_lea.vmem [#allocation0], 392
    %v979 = vld [vmem:[%s978] sm:%s686]
    %s980 = sshllo.u32 0, 4
    %s981 = smul.addr 4, 49
    %s982 = scalar_lea.vmem %s1, %s981
    %983 = vst [vmem:[%s982] sm:%s980] %v979
    %s984 = scalar_lea.vmem [#allocation0], 400
    %v985 = vld [vmem:[%s984] sm:%s686]
    %s986 = sshllo.u32 0, 4
    %s987 = smul.addr 4, 50
    %s988 = scalar_lea.vmem %s1, %s987
    %989 = vst [vmem:[%s988] sm:%s986] %v985
    %s990 = scalar_lea.vmem [#allocation0], 408
    %v991 = vld [vmem:[%s990] sm:%s686]
    %s992 = sshllo.u32 0, 4
    %s993 = smul.addr 4, 51
    %s994 = scalar_lea.vmem %s1, %s993
    %995 = vst [vmem:[%s994] sm:%s992] %v991
    %s996 = scalar_lea.vmem [#allocation0], 416
    %v997 = vld [vmem:[%s996] sm:%s686]
    %s998 = sshllo.u32 0, 4
    %s999 = smul.addr 4, 52
    %s1000 = scalar_lea.vmem %s1, %s999
    %1001 = vst [vmem:[%s1000] sm:%s998] %v997
    %s1002 = scalar_lea.vmem [#allocation0], 424
    %v1003 = vld [vmem:[%s1002] sm:%s686]
    %s1004 = sshllo.u32 0, 4
    %s1005 = smul.addr 4, 53
    %s1006 = scalar_lea.vmem %s1, %s1005
    %1007 = vst [vmem:[%s1006] sm:%s1004] %v1003
    %s1008 = scalar_lea.vmem [#allocation0], 432
    %v1009 = vld [vmem:[%s1008] sm:%s686]
    %s1010 = sshllo.u32 0, 4
    %s1011 = smul.addr 4, 54
    %s1012 = scalar_lea.vmem %s1, %s1011
    %1013 = vst [vmem:[%s1012] sm:%s1010] %v1009
    %s1014 = scalar_lea.vmem [#allocation0], 440
    %v1015 = vld [vmem:[%s1014] sm:%s686]
    %s1016 = sshllo.u32 0, 4
    %s1017 = smul.addr 4, 55
    %s1018 = scalar_lea.vmem %s1, %s1017
    %1019 = vst [vmem:[%s1018] sm:%s1016] %v1015
    %s1020 = scalar_lea.vmem [#allocation0], 448
    %v1021 = vld [vmem:[%s1020] sm:%s686]
    %s1022 = sshllo.u32 0, 4
    %s1023 = smul.addr 4, 56
    %s1024 = scalar_lea.vmem %s1, %s1023
    %1025 = vst [vmem:[%s1024] sm:%s1022] %v1021
    %s1026 = scalar_lea.vmem [#allocation0], 456
    %v1027 = vld [vmem:[%s1026] sm:%s686]
    %s1028 = sshllo.u32 0, 4
    %s1029 = smul.addr 4, 57
    %s1030 = scalar_lea.vmem %s1, %s1029
    %1031 = vst [vmem:[%s1030] sm:%s1028] %v1027
    %s1032 = scalar_lea.vmem [#allocation0], 464
    %v1033 = vld [vmem:[%s1032] sm:%s686]
    %s1034 = sshllo.u32 0, 4
    %s1035 = smul.addr 4, 58
    %s1036 = scalar_lea.vmem %s1, %s1035
    %1037 = vst [vmem:[%s1036] sm:%s1034] %v1033
    %s1038 = scalar_lea.vmem [#allocation0], 472
    %v1039 = vld [vmem:[%s1038] sm:%s686]
    %s1040 = sshllo.u32 0, 4
    %s1041 = smul.addr 4, 59
    %s1042 = scalar_lea.vmem %s1, %s1041
    %1043 = vst [vmem:[%s1042] sm:%s1040] %v1039
    %s1044 = scalar_lea.vmem [#allocation0], 480
    %v1045 = vld [vmem:[%s1044] sm:%s686]
    %s1046 = sshllo.u32 0, 4
    %s1047 = smul.addr 4, 60
    %s1048 = scalar_lea.vmem %s1, %s1047
    %1049 = vst [vmem:[%s1048] sm:%s1046] %v1045
    %s1050 = scalar_lea.vmem [#allocation0], 488
    %v1051 = vld [vmem:[%s1050] sm:%s686]
    %s1052 = sshllo.u32 0, 4
    %s1053 = smul.addr 4, 61
    %s1054 = scalar_lea.vmem %s1, %s1053
    %1055 = vst [vmem:[%s1054] sm:%s1052] %v1051
    %s1056 = scalar_lea.vmem [#allocation0], 496
    %v1057 = vld [vmem:[%s1056] sm:%s686]
    %s1058 = sshllo.u32 0, 4
    %s1059 = smul.addr 4, 62
    %s1060 = scalar_lea.vmem %s1, %s1059
    %1061 = vst [vmem:[%s1060] sm:%s1058] %v1057
    %s1062 = scalar_lea.vmem [#allocation0], 504
    %v1063 = vld [vmem:[%s1062] sm:%s686]
    %s1064 = sshllo.u32 0, 4
    %s1065 = smul.addr 4, 63
    %s1066 = scalar_lea.vmem %s1, %s1065
    %1067 = vst [vmem:[%s1066] sm:%s1064] %v1063
    %s1068 = scalar_lea.vmem [#allocation0], 512
    %v1069 = vld [vmem:[%s1068] sm:%s686]
    %s1070 = sshllo.u32 0, 4
    %s1071 = smul.addr 4, 64
    %s1072 = scalar_lea.vmem %s1, %s1071
    %1073 = vst [vmem:[%s1072] sm:%s1070] %v1069
    %s1074 = scalar_lea.vmem [#allocation0], 520
    %v1075 = vld [vmem:[%s1074] sm:%s686]
    %s1076 = sshllo.u32 0, 4
    %s1077 = smul.addr 4, 65
    %s1078 = scalar_lea.vmem %s1, %s1077
    %1079 = vst [vmem:[%s1078] sm:%s1076] %v1075
    %s1080 = scalar_lea.vmem [#allocation0], 528
    %v1081 = vld [vmem:[%s1080] sm:%s686]
    %s1082 = sshllo.u32 0, 4
    %s1083 = smul.addr 4, 66
    %s1084 = scalar_lea.vmem %s1, %s1083
    %1085 = vst [vmem:[%s1084] sm:%s1082] %v1081
    %s1086 = scalar_lea.vmem [#allocation0], 536
    %v1087 = vld [vmem:[%s1086] sm:%s686]
    %s1088 = sshllo.u32 0, 4
    %s1089 = smul.addr 4, 67
    %s1090 = scalar_lea.vmem %s1, %s1089
    %1091 = vst [vmem:[%s1090] sm:%s1088] %v1087
    %s1092 = scalar_lea.vmem [#allocation0], 544
    %v1093 = vld [vmem:[%s1092] sm:%s686]
    %s1094 = sshllo.u32 0, 4
    %s1095 = smul.addr 4, 68
    %s1096 = scalar_lea.vmem %s1, %s1095
    %1097 = vst [vmem:[%s1096] sm:%s1094] %v1093
    %s1098 = scalar_lea.vmem [#allocation0], 552
    %v1099 = vld [vmem:[%s1098] sm:%s686]
    %s1100 = sshllo.u32 0, 4
    %s1101 = smul.addr 4, 69
    %s1102 = scalar_lea.vmem %s1, %s1101
    %1103 = vst [vmem:[%s1102] sm:%s1100] %v1099
    %s1104 = scalar_lea.vmem [#allocation0], 560
    %v1105 = vld [vmem:[%s1104] sm:%s686]
    %s1106 = sshllo.u32 0, 4
    %s1107 = smul.addr 4, 70
    %s1108 = scalar_lea.vmem %s1, %s1107
    %1109 = vst [vmem:[%s1108] sm:%s1106] %v1105
    %s1110 = scalar_lea.vmem [#allocation0], 568
    %v1111 = vld [vmem:[%s1110] sm:%s686]
    %s1112 = sshllo.u32 0, 4
    %s1113 = smul.addr 4, 71
    %s1114 = scalar_lea.vmem %s1, %s1113
    %1115 = vst [vmem:[%s1114] sm:%s1112] %v1111
    %s1116 = scalar_lea.vmem [#allocation0], 576
    %v1117 = vld [vmem:[%s1116] sm:%s686]
    %s1118 = sshllo.u32 0, 4
    %s1119 = smul.addr 4, 72
    %s1120 = scalar_lea.vmem %s1, %s1119
    %1121 = vst [vmem:[%s1120] sm:%s1118] %v1117
    %s1122 = scalar_lea.vmem [#allocation0], 584
    %v1123 = vld [vmem:[%s1122] sm:%s686]
    %s1124 = sshllo.u32 0, 4
    %s1125 = smul.addr 4, 73
    %s1126 = scalar_lea.vmem %s1, %s1125
    %1127 = vst [vmem:[%s1126] sm:%s1124] %v1123
    %s1128 = scalar_lea.vmem [#allocation0], 592
    %v1129 = vld [vmem:[%s1128] sm:%s686]
    %s1130 = sshllo.u32 0, 4
    %s1131 = smul.addr 4, 74
    %s1132 = scalar_lea.vmem %s1, %s1131
    %1133 = vst [vmem:[%s1132] sm:%s1130] %v1129
    %s1134 = scalar_lea.vmem [#allocation0], 600
    %v1135 = vld [vmem:[%s1134] sm:%s686]
    %s1136 = sshllo.u32 0, 4
    %s1137 = smul.addr 4, 75
    %s1138 = scalar_lea.vmem %s1, %s1137
    %1139 = vst [vmem:[%s1138] sm:%s1136] %v1135
    %s1140 = scalar_lea.vmem [#allocation0], 608
    %v1141 = vld [vmem:[%s1140] sm:%s686]
    %s1142 = sshllo.u32 0, 4
    %s1143 = smul.addr 4, 76
    %s1144 = scalar_lea.vmem %s1, %s1143
    %1145 = vst [vmem:[%s1144] sm:%s1142] %v1141
    %s1146 = scalar_lea.vmem [#allocation0], 616
    %v1147 = vld [vmem:[%s1146] sm:%s686]
    %s1148 = sshllo.u32 0, 4
    %s1149 = smul.addr 4, 77
    %s1150 = scalar_lea.vmem %s1, %s1149
    %1151 = vst [vmem:[%s1150] sm:%s1148] %v1147
    %s1152 = scalar_lea.vmem [#allocation0], 624
    %v1153 = vld [vmem:[%s1152] sm:%s686]
    %s1154 = sshllo.u32 0, 4
    %s1155 = smul.addr 4, 78
    %s1156 = scalar_lea.vmem %s1, %s1155
    %1157 = vst [vmem:[%s1156] sm:%s1154] %v1153
    %s1158 = scalar_lea.vmem [#allocation0], 632
    %v1159 = vld [vmem:[%s1158] sm:%s686]
    %s1160 = sshllo.u32 0, 4
    %s1161 = smul.addr 4, 79
    %s1162 = scalar_lea.vmem %s1, %s1161
    %1163 = vst [vmem:[%s1162] sm:%s1160] %v1159
    %s1164 = scalar_lea.vmem [#allocation0], 640
    %v1165 = vld [vmem:[%s1164] sm:%s686]
    %s1166 = sshllo.u32 0, 4
    %s1167 = smul.addr 4, 80
    %s1168 = scalar_lea.vmem %s1, %s1167
    %1169 = vst [vmem:[%s1168] sm:%s1166] %v1165

// kernel: acmix_forward.2
$region0: #{acmix_forward.2}
  #allocation0 [shape = 'u32[]', space=smem, size = 0x4, offset = 0x4, fixed_abs, tag = 'smem constant byte address 0x4 - core index']
  #allocation1 [shape = 'u32[144,128]{1,0:T(1,128)}', space=vmem, size = 0x12000, scoped, tag = 'internal scratch']
  %s0 = inlined_call_operand.vmem [shape: f32[2,4,256], index: 0, kind: input, shape index: {}]
  %s1 = inlined_call_operand.vmem [shape: f32[2,256], index: 1, kind: input, shape index: {}]
  %s2 = inlined_call_operand.vmem [shape: f32[48,4], index: 2, kind: input, shape index: {}]
  %s3 = inlined_call_operand.vmem [shape: f32[48,1], index: 3, kind: input, shape index: {}]
  %s4 = inlined_call_operand.vmem [shape: f32[4,2], index: 4, kind: input, shape index: {}]
  %s5 = inlined_call_operand.vmem [shape: f32[4,1], index: 5, kind: input, shape index: {}]
  %s6 = inlined_call_operand.vmem [shape: f32[36,48], index: 6, kind: input, shape index: {}]
  %s7 = inlined_call_operand.vmem [shape: f32[2,48,256], index: 7, kind: output, shape index: {0}]
  %s8 = inlined_call_operand.vmem [shape: f32[2,36,256], index: 8, kind: output, shape index: {1}]
  %s9 = inlined_call_operand.vmem [shape: f32[2,4,256], index: 9, kind: output, shape index: {2}]
  %10 = xla_tuple %s7, %s8, %s9
  %s11 = sld [smem:[#allocation0]]
  $region77: #{acmix_forward.2} parent=0
    _
  %s13 = ssub.s32 1, %s11
  %s14 = scalar_select 0, %s13, %s11
  loop: start=0, step=1, limit=4
  $region2: #{acmix_forward.2} parent=0 // loop_pre_header
    _
  $region3: #{acmix_forward.2} parent=0 // loop_header
    %s16 = sphi 0, %s20
    %p17 = scmp.ge.s32.totalorder %s16, 4
    %s26 = sphi 0, %s28
    %s29 = sphi 0, %s26
    %s30 = sphi 0, %s29
    %s46 = sphi 0, %s30
    %s50 = sphi 0, %s50
    %s52 = sphi 0, %s50
    %s53 = sphi 0, %s52
    %s67 = sphi 0, %s53
    %s71 = sphi 0, %s71
    %s73 = sphi 0, %s71
    %s74 = sphi 0, %s73
    %s88 = sphi 0, %s74
    %s92 = sphi 0, %s92
    %s94 = sphi 0, %s92
    %s95 = sphi 0, %s94
    %s109 = sphi 0, %s95
    %s113 = sphi 0, %s113
    %s115 = sphi 0, %s113
    %s116 = sphi 0, %s115
    %s130 = sphi 0, %s116
    %s134 = sphi 0, %s134
    %s136 = sphi 0, %s134
    %s137 = sphi 0, %s136
    %s151 = sphi 0, %s137
    %s155 = sphi 0, %s155
    %s157 = sphi 0, %s155
    %s158 = sphi 0, %s157
    %s172 = sphi 0, %s158
    %s178 = sphi 0, %s180
    %s181 = sphi 0, %s178
    %s182 = sphi 0, %s181
    %s198 = sphi 0, %s182
    %s204 = sphi 0, %s206
    %s207 = sphi 0, %s204
    %s208 = sphi 0, %s207
    %s224 = sphi 0, %s208
    %s230 = sphi 0, %s232
    %s233 = sphi 0, %s230
    %s234 = sphi 0, %s233
    %s250 = sphi 0, %s234
  $region4: #{acmix_forward.2} parent=0 // loop_header_branch
    %19 = sbr.rel (%p17) target = $region8
  $region5: #{acmix_forward.2} parent=0 // loop_body
    %s21 = ssub.s32 %s16, 1
    %s22 = ssub.s32 %s16, 2
    %s23 = sadd.s32 %s16, 1
    %s24 = ssub.s32 %s16, %s23
    %p25 = scmp.eq.s32.totalorder %s24, 0
    %s27 = sadd.s32 %s26, 1
    %s28 = scalar_select %p25, %s26, %s27
    %p31 = pneg %p25
    %p32 = scmp.eq.s32.totalorder %s16, 1
    %p33 = por %p31, %p32
    %p34 = scmp.ne.s32.totalorder %s26, %s29
    %p35 = scmp.eq.s32.totalorder %s16, 0
    %p36 = por %p34, %p35
    %p37 = scmp.ne.s32.totalorder %s26, %s29
    %p38 = scmp.eq.s32.totalorder %s21, 1
    %p39 = por %p37, %p38
    %p40 = scmp.ne.s32.totalorder %s29, %s30
    %p41 = scmp.eq.s32.totalorder %s21, 0
    %p42 = por %p40, %p41
    %p43 = scmp.ne.s32.totalorder %s29, %s30
    %p44 = scmp.eq.s32.totalorder %s22, 1
    %p45 = por %p43, %p44
    %p47 = scmp.ne.s32.totalorder %s30, %s46
    %p48 = scmp.eq.s32.totalorder %s22, 0
    %p49 = por %p47, %p48
    %s51 = sadd.s32 %s50, 1
    %p54 = scmp.eq.s32.totalorder %s16, 1
    %p55 = scmp.ne.s32.totalorder %s50, %s52
    %p56 = scmp.eq.s32.totalorder %s16, 0
    %p57 = por %p55, %p56
    %p58 = scmp.ne.s32.totalorder %s50, %s52
    %p59 = scmp.eq.s32.totalorder %s21, 1
    %p60 = por %p58, %p59
    %p61 = scmp.ne.s32.totalorder %s52, %s53
    %p62 = scmp.eq.s32.totalorder %s21, 0
    %p63 = por %p61, %p62
    %p64 = scmp.ne.s32.totalorder %s52, %s53
    %p65 = scmp.eq.s32.totalorder %s22, 1
    %p66 = por %p64, %p65
    %p68 = scmp.ne.s32.totalorder %s53, %s67
    %p69 = scmp.eq.s32.totalorder %s22, 0
    %p70 = por %p68, %p69
    %s72 = sadd.s32 %s71, 1
    %p75 = scmp.eq.s32.totalorder %s16, 1
    %p76 = scmp.ne.s32.totalorder %s71, %s73
    %p77 = scmp.eq.s32.totalorder %s16, 0
    %p78 = por %p76, %p77
    %p79 = scmp.ne.s32.totalorder %s71, %s73
    %p80 = scmp.eq.s32.totalorder %s21, 1
    %p81 = por %p79, %p80
    %p82 = scmp.ne.s32.totalorder %s73, %s74
    %p83 = scmp.eq.s32.totalorder %s21, 0
    %p84 = por %p82, %p83
    %p85 = scmp.ne.s32.totalorder %s73, %s74
    %p86 = scmp.eq.s32.totalorder %s22, 1
    %p87 = por %p85, %p86
    %p89 = scmp.ne.s32.totalorder %s74, %s88
    %p90 = scmp.eq.s32.totalorder %s22, 0
    %p91 = por %p89, %p90
    %s93 = sadd.s32 %s92, 1
    %p96 = scmp.eq.s32.totalorder %s16, 1
    %p97 = scmp.ne.s32.totalorder %s92, %s94
    %p98 = scmp.eq.s32.totalorder %s16, 0
    %p99 = por %p97, %p98
    %p100 = scmp.ne.s32.totalorder %s92, %s94
    %p101 = scmp.eq.s32.totalorder %s21, 1
    %p102 = por %p100, %p101
    %p103 = scmp.ne.s32.totalorder %s94, %s95
    %p104 = scmp.eq.s32.totalorder %s21, 0
    %p105 = por %p103, %p104
    %p106 = scmp.ne.s32.totalorder %s94, %s95
    %p107 = scmp.eq.s32.totalorder %s22, 1
    %p108 = por %p106, %p107
    %p110 = scmp.ne.s32.totalorder %s95, %s109
    %p111 = scmp.eq.s32.totalorder %s22, 0
    %p112 = por %p110, %p111
    %s114 = sadd.s32 %s113, 1
    %p117 = scmp.eq.s32.totalorder %s16, 1
    %p118 = scmp.ne.s32.totalorder %s113, %s115
    %p119 = scmp.eq.s32.totalorder %s16, 0
    %p120 = por %p118, %p119
    %p121 = scmp.ne.s32.totalorder %s113, %s115
    %p122 = scmp.eq.s32.totalorder %s21, 1
    %p123 = por %p121, %p122
    %p124 = scmp.ne.s32.totalorder %s115, %s116
    %p125 = scmp.eq.s32.totalorder %s21, 0
    %p126 = por %p124, %p125
    %p127 = scmp.ne.s32.totalorder %s115, %s116
    %p128 = scmp.eq.s32.totalorder %s22, 1
    %p129 = por %p127, %p128
    %p131 = scmp.ne.s32.totalorder %s116, %s130
    %p132 = scmp.eq.s32.totalorder %s22, 0
    %p133 = por %p131, %p132
    %s135 = sadd.s32 %s134, 1
    %p138 = scmp.eq.s32.totalorder %s16, 1
    %p139 = scmp.ne.s32.totalorder %s134, %s136
    %p140 = scmp.eq.s32.totalorder %s16, 0
    %p141 = por %p139, %p140
    %p142 = scmp.ne.s32.totalorder %s134, %s136
    %p143 = scmp.eq.s32.totalorder %s21, 1
    %p144 = por %p142, %p143
    %p145 = scmp.ne.s32.totalorder %s136, %s137
    %p146 = scmp.eq.s32.totalorder %s21, 0
    %p147 = por %p145, %p146
    %p148 = scmp.ne.s32.totalorder %s136, %s137
    %p149 = scmp.eq.s32.totalorder %s22, 1
    %p150 = por %p148, %p149
    %p152 = scmp.ne.s32.totalorder %s137, %s151
    %p153 = scmp.eq.s32.totalorder %s22, 0
    %p154 = por %p152, %p153
    %s156 = sadd.s32 %s155, 1
    %p159 = scmp.eq.s32.totalorder %s16, 1
    %p160 = scmp.ne.s32.totalorder %s155, %s157
    %p161 = scmp.eq.s32.totalorder %s16, 0
    %p162 = por %p160, %p161
    %p163 = scmp.ne.s32.totalorder %s155, %s157
    %p164 = scmp.eq.s32.totalorder %s21, 1
    %p165 = por %p163, %p164
    %p166 = scmp.ne.s32.totalorder %s157, %s158
    %p167 = scmp.eq.s32.totalorder %s21, 0
    %p168 = por %p166, %p167
    %p169 = scmp.ne.s32.totalorder %s157, %s158
    %p170 = scmp.eq.s32.totalorder %s22, 1
    %p171 = por %p169, %p170
    %p173 = scmp.ne.s32.totalorder %s158, %s172
    %p174 = scmp.eq.s32.totalorder %s22, 0
    %p175 = por %p173, %p174
    %s176 = ssub.s32 %s16, %s23
    %p177 = scmp.eq.s32.totalorder %s176, 0
    %s179 = sadd.s32 %s178, 1
    %s180 = scalar_select %p177, %s178, %s179
    %p183 = pneg %p177
    %p184 = scmp.eq.s32.totalorder %s16, 1
    %p185 = por %p183, %p184
    %p186 = scmp.ne.s32.totalorder %s178, %s181
    %p187 = scmp.eq.s32.totalorder %s16, 0
    %p188 = por %p186, %p187
    %p189 = scmp.ne.s32.totalorder %s178, %s181
    %p190 = scmp.eq.s32.totalorder %s21, 1
    %p191 = por %p189, %p190
    %p192 = scmp.ne.s32.totalorder %s181, %s182
    %p193 = scmp.eq.s32.totalorder %s21, 0
    %p194 = por %p192, %p193
    %p195 = scmp.ne.s32.totalorder %s181, %s182
    %p196 = scmp.eq.s32.totalorder %s22, 1
    %p197 = por %p195, %p196
    %p199 = scmp.ne.s32.totalorder %s182, %s198
    %p200 = scmp.eq.s32.totalorder %s22, 0
    %p201 = por %p199, %p200
    %s202 = ssub.s32 %s16, %s23
    %p203 = scmp.eq.s32.totalorder %s202, 0
    %s205 = sadd.s32 %s204, 1
    %s206 = scalar_select %p203, %s204, %s205
    %p209 = pneg %p203
    %p210 = scmp.eq.s32.totalorder %s16, 1
    %p211 = por %p209, %p210
    %p212 = scmp.ne.s32.totalorder %s204, %s207
    %p213 = scmp.eq.s32.totalorder %s16, 0
    %p214 = por %p212, %p213
    %p215 = scmp.ne.s32.totalorder %s204, %s207
    %p216 = scmp.eq.s32.totalorder %s21, 1
    %p217 = por %p215, %p216
    %p218 = scmp.ne.s32.totalorder %s207, %s208
    %p219 = scmp.eq.s32.totalorder %s21, 0
    %p220 = por %p218, %p219
    %p221 = scmp.ne.s32.totalorder %s207, %s208
    %p222 = scmp.eq.s32.totalorder %s22, 1
    %p223 = por %p221, %p222
    %p225 = scmp.ne.s32.totalorder %s208, %s224
    %p226 = scmp.eq.s32.totalorder %s22, 0
    %p227 = por %p225, %p226
    %s228 = ssub.s32 %s16, %s23
    %p229 = scmp.eq.s32.totalorder %s228, 0
    %s231 = sadd.s32 %s230, 1
    %s232 = scalar_select %p229, %s230, %s231
    %p235 = pneg %p229
    %p236 = scmp.eq.s32.totalorder %s16, 1
    %p237 = por %p235, %p236
    %p238 = scmp.ne.s32.totalorder %s230, %s233
    %p239 = scmp.eq.s32.totalorder %s16, 0
    %p240 = por %p238, %p239
    %p241 = scmp.ne.s32.totalorder %s230, %s233
    %p242 = scmp.eq.s32.totalorder %s21, 1
    %p243 = por %p241, %p242
    %p244 = scmp.ne.s32.totalorder %s233, %s234
    %p245 = scmp.eq.s32.totalorder %s21, 0
    %p246 = por %p244, %p245
    %p247 = scmp.ne.s32.totalorder %s233, %s234
    %p248 = scmp.eq.s32.totalorder %s22, 1
    %p249 = por %p247, %p248
    %p251 = scmp.ne.s32.totalorder %s234, %s250
    %p252 = scmp.eq.s32.totalorder %s22, 0
    %p253 = por %p251, %p252
    %p254 = scmp.le.s32.totalorder 1, %s16
    %p255 = scmp.lt.s32.totalorder %s16, 3
    %p256 = pnand %p254, %p255
    %p257 = pneg %p256
    // Predicated region
    $region9: #{acmix_forward.2} parent=5 // pred_check
      _
    $region10: #{acmix_forward.2} parent=5 // pred_check_branch
      %259 = sbr.rel (%p256) target = $region12
    $region11: #{acmix_forward.2} parent=5 // pred_region
      %s260 = ssub.s32 %s16, 1
      // Predicated region
      $region13: #{acmix_forward.2} parent=11 // pred_check
        %p261 = pneg %p63
      $region14: #{acmix_forward.2} parent=11 // pred_check_branch
        %263 = sbr.rel (%p261) target = $region16
      $region15: #{acmix_forward.2} parent=11 // pred_region
        _
      $region16: #{acmix_forward.2} parent=11 // pred_fallthru
        _
      // Predicated region
      $region17: #{acmix_forward.2} parent=11 // pred_check
        %p264 = pneg %p84
      $region18: #{acmix_forward.2} parent=11 // pred_check_branch
        %266 = sbr.rel (%p264) target = $region20
      $region19: #{acmix_forward.2} parent=11 // pred_region
        _
      $region20: #{acmix_forward.2} parent=11 // pred_fallthru
        _
      // Predicated region
      $region21: #{acmix_forward.2} parent=11 // pred_check
        %p267 = pneg %p105
      $region22: #{acmix_forward.2} parent=11 // pred_check_branch
        %269 = sbr.rel (%p267) target = $region24
      $region23: #{acmix_forward.2} parent=11 // pred_region
        _
      $region24: #{acmix_forward.2} parent=11 // pred_fallthru
        _
      // Predicated region
      $region25: #{acmix_forward.2} parent=11 // pred_check
        %p270 = pneg %p126
      $region26: #{acmix_forward.2} parent=11 // pred_check_branch
        %272 = sbr.rel (%p270) target = $region28
      $region27: #{acmix_forward.2} parent=11 // pred_region
        _
      $region28: #{acmix_forward.2} parent=11 // pred_fallthru
        _
      // Predicated region
      $region29: #{acmix_forward.2} parent=11 // pred_check
        %p273 = pneg %p147
      $region30: #{acmix_forward.2} parent=11 // pred_check_branch
        %275 = sbr.rel (%p273) target = $region32
      $region31: #{acmix_forward.2} parent=11 // pred_region
        _
      $region32: #{acmix_forward.2} parent=11 // pred_fallthru
        _
      // Predicated region
      $region33: #{acmix_forward.2} parent=11 // pred_check
        %p276 = pneg %p168
      $region34: #{acmix_forward.2} parent=11 // pred_check_branch
        %278 = sbr.rel (%p276) target = $region36
      $region35: #{acmix_forward.2} parent=11 // pred_region
        _
      $region36: #{acmix_forward.2} parent=11 // pred_fallthru
        _
    $region12: #{acmix_forward.2} parent=5 // pred_fallthru
      _
    %p279 = scmp.lt.s32.totalorder %s16, 2
    // Predicated region
    $region37: #{acmix_forward.2} parent=5 // pred_check
      %p280 = pneg %p279
    $region38: #{acmix_forward.2} parent=5 // pred_check_branch
      %282 = sbr.rel (%p280) target = $region40
    $region39: #{acmix_forward.2} parent=5 // pred_region
      // Predicated region
      $region41: #{acmix_forward.2} parent=39 // pred_check
        %p283 = pneg %p36
      $region42: #{acmix_forward.2} parent=39 // pred_check_branch
        %285 = sbr.rel (%p283) target = $region44
      $region43: #{acmix_forward.2} parent=39 // pred_region
        %p286 = scmp.lt.s32.totalorder %s16, 1
        %s287 = scalar_select %p286, %s16, 1
        %s288 = smul.addr %s287, 2
        %s289 = smul.addr %s288, 4
        %s290 = scalar_lea.vmem %s0, %s289
      $region44: #{acmix_forward.2} parent=39 // pred_fallthru
        _
    $region40: #{acmix_forward.2} parent=5 // pred_fallthru
      _
    %p291 = scmp.le.s32.totalorder 1, %s16
    %p292 = scmp.lt.s32.totalorder %s16, 3
    %p293 = pnand %p291, %p292
    %p294 = pneg %p293
    // Predicated region
    $region45: #{acmix_forward.2} parent=5 // pred_check
      _
    $region46: #{acmix_forward.2} parent=5 // pred_check_branch
      %296 = sbr.rel (%p293) target = $region48
    $region47: #{acmix_forward.2} parent=5 // pred_region
      %s297 = ssub.s32 %s16, 1
      %p298 = scmp.lt.s32.totalorder %s21, 1
      %s299 = scalar_select %p298, %s21, 1
      %s300 = smul.addr %s299, 2
      %s301 = smul.addr %s300, 4
      %s302 = scalar_lea.vmem %s0, %s301
      %p303 = pneg %p42
      %p304 = pneg %p39
      %p305 = pneg %p63
      %p306 = pneg %p60
      %p307 = pneg %p84
      %p308 = pneg %p81
      %p309 = pneg %p105
      %p310 = pneg %p102
      %p311 = pneg %p126
      %p312 = pneg %p123
      %p313 = pneg %p147
      %p314 = pneg %p144
      %p315 = pneg %p168
      %p316 = pneg %p165
      %p317 = pneg %p194
      %p318 = pneg %p191
      %p319 = scmp.lt.s32.totalorder %s21, 1
      %s320 = scalar_select %p319, %s21, 1
      %s321 = smul.addr %s320, 12
      %s322 = smul.addr %s321, 8
      %s323 = scalar_lea.vmem %s7, %s322
      %p324 = pneg %p220
      %p325 = pneg %p217
      %p326 = scmp.lt.s32.totalorder %s21, 1
      %s327 = scalar_select %p326, %s21, 1
      %s328 = smul.addr %s327, 10
      %s329 = smul.addr %s328, 8
      %s330 = scalar_lea.vmem %s8, %s329
      %p331 = pneg %p246
      %p332 = pneg %p243
      %p333 = scmp.lt.s32.totalorder %s21, 1
      %s334 = scalar_select %p333, %s21, 1
      %s335 = smul.addr %s334, 2
      %s336 = smul.addr %s335, 4
      %s337 = scalar_lea.vmem %s9, %s336
      %p338 = scmp.lt.s32.totalorder %s21, 1
      %s339 = scalar_select %p338, %s21, 1
      %s340 = smul.addr %s339, 2
      %s341 = smul.addr %s340, 4
      %s342 = scalar_lea.vmem %s0, %s341
      %p343 = scmp.lt.s32.totalorder %s21, 1
      %s344 = scalar_select %p343, %s21, 1
      %s345 = smul.addr %s344, 12
      %s346 = smul.addr %s345, 8
      %s347 = scalar_lea.vmem %s7, %s346
      %p348 = scmp.lt.s32.totalorder %s21, 1
      %s349 = scalar_select %p348, %s21, 1
      %s350 = smul.addr %s349, 10
      %s351 = smul.addr %s350, 8
      %s352 = scalar_lea.vmem %s8, %s351
      %p353 = scmp.lt.s32.totalorder %s21, 1
      %s354 = scalar_select %p353, %s21, 1
      %s355 = smul.addr %s354, 2
      %s356 = smul.addr %s355, 4
      %s357 = scalar_lea.vmem %s9, %s356
      %v358 = vld [vmem:[%s342] sm:$0xff]
      %v359 = vld [vmem:[%s2] sm:$0xff]
      %v360 = vld [vmem:[%s2 + $0x8] sm:$0xff]
      %v361 = vld [vmem:[%s2 + $0x10] sm:$0xff]
      %v362 = vld [vmem:[%s2 + $0x18] sm:$0xff]
      %v363 = vld [vmem:[%s2 + $0x20] sm:$0xff]
      %v364 = vld [vmem:[%s2 + $0x28] sm:$0xff]
      %366 = vset.pattern.permute.xlu0 0
      %367 = vperm.xlu0 %366, %v359
      %v368 = vpop.permute.xlu0 %367
      %371 = vset.pattern.permute.xlu0 0
      %372 = vperm.xlu0 %371, %v360
      %v373 = vpop.permute.xlu0 %372
      %376 = vset.pattern.permute.xlu0 0
      %377 = vperm.xlu0 %376, %v361
      %v378 = vpop.permute.xlu0 %377
      %381 = vset.pattern.permute.xlu0 0
      %382 = vperm.xlu0 %381, %v362
      %v383 = vpop.permute.xlu0 %382
      %386 = vset.pattern.permute.xlu0 0
      %387 = vperm.xlu0 %386, %v363
      %v388 = vpop.permute.xlu0 %387
      %391 = vset.pattern.permute.xlu0 0
      %392 = vperm.xlu0 %391, %v364
      %v393 = vpop.permute.xlu0 %392
      %v396 = vlaneseq
      %v397 = vshrl.u32 %v396, 7
      %v398 = vsub.s32 0, %v397
      %v399 = vrot.slane %v358, %v398
      %v400 = vlaneseq
      %v401 = vshrl.u32 %v400, 7
      %v402 = vsub.s32 4, %v401
      %v403 = vrot.slane %v358, %v402
      %v406 = vlaneseq
      %v407 = vshrl.u32 %v406, 7
      %v408 = vsub.s32 0, %v407
      %v409 = vrot.slane %v399, %v408
      %v410 = vlaneseq
      %v411 = vshrl.u32 %v410, 7
      %v412 = vsub.s32 0, %v411
      %v413 = vrot.slane %v403, %v412
      %v414 = vmul.f32 %v368, %v409
      %v415 = vmul.f32 %v368, %v413
      %v416 = vmul.f32 %v373, %v409
      %v417 = vmul.f32 %v373, %v413
      %v418 = vmul.f32 %v378, %v409
      %v419 = vmul.f32 %v378, %v413
      %v420 = vmul.f32 %v383, %v409
      %v421 = vmul.f32 %v383, %v413
      %v422 = vmul.f32 %v388, %v409
      %v423 = vmul.f32 %v388, %v413
      %v424 = vmul.f32 %v393, %v409
      %v425 = vmul.f32 %v393, %v413
      %v426 = vadd.f32 %v414, 0.0
      %v427 = vadd.f32 %v415, 0.0
      %v428 = vadd.f32 %v416, 0.0
      %v429 = vadd.f32 %v417, 0.0
      %v430 = vadd.f32 %v418, 0.0
      %v431 = vadd.f32 %v419, 0.0
      %v432 = vadd.f32 %v420, 0.0
      %v433 = vadd.f32 %v421, 0.0
      %v434 = vadd.f32 %v422, 0.0
      %v435 = vadd.f32 %v423, 0.0
      %v436 = vadd.f32 %v424, 0.0
      %v437 = vadd.f32 %v425, 0.0
      %438 = vset.pattern.permute.xlu0 1
      %439 = vperm.xlu0 %438, %v359
      %v440 = vpop.permute.xlu0 %439
      %442 = vset.pattern.permute.xlu0 1
      %443 = vperm.xlu0 %442, %v360
      %v444 = vpop.permute.xlu0 %443
      %446 = vset.pattern.permute.xlu0 1
      %447 = vperm.xlu0 %446, %v361
      %v448 = vpop.permute.xlu0 %447
      %450 = vset.pattern.permute.xlu0 1
      %451 = vperm.xlu0 %450, %v362
      %v452 = vpop.permute.xlu0 %451
      %454 = vset.pattern.permute.xlu0 1
      %455 = vperm.xlu0 %454, %v363
      %v456 = vpop.permute.xlu0 %455
      %458 = vset.pattern.permute.xlu0 1
      %459 = vperm.xlu0 %458, %v364
      %v460 = vpop.permute.xlu0 %459
      %v462 = vlaneseq
      %v463 = vshrl.u32 %v462, 7
      %v464 = vsub.s32 1, %v463
      %v465 = vrot.slane %v358, %v464
      %v466 = vlaneseq
      %v467 = vshrl.u32 %v466, 7
      %v468 = vsub.s32 5, %v467
      %v469 = vrot.slane %v358, %v468
      %v472 = vlaneseq
      %v473 = vshrl.u32 %v472, 7
      %v474 = vsub.s32 1, %v473
      %v475 = vrot.slane %v465, %v474
      %v476 = vlaneseq
      %v477 = vshrl.u32 %v476, 7
      %v478 = vsub.s32 1, %v477
      %v479 = vrot.slane %v469, %v478
      %v480 = vmul.f32 %v440, %v475
      %v481 = vmul.f32 %v440, %v479
      %v482 = vmul.f32 %v444, %v475
      %v483 = vmul.f32 %v444, %v479
      %v484 = vmul.f32 %v448, %v475
      %v485 = vmul.f32 %v448, %v479
      %v486 = vmul.f32 %v452, %v475
      %v487 = vmul.f32 %v452, %v479
      %v488 = vmul.f32 %v456, %v475
      %v489 = vmul.f32 %v456, %v479
      %v490 = vmul.f32 %v460, %v475
      %v491 = vmul.f32 %v460, %v479
      %v492 = vadd.f32 %v426, %v480
      %v493 = vadd.f32 %v427, %v481
      %v494 = vadd.f32 %v428, %v482
      %v495 = vadd.f32 %v429, %v483
      %v496 = vadd.f32 %v430, %v484
      %v497 = vadd.f32 %v431, %v485
      %v498 = vadd.f32 %v432, %v486
      %v499 = vadd.f32 %v433, %v487
      %v500 = vadd.f32 %v434, %v488
      %v501 = vadd.f32 %v435, %v489
      %v502 = vadd.f32 %v436, %v490
      %v503 = vadd.f32 %v437, %v491
      %504 = vset.pattern.permute.xlu0 2
      %505 = vperm.xlu0 %504, %v359
      %v506 = vpop.permute.xlu0 %505
      %508 = vset.pattern.permute.xlu0 2
      %509 = vperm.xlu0 %508, %v360
      %v510 = vpop.permute.xlu0 %509
      %512 = vset.pattern.permute.xlu0 2
      %513 = vperm.xlu0 %512, %v361
      %v514 = vpop.permute.xlu0 %513
      %516 = vset.pattern.permute.xlu0 2
      %517 = vperm.xlu0 %516, %v362
      %v518 = vpop.permute.xlu0 %517
      %520 = vset.pattern.permute.xlu0 2
      %521 = vperm.xlu0 %520, %v363
      %v522 = vpop.permute.xlu0 %521
      %524 = vset.pattern.permute.xlu0 2
      %525 = vperm.xlu0 %524, %v364
      %v526 = vpop.permute.xlu0 %525
      %v528 = vlaneseq
      %v529 = vshrl.u32 %v528, 7
      %v530 = vsub.s32 2, %v529
      %v531 = vrot.slane %v358, %v530
      %v532 = vlaneseq
      %v533 = vshrl.u32 %v532, 7
      %v534 = vsub.s32 6, %v533
      %v535 = vrot.slane %v358, %v534
      %v538 = vlaneseq
      %v539 = vshrl.u32 %v538, 7
      %v540 = vsub.s32 2, %v539
      %v541 = vrot.slane %v531, %v540
      %v542 = vlaneseq
      %v543 = vshrl.u32 %v542, 7
      %v544 = vsub.s32 2, %v543
      %v545 = vrot.slane %v535, %v544
      %v546 = vmul.f32 %v506, %v541
      %v547 = vmul.f32 %v506, %v545
      %v548 = vmul.f32 %v510, %v541
      %v549 = vmul.f32 %v510, %v545
      %v550 = vmul.f32 %v514, %v541
      %v551 = vmul.f32 %v514, %v545
      %v552 = vmul.f32 %v518, %v541
      %v553 = vmul.f32 %v518, %v545
      %v554 = vmul.f32 %v522, %v541
      %v555 = vmul.f32 %v522, %v545
      %v556 = vmul.f32 %v526, %v541
      %v557 = vmul.f32 %v526, %v545
      %v558 = vadd.f32 %v492, %v546
      %v559 = vadd.f32 %v493, %v547
      %v560 = vadd.f32 %v494, %v548
      %v561 = vadd.f32 %v495, %v549
      %v562 = vadd.f32 %v496, %v550
      %v563 = vadd.f32 %v497, %v551
      %v564 = vadd.f32 %v498, %v552
      %v565 = vadd.f32 %v499, %v553
      %v566 = vadd.f32 %v500, %v554
      %v567 = vadd.f32 %v501, %v555
      %v568 = vadd.f32 %v502, %v556
      %v569 = vadd.f32 %v503, %v557
      %570 = vset.pattern.permute.xlu0 3
      %571 = vperm.xlu0 %570, %v359
      %v572 = vpop.permute.xlu0 %571
      %574 = vset.pattern.permute.xlu0 3
      %575 = vperm.xlu0 %574, %v360
      %v576 = vpop.permute.xlu0 %575
      %578 = vset.pattern.permute.xlu0 3
      %579 = vperm.xlu0 %578, %v361
      %v580 = vpop.permute.xlu0 %579
      %582 = vset.pattern.permute.xlu0 3
      %583 = vperm.xlu0 %582, %v362
      %v584 = vpop.permute.xlu0 %583
      %586 = vset.pattern.permute.xlu0 3
      %587 = vperm.xlu0 %586, %v363
      %v588 = vpop.permute.xlu0 %587
      %590 = vset.pattern.permute.xlu0 3
      %591 = vperm.xlu0 %590, %v364
      %v592 = vpop.permute.xlu0 %591
      %v594 = vlaneseq
      %v595 = vshrl.u32 %v594, 7
      %v596 = vsub.s32 3, %v595
      %v597 = vrot.slane %v358, %v596
      %v598 = vlaneseq
      %v599 = vshrl.u32 %v598, 7
      %v600 = vsub.s32 7, %v599
      %v601 = vrot.slane %v358, %v600
      %v604 = vlaneseq
      %v605 = vshrl.u32 %v604, 7
      %v606 = vsub.s32 3, %v605
      %v607 = vrot.slane %v597, %v606
      %v608 = vlaneseq
      %v609 = vshrl.u32 %v608, 7
      %v610 = vsub.s32 3, %v609
      %v611 = vrot.slane %v601, %v610
      %v612 = vmul.f32 %v572, %v607
      %v613 = vmul.f32 %v572, %v611
      %v614 = vmul.f32 %v576, %v607
      %v615 = vmul.f32 %v576, %v611
      %v616 = vmul.f32 %v580, %v607
      %v617 = vmul.f32 %v580, %v611
      %v618 = vmul.f32 %v584, %v607
      %v619 = vmul.f32 %v584, %v611
      %v620 = vmul.f32 %v588, %v607
      %v621 = vmul.f32 %v588, %v611
      %v622 = vmul.f32 %v592, %v607
      %v623 = vmul.f32 %v592, %v611
      %v624 = vadd.f32 %v558, %v612
      %v625 = vadd.f32 %v559, %v613
      %v626 = vadd.f32 %v560, %v614
      %v627 = vadd.f32 %v561, %v615
      %v628 = vadd.f32 %v562, %v616
      %v629 = vadd.f32 %v563, %v617
      %v630 = vadd.f32 %v564, %v618
      %v631 = vadd.f32 %v565, %v619
      %v632 = vadd.f32 %v566, %v620
      %v633 = vadd.f32 %v567, %v621
      %v634 = vadd.f32 %v568, %v622
      %v635 = vadd.f32 %v569, %v623
      %v636 = vld [vmem:[%s3] sm:$0xff]
      %v637 = vld [vmem:[%s3 + $0x8] sm:$0xff]
      %v638 = vld [vmem:[%s3 + $0x10] sm:$0xff]
      %v639 = vld [vmem:[%s3 + $0x18] sm:$0xff]
      %v640 = vld [vmem:[%s3 + $0x20] sm:$0xff]
      %v641 = vld [vmem:[%s3 + $0x28] sm:$0xff]
      %643 = vset.pattern.permute.xlu0 0
      %644 = vperm.xlu0 %643, %v636
      %v645 = vpop.permute.xlu0 %644
      %648 = vset.pattern.permute.xlu0 0
      %649 = vperm.xlu0 %648, %v637
      %v650 = vpop.permute.xlu0 %649
      %653 = vset.pattern.permute.xlu0 0
      %654 = vperm.xlu0 %653, %v638
      %v655 = vpop.permute.xlu0 %654
      %658 = vset.pattern.permute.xlu0 0
      %659 = vperm.xlu0 %658, %v639
      %v660 = vpop.permute.xlu0 %659
      %663 = vset.pattern.permute.xlu0 0
      %664 = vperm.xlu0 %663, %v640
      %v665 = vpop.permute.xlu0 %664
      %668 = vset.pattern.permute.xlu0 0
      %669 = vperm.xlu0 %668, %v641
      %v670 = vpop.permute.xlu0 %669
      %v672 = vadd.f32 %v624, %v645
      %v673 = vadd.f32 %v625, %v645
      %v674 = vadd.f32 %v626, %v650
      %v675 = vadd.f32 %v627, %v650
      %v676 = vadd.f32 %v628, %v655
      %v677 = vadd.f32 %v629, %v655
      %v678 = vadd.f32 %v630, %v660
      %v679 = vadd.f32 %v631, %v660
      %v680 = vadd.f32 %v632, %v665
      %v681 = vadd.f32 %v633, %v665
      %v682 = vadd.f32 %v634, %v670
      %v683 = vadd.f32 %v635, %v670
      %684 = vst [vmem:[%s347] sm:$0xff] %v672
      %685 = vst [vmem:[%s347 + $0x8] sm:$0xff] %v673
      %686 = vst [vmem:[%s347 + $0x10] sm:$0xff] %v674
      %687 = vst [vmem:[%s347 + $0x18] sm:$0xff] %v675
      %688 = vst [vmem:[%s347 + $0x20] sm:$0xff] %v676
      %689 = vst [vmem:[%s347 + $0x28] sm:$0xff] %v677
      %690 = vst [vmem:[%s347 + $0x30] sm:$0xff] %v678
      %691 = vst [vmem:[%s347 + $0x38] sm:$0xff] %v679
      %692 = vst [vmem:[%s347 + $0x40] sm:$0xff] %v680
      %693 = vst [vmem:[%s347 + $0x48] sm:$0xff] %v681
      %694 = vst [vmem:[%s347 + $0x50] sm:$0xff] %v682
      %695 = vst [vmem:[%s347 + $0x58] sm:$0xff] %v683
      %v696 = vld [vmem:[%s1] sm:$0xf]
      %v697 = vld [vmem:[%s4] sm:$0xf]
      %699 = vset.pattern.permute.xlu0 0
      %700 = vperm.xlu0 %699, %v697
      %v701 = vpop.permute.xlu0 %700
      %v704 = vlaneseq
      %v705 = vshrl.u32 %v704, 7
      %v706 = vsub.s32 0, %v705
      %v707 = vrot.slane %v696, %v706
      %v708 = vlaneseq
      %v709 = vshrl.u32 %v708, 7
      %v710 = vsub.s32 2, %v709
      %v711 = vrot.slane %v696, %v710
      %v714 = vlaneseq
      %v715 = vshrl.u32 %v714, 7
      %v716 = vsub.s32 0, %v715
      %v717 = vrot.slane %v707, %v716
      %v718 = vlaneseq
      %v719 = vshrl.u32 %v718, 7
      %v720 = vsub.s32 0, %v719
      %v721 = vrot.slane %v711, %v720
      %v722 = vmul.f32 %v701, %v717
      %v723 = vmul.f32 %v701, %v721
      %724 = vset.pattern.permute.xlu0 1
      %725 = vperm.xlu0 %724, %v697
      %v726 = vpop.permute.xlu0 %725
      %v728 = vlaneseq
      %v729 = vshrl.u32 %v728, 7
      %v730 = vsub.s32 1, %v729
      %v731 = vrot.slane %v696, %v730
      %v732 = vlaneseq
      %v733 = vshrl.u32 %v732, 7
      %v734 = vsub.s32 3, %v733
      %v735 = vrot.slane %v696, %v734
      %v738 = vlaneseq
      %v739 = vshrl.u32 %v738, 7
      %v740 = vsub.s32 1, %v739
      %v741 = vrot.slane %v731, %v740
      %v742 = vlaneseq
      %v743 = vshrl.u32 %v742, 7
      %v744 = vsub.s32 1, %v743
      %v745 = vrot.slane %v735, %v744
      %v746 = vmul.f32 %v726, %v741
      %v747 = vmul.f32 %v726, %v745
      %v748 = vadd.f32 %v722, %v746
      %v749 = vadd.f32 %v723, %v747
      %v750 = vld [vmem:[%s5] sm:$0xf]
      %752 = vset.pattern.permute.xlu0 0
      %753 = vperm.xlu0 %752, %v750
      %v754 = vpop.permute.xlu0 %753
      %v756 = vadd.f32 %v748, %v754
      %v757 = vadd.f32 %v749, %v754
      %v760 = vcombine.low %v756, %v757
      %762 = vst [vmem:[%s357] sm:$0xff] %v760
      %v763 = vld [vmem:[%s6] sm:$0xff]
      %v764 = vld [vmem:[%s6 + $0x8] sm:$0xff]
      %v765 = vld [vmem:[%s6 + $0x10] sm:$0xff]
      %v766 = vld [vmem:[%s6 + $0x18] sm:$0xff]
      %v767 = vld [vmem:[%s6 + $0x20] sm:$0xf]
      %vm768 = vcmask 392192
      %v770 = vsel %vm768, %v763, 0
      %v773 = vsel %vm768, %v764, 0
      %v776 = vsel %vm768, %v765, 0
      %v779 = vsel %vm768, %v766, 0
      %v782 = vsel %vm768, %v767, 0
      %784 = vmatprep.subr.mxu0 %v673
      %785 = vmatpush1.msra.mxu0 %v672
      %786 = vmatprep.subr.mxu0 %v675
      %787 = vmatpush1.msra.mxu0 %v674
      %788 = vmatprep.subr.mxu0 %v677
      %789 = vmatpush1.msra.mxu0 %v676
      %790 = vmatprep.subr.mxu0 %v679
      %791 = vmatpush1.msra.mxu0 %v678
      %792 = vmatprep.subr.mxu0 %v681
      %793 = vmatpush1.msra.mxu0 %v680
      %794 = vmatprep.subr.mxu0 %v683
      %795 = vmatpush1.msra.mxu0 %v682
      %796 = vmatprep.subr.mxu0 0.0
      %797 = vmatpush1.msra.mxu0 0.0
      %798 = vmatprep.subr.mxu0 0.0
      %799 = vmatpush1.msra.mxu0 0.0
      %800 = vmatprep.subr.mxu0 0.0
      %801 = vmatpush1.msra.mxu0 0.0
      %802 = vmatprep.subr.mxu0 0.0
      %803 = vmatpush1.msra.mxu0 0.0
      %804 = vmatprep.subr.mxu0 0.0
      %805 = vmatpush1.msra.mxu0 0.0
      %806 = vmatprep.subr.mxu0 0.0
      %807 = vmatpush1.msra.mxu0 0.0
      %808 = vmatprep.subr.mxu0 0.0
      %809 = vmatpush1.msra.mxu0 0.0
      %810 = vmatprep.subr.mxu0 0.0
      %811 = vmatpush1.msra.mxu0 0.0
      %812 = vmatprep.subr.mxu0 0.0
      %813 = vmatpush1.msra.mxu0 0.0
      %814 = vmatprep.subr.mxu0 0.0
      %815 = vmatpush1.msra.mxu0 0.0
      %816 = vmatprep.subr.mxu0 0.0
      %817 = vmatpush1.msra.mxu0 0.0
      %818 = vmatprep.subr.mxu0 0.0
      %819 = vmatpush1.msra.mxu0 0.0
      %820 = vmatprep.subr.mxu0 0.0
      %821 = vmatpush1.msra.mxu0 0.0
      %822 = vmatprep.subr.mxu0 0.0
      %823 = vmatpush1.msra.mxu0 0.0
      %824 = vmatprep.subr.mxu0 0.0
      %825 = vmatpush1.msra.mxu0 0.0
      %826 = vmatprep.subr.mxu0 0.0
      %827 = vmatpush1.msra.mxu0 0.0
      %828 = vmatprep.subr.mxu0 0.0
      %829 = vmatpush1.msra.mxu0 0.0
      %830 = vmatprep.subr.mxu0 0.0
      %831 = vmatpush1.msra.mxu0 0.0
      %832 = vmatprep.subr.mxu0 0.0
      %833 = vmatpush1.msra.mxu0 0.0
      %834 = vmatprep.subr.mxu0 0.0
      %835 = vmatpush1.msra.mxu0 0.0
      %836 = vmatprep.subr.mxu0 0.0
      %837 = vmatpush1.msra.mxu0 0.0
      %838 = vmatprep.subr.mxu0 0.0
      %839 = vmatpush1.msra.mxu0 0.0
      %840 = vmatprep.subr.mxu0 0.0
      %841 = vmatpush1.msra.mxu0 0.0
      %842 = vmatprep.subr.mxu0 0.0
      %843 = vmatpush1.msra.mxu0 0.0
      %844 = vmatprep.subr.mxu0 0.0
      %845 = vmatpush1.msra.mxu0 0.0
      %846 = vmatprep.subr.mxu0 0.0
      %847 = vmatpush1.msra.mxu0 0.0
      %848 = vmatprep.mubr.f32.mxu0 0.0
      %849 = vmatmul.mubr.f32.gmra.mrb[0].mxu0 %v770
      %v850 = vpop.f32.mrb[0].mxu0
      %v851 = vadd.f32 0.0, %v850
      %v852 = vpop.f32.mrb[0].mxu0
      %v853 = vadd.f32 0.0, %v852
      %854 = vmatprep.mubr.f32.mxu0 0.0
      %855 = vmatmul.mubr.f32.gmra.mrb[0].mxu0 %v773
      %v856 = vpop.f32.mrb[0].mxu0
      %v857 = vadd.f32 0.0, %v856
      %v858 = vpop.f32.mrb[0].mxu0
      %v859 = vadd.f32 0.0, %v858
      %860 = vmatprep.mubr.f32.mxu0 0.0
      %861 = vmatmul.mubr.f32.gmra.mrb[0].mxu0 %v776
      %v862 = vpop.f32.mrb[0].mxu0
      %v863 = vadd.f32 0.0, %v862
      %v864 = vpop.f32.mrb[0].mxu0
      %v865 = vadd.f32 0.0, %v864
      %866 = vmatprep.mubr.f32.mxu0 0.0
      %867 = vmatmul.mubr.f32.gmra.mrb[0].mxu0 %v779
      %v868 = vpop.f32.mrb[0].mxu0
      %v869 = vadd.f32 0.0, %v868
      %v870 = vpop.f32.mrb[0].mxu0
      %v871 = vadd.f32 0.0, %v870
      %872 = vmatprep.mubr.f32.mxu0 0.0
      %873 = vmatmul.mubr.f32.gmra.mrb[0].mxu0 %v782
      %v874 = vpop.f32.mrb[0].mxu0
      %v875 = vadd.f32 0.0, %v874
      %v876 = vpop.f32.mrb[0].mxu0
      %v877 = vadd.f32 0.0, %v876
      %878 = vdwg.mxu0
      %879 = vst [vmem:[%s352] sm:$0xff] %v851
      %880 = vst [vmem:[%s352 + $0x8] sm:$0xff] %v853
      %881 = vst [vmem:[%s352 + $0x10] sm:$0xff] %v857
      %882 = vst [vmem:[%s352 + $0x18] sm:$0xff] %v859
      %883 = vst [vmem:[%s352 + $0x20] sm:$0xff] %v863
      %884 = vst [vmem:[%s352 + $0x28] sm:$0xff] %v865
      %885 = vst [vmem:[%s352 + $0x30] sm:$0xff] %v869
      %886 = vst [vmem:[%s352 + $0x38] sm:$0xff] %v871
      %887 = vst [vmem:[%s352 + $0x40] sm:$0xf] %v875
      %888 = vst [vmem:[%s352 + $0x48] sm:$0xf] %v877
      %p889 = scmp.lt.s32.totalorder %s21, 1
      %s890 = scalar_select %p889, %s21, 1
      %s891 = smul.addr %s890, 12
      %s892 = smul.addr %s891, 8
      %s893 = scalar_lea.vmem %s7, %s892
      %p894 = scmp.lt.s32.totalorder %s21, 1
      %s895 = scalar_select %p894, %s21, 1
      %s896 = smul.addr %s895, 10
      %s897 = smul.addr %s896, 8
      %s898 = scalar_lea.vmem %s8, %s897
      %p899 = scmp.lt.s32.totalorder %s21, 1
      %s900 = scalar_select %p899, %s21, 1
      %s901 = smul.addr %s900, 2
      %s902 = smul.addr %s901, 4
      %s903 = scalar_lea.vmem %s9, %s902
      // Predicated region
      $region49: #{acmix_forward.2} parent=47 // pred_check
        %p904 = pneg %p191
      $region50: #{acmix_forward.2} parent=47 // pred_check_branch
        %906 = sbr.rel (%p904) target = $region52
      $region51: #{acmix_forward.2} parent=47 // pred_region
        _
      $region52: #{acmix_forward.2} parent=47 // pred_fallthru
        _
      // Predicated region
      $region53: #{acmix_forward.2} parent=47 // pred_check
        %p907 = pneg %p217
      $region54: #{acmix_forward.2} parent=47 // pred_check_branch
        %909 = sbr.rel (%p907) target = $region56
      $region55: #{acmix_forward.2} parent=47 // pred_region
        _
      $region56: #{acmix_forward.2} parent=47 // pred_fallthru
        _
      // Predicated region
      $region57: #{acmix_forward.2} parent=47 // pred_check
        %p910 = pneg %p243
      $region58: #{acmix_forward.2} parent=47 // pred_check_branch
        %912 = sbr.rel (%p910) target = $region60
      $region59: #{acmix_forward.2} parent=47 // pred_region
        _
      $region60: #{acmix_forward.2} parent=47 // pred_fallthru
        _
    $region48: #{acmix_forward.2} parent=5 // pred_fallthru
      _
    %p913 = scmp.le.s32.totalorder 2, %s16
    // Predicated region
    $region61: #{acmix_forward.2} parent=5 // pred_check
      %p914 = pneg %p913
    $region62: #{acmix_forward.2} parent=5 // pred_check_branch
      %916 = sbr.rel (%p914) target = $region64
    $region63: #{acmix_forward.2} parent=5 // pred_region
      %s917 = ssub.s32 %s16, 2
      // Predicated region
      $region65: #{acmix_forward.2} parent=63 // pred_check
        %p918 = pneg %p197
      $region66: #{acmix_forward.2} parent=63 // pred_check_branch
        %920 = sbr.rel (%p918) target = $region68
      $region67: #{acmix_forward.2} parent=63 // pred_region
        %p921 = scmp.lt.s32.totalorder %s22, 1
        %s922 = scalar_select %p921, %s22, 1
        %s923 = smul.addr %s922, 12
        %s924 = smul.addr %s923, 8
        %s925 = scalar_lea.vmem %s7, %s924
      $region68: #{acmix_forward.2} parent=63 // pred_fallthru
        _
      // Predicated region
      $region69: #{acmix_forward.2} parent=63 // pred_check
        %p926 = pneg %p223
      $region70: #{acmix_forward.2} parent=63 // pred_check_branch
        %928 = sbr.rel (%p926) target = $region72
      $region71: #{acmix_forward.2} parent=63 // pred_region
        %p929 = scmp.lt.s32.totalorder %s22, 1
        %s930 = scalar_select %p929, %s22, 1
        %s931 = smul.addr %s930, 10
        %s932 = smul.addr %s931, 8
        %s933 = scalar_lea.vmem %s8, %s932
      $region72: #{acmix_forward.2} parent=63 // pred_fallthru
        _
      // Predicated region
      $region73: #{acmix_forward.2} parent=63 // pred_check
        %p934 = pneg %p249
      $region74: #{acmix_forward.2} parent=63 // pred_check_branch
        %936 = sbr.rel (%p934) target = $region76
      $region75: #{acmix_forward.2} parent=63 // pred_region
        %p937 = scmp.lt.s32.totalorder %s22, 1
        %s938 = scalar_select %p937, %s22, 1
        %s939 = smul.addr %s938, 2
        %s940 = smul.addr %s939, 4
        %s941 = scalar_lea.vmem %s9, %s940
      $region76: #{acmix_forward.2} parent=63 // pred_fallthru
        _
    $region64: #{acmix_forward.2} parent=5 // pred_fallthru
      _
  $region6: #{acmix_forward.2} parent=0 // loop_footer
    %s20 = sadd.s32 1, %s16
  $region7: #{acmix_forward.2} parent=0 // loop_footer_branch
    %15 = sbr.rel target = $region3
  $region8: #{acmix_forward.2} parent=0 // loop_exit
    _

// kernel: acmix_forward.3
$region0: #{acmix_forward.3}
  #allocation0 [shape = 'u32[]', space=smem, size = 0x4, offset = 0x4, fixed_abs, tag = 'smem constant byte address 0x4 - core index']
  #allocation1 [shape = 'u32[144,128]{1,0:T(1,128)}', space=vmem, size = 0x12000, scoped, tag = 'internal scratch']
  %s0 = inlined_call_operand.vmem [shape: f32[2,48,256], index: 0, kind: input, shape index: {}]
  %s1 = inlined_call_operand.vmem [shape: f32[2,16,49,256], index: 1, kind: input, shape index: {}]
  %s2 = inlined_call_operand.vmem [shape: f32[2,16,49,256], index: 2, kind: input, shape index: {}]
  %s3 = inlined_call_operand.vmem [shape: f32[1,4,49,256], index: 3, kind: input, shape index: {}]
  %s4 = inlined_call_operand.vmem [shape: f32[2,4,256], index: 4, kind: input, shape index: {}]
  %s5 = inlined_call_operand.vmem [shape: f32[2,324,256], index: 5, kind: input, shape index: {}]
  %s6 = inlined_call_operand.vmem [shape: f32[16,324], index: 6, kind: input, shape index: {}]
  %s7 = inlined_call_operand.vmem [shape: f32[2], index: 7, kind: input, shape index: {}]
  %s8 = inlined_call_operand.vmem [shape: f32[2,16,256], index: 8, kind: output, shape index: {}]
  %s9 = sld [smem:[#allocation0]]
  $region69: #{acmix_forward.3} parent=0
    _
  %s11 = ssub.s32 1, %s9
  %s12 = scalar_select 0, %s11, %s9
  $region1: #{acmix_forward.3} parent=0
    #allocation2 [shape = 'u8[512]{0}', space=smem, size = 0x200, scoped, tag = 'input window, operand 7, single buffered']
    #allocation3 [shape = 's32[2]{0}', space=sflag, size = 0x8, scoped, tag = 'scoped memory for acmix_forward.3']
    %13 = vsyncpa [#allocation3], 0
    loop: start=0, step=1, limit=4
    $region2: #{acmix_forward.3} parent=1 // loop_pre_header
      _
    $region3: #{acmix_forward.3} parent=1 // loop_header
      %s15 = sphi 0, %s19
      %p16 = scmp.ge.s32.totalorder %s15, 4
      %s25 = sphi 0, %s27
      %s28 = sphi 0, %s25
      %s29 = sphi 0, %s28
      %s45 = sphi 0, %s29
      %s51 = sphi 0, %s53
      %s54 = sphi 0, %s51
      %s55 = sphi 0, %s54
      %s71 = sphi 0, %s55
      %s77 = sphi 0, %s79
      %s80 = sphi 0, %s77
      %s81 = sphi 0, %s80
      %s97 = sphi 0, %s81
      %s101 = sphi 0, %s101
      %s103 = sphi 0, %s101
      %s104 = sphi 0, %s103
      %s118 = sphi 0, %s104
      %s124 = sphi 0, %s126
      %s127 = sphi 0, %s124
      %s128 = sphi 0, %s127
      %s144 = sphi 0, %s128
      %s150 = sphi 0, %s152
      %s153 = sphi 0, %s150
      %s154 = sphi 0, %s153
      %s170 = sphi 0, %s154
      %s174 = sphi 0, %s174
      %s176 = sphi 0, %s174
      %s177 = sphi 0, %s176
      %s191 = sphi 0, %s177
      %s195 = sphi 0, %s195
      %s197 = sphi 0, %s195
      %s198 = sphi 0, %s197
      %s212 = sphi 0, %s198
      %s218 = sphi 0, %s220
      %s221 = sphi 0, %s218
      %s222 = sphi 0, %s221
      %s238 = sphi 0, %s222
    $region4: #{acmix_forward.3} parent=1 // loop_header_branch
      %18 = sbr.rel (%p16) target = $region8
    $region5: #{acmix_forward.3} parent=1 // loop_body
      %s20 = ssub.s32 %s15, 1
      %s21 = ssub.s32 %s15, 2
      %s22 = sadd.s32 %s15, 1
      %s23 = ssub.s32 %s15, %s22
      %p24 = scmp.eq.s32.totalorder %s23, 0
      %s26 = sadd.s32 %s25, 1
      %s27 = scalar_select %p24, %s25, %s26
      %p30 = pneg %p24
      %p31 = scmp.eq.s32.totalorder %s15, 1
      %p32 = por %p30, %p31
      %p33 = scmp.ne.s32.totalorder %s25, %s28
      %p34 = scmp.eq.s32.totalorder %s15, 0
      %p35 = por %p33, %p34
      %p36 = scmp.ne.s32.totalorder %s25, %s28
      %p37 = scmp.eq.s32.totalorder %s20, 1
      %p38 = por %p36, %p37
      %p39 = scmp.ne.s32.totalorder %s28, %s29
      %p40 = scmp.eq.s32.totalorder %s20, 0
      %p41 = por %p39, %p40
      %p42 = scmp.ne.s32.totalorder %s28, %s29
      %p43 = scmp.eq.s32.totalorder %s21, 1
      %p44 = por %p42, %p43
      %p46 = scmp.ne.s32.totalorder %s29, %s45
      %p47 = scmp.eq.s32.totalorder %s21, 0
      %p48 = por %p46, %p47
      %s49 = ssub.s32 %s15, %s22
      %p50 = scmp.eq.s32.totalorder %s49, 0
      %s52 = sadd.s32 %s51, 1
      %s53 = scalar_select %p50, %s51, %s52
      %p56 = pneg %p50
      %p57 = scmp.eq.s32.totalorder %s15, 1
      %p58 = por %p56, %p57
      %p59 = scmp.ne.s32.totalorder %s51, %s54
      %p60 = scmp.eq.s32.totalorder %s15, 0
      %p61 = por %p59, %p60
      %p62 = scmp.ne.s32.totalorder %s51, %s54
      %p63 = scmp.eq.s32.totalorder %s20, 1
      %p64 = por %p62, %p63
      %p65 = scmp.ne.s32.totalorder %s54, %s55
      %p66 = scmp.eq.s32.totalorder %s20, 0
      %p67 = por %p65, %p66
      %p68 = scmp.ne.s32.totalorder %s54, %s55
      %p69 = scmp.eq.s32.totalorder %s21, 1
      %p70 = por %p68, %p69
      %p72 = scmp.ne.s32.totalorder %s55, %s71
      %p73 = scmp.eq.s32.totalorder %s21, 0
      %p74 = por %p72, %p73
      %s75 = ssub.s32 %s15, %s22
      %p76 = scmp.eq.s32.totalorder %s75, 0
      %s78 = sadd.s32 %s77, 1
      %s79 = scalar_select %p76, %s77, %s78
      %p82 = pneg %p76
      %p83 = scmp.eq.s32.totalorder %s15, 1
      %p84 = por %p82, %p83
      %p85 = scmp.ne.s32.totalorder %s77, %s80
      %p86 = scmp.eq.s32.totalorder %s15, 0
      %p87 = por %p85, %p86
      %p88 = scmp.ne.s32.totalorder %s77, %s80
      %p89 = scmp.eq.s32.totalorder %s20, 1
      %p90 = por %p88, %p89
      %p91 = scmp.ne.s32.totalorder %s80, %s81
      %p92 = scmp.eq.s32.totalorder %s20, 0
      %p93 = por %p91, %p92
      %p94 = scmp.ne.s32.totalorder %s80, %s81
      %p95 = scmp.eq.s32.totalorder %s21, 1
      %p96 = por %p94, %p95
      %p98 = scmp.ne.s32.totalorder %s81, %s97
      %p99 = scmp.eq.s32.totalorder %s21, 0
      %p100 = por %p98, %p99
      %s102 = sadd.s32 %s101, 1
      %p105 = scmp.eq.s32.totalorder %s15, 1
      %p106 = scmp.ne.s32.totalorder %s101, %s103
      %p107 = scmp.eq.s32.totalorder %s15, 0
      %p108 = por %p106, %p107
      %p109 = scmp.ne.s32.totalorder %s101, %s103
      %p110 = scmp.eq.s32.totalorder %s20, 1
      %p111 = por %p109, %p110
      %p112 = scmp.ne.s32.totalorder %s103, %s104
      %p113 = scmp.eq.s32.totalorder %s20, 0
      %p114 = por %p112, %p113
      %p115 = scmp.ne.s32.totalorder %s103, %s104
      %p116 = scmp.eq.s32.totalorder %s21, 1
      %p117 = por %p115, %p116
      %p119 = scmp.ne.s32.totalorder %s104, %s118
      %p120 = scmp.eq.s32.totalorder %s21, 0
      %p121 = por %p119, %p120
      %s122 = ssub.s32 %s15, %s22
      %p123 = scmp.eq.s32.totalorder %s122, 0
      %s125 = sadd.s32 %s124, 1
      %s126 = scalar_select %p123, %s124, %s125
      %p129 = pneg %p123
      %p130 = scmp.eq.s32.totalorder %s15, 1
      %p131 = por %p129, %p130
      %p132 = scmp.ne.s32.totalorder %s124, %s127
      %p133 = scmp.eq.s32.totalorder %s15, 0
      %p134 = por %p132, %p133
      %p135 = scmp.ne.s32.totalorder %s124, %s127
      %p136 = scmp.eq.s32.totalorder %s20, 1
      %p137 = por %p135, %p136
      %p138 = scmp.ne.s32.totalorder %s127, %s128
      %p139 = scmp.eq.s32.totalorder %s20, 0
      %p140 = por %p138, %p139
      %p141 = scmp.ne.s32.totalorder %s127, %s128
      %p142 = scmp.eq.s32.totalorder %s21, 1
      %p143 = por %p141, %p142
      %p145 = scmp.ne.s32.totalorder %s128, %s144
      %p146 = scmp.eq.s32.totalorder %s21, 0
      %p147 = por %p145, %p146
      %s148 = ssub.s32 %s15, %s22
      %p149 = scmp.eq.s32.totalorder %s148, 0
      %s151 = sadd.s32 %s150, 1
      %s152 = scalar_select %p149, %s150, %s151
      %p155 = pneg %p149
      %p156 = scmp.eq.s32.totalorder %s15, 1
      %p157 = por %p155, %p156
      %p158 = scmp.ne.s32.totalorder %s150, %s153
      %p159 = scmp.eq.s32.totalorder %s15, 0
      %p160 = por %p158, %p159
      %p161 = scmp.ne.s32.totalorder %s150, %s153
      %p162 = scmp.eq.s32.totalorder %s20, 1
      %p163 = por %p161, %p162
      %p164 = scmp.ne.s32.totalorder %s153, %s154
      %p165 = scmp.eq.s32.totalorder %s20, 0
      %p166 = por %p164, %p165
      %p167 = scmp.ne.s32.totalorder %s153, %s154
      %p168 = scmp.eq.s32.totalorder %s21, 1
      %p169 = por %p167, %p168
      %p171 = scmp.ne.s32.totalorder %s154, %s170
      %p172 = scmp.eq.s32.totalorder %s21, 0
      %p173 = por %p171, %p172
      %s175 = sadd.s32 %s174, 1
      %p178 = scmp.eq.s32.totalorder %s15, 1
      %p179 = scmp.ne.s32.totalorder %s174, %s176
      %p180 = scmp.eq.s32.totalorder %s15, 0
      %p181 = por %p179, %p180
      %p182 = scmp.ne.s32.totalorder %s174, %s176
      %p183 = scmp.eq.s32.totalorder %s20, 1
      %p184 = por %p182, %p183
      %p185 = scmp.ne.s32.totalorder %s176, %s177
      %p186 = scmp.eq.s32.totalorder %s20, 0
      %p187 = por %p185, %p186
      %p188 = scmp.ne.s32.totalorder %s176, %s177
      %p189 = scmp.eq.s32.totalorder %s21, 1
      %p190 = por %p188, %p189
      %p192 = scmp.ne.s32.totalorder %s177, %s191
      %p193 = scmp.eq.s32.totalorder %s21, 0
      %p194 = por %p192, %p193
      %s196 = sadd.s32 %s195, 1
      %p199 = scmp.eq.s32.totalorder %s15, 1
      %p200 = scmp.ne.s32.totalorder %s195, %s197
      %p201 = scmp.eq.s32.totalorder %s15, 0
      %p202 = por %p200, %p201
      %p203 = scmp.ne.s32.totalorder %s195, %s197
      %p204 = scmp.eq.s32.totalorder %s20, 1
      %p205 = por %p203, %p204
      %p206 = scmp.ne.s32.totalorder %s197, %s198
      %p207 = scmp.eq.s32.totalorder %s20, 0
      %p208 = por %p206, %p207
      %p209 = scmp.ne.s32.totalorder %s197, %s198
      %p210 = scmp.eq.s32.totalorder %s21, 1
      %p211 = por %p209, %p210
      %p213 = scmp.ne.s32.totalorder %s198, %s212
      %p214 = scmp.eq.s32.totalorder %s21, 0
      %p215 = por %p213, %p214
      %s216 = ssub.s32 %s15, %s22
      %p217 = scmp.eq.s32.totalorder %s216, 0
      %s219 = sadd.s32 %s218, 1
      %s220 = scalar_select %p217, %s218, %s219
      %p223 = pneg %p217
      %p224 = scmp.eq.s32.totalorder %s15, 1
      %p225 = por %p223, %p224
      %p226 = scmp.ne.s32.totalorder %s218, %s221
      %p227 = scmp.eq.s32.totalorder %s15, 0
      %p228 = por %p226, %p227
      %p229 = scmp.ne.s32.totalorder %s218, %s221
      %p230 = scmp.eq.s32.totalorder %s20, 1
      %p231 = por %p229, %p230
      %p232 = scmp.ne.s32.totalorder %s221, %s222
      %p233 = scmp.eq.s32.totalorder %s20, 0
      %p234 = por %p232, %p233
      %p235 = scmp.ne.s32.totalorder %s221, %s222
      %p236 = scmp.eq.s32.totalorder %s21, 1
      %p237 = por %p235, %p236
      %p239 = scmp.ne.s32.totalorder %s222, %s238
      %p240 = scmp.eq.s32.totalorder %s21, 0
      %p241 = por %p239, %p240
      %p242 = scmp.le.s32.totalorder 1, %s15
      %p243 = scmp.lt.s32.totalorder %s15, 3
      %p244 = pnand %p242, %p243
      %p245 = pneg %p244
      // Predicated region
      $region9: #{acmix_forward.3} parent=5 // pred_check
        _
      $region10: #{acmix_forward.3} parent=5 // pred_check_branch
        %247 = sbr.rel (%p244) target = $region12
      $region11: #{acmix_forward.3} parent=5 // pred_region
        %s248 = ssub.s32 %s15, 1
        // Predicated region
        $region13: #{acmix_forward.3} parent=11 // pred_check
          %p249 = pneg %p114
        $region14: #{acmix_forward.3} parent=11 // pred_check_branch
          %251 = sbr.rel (%p249) target = $region16
        $region15: #{acmix_forward.3} parent=11 // pred_region
          _
        $region16: #{acmix_forward.3} parent=11 // pred_fallthru
          _
        // Predicated region
        $region17: #{acmix_forward.3} parent=11 // pred_check
          %p252 = pneg %p187
        $region18: #{acmix_forward.3} parent=11 // pred_check_branch
          %254 = sbr.rel (%p252) target = $region20
        $region19: #{acmix_forward.3} parent=11 // pred_region
          _
        $region20: #{acmix_forward.3} parent=11 // pred_fallthru
          _
        // Predicated region
        $region21: #{acmix_forward.3} parent=11 // pred_check
          %p255 = pneg %p208
        $region22: #{acmix_forward.3} parent=11 // pred_check_branch
          %257 = sbr.rel (%p255) target = $region24
        $region23: #{acmix_forward.3} parent=11 // pred_region
          %s259 = ssub.s32 16, 16
          %260 = vsyncadd [#allocation3], %s259
          %s262 = sshll.u32 %s7, 4
          %s263 = int_to_ptr.vmem [resolvable:$true] %s262
          %265 = dma.vmem_to_smem %s263, 16, [#allocation2], [#allocation3]
        $region24: #{acmix_forward.3} parent=11 // pred_fallthru
          _
      $region12: #{acmix_forward.3} parent=5 // pred_fallthru
        _
      %p266 = scmp.lt.s32.totalorder %s15, 2
      // Predicated region
      $region25: #{acmix_forward.3} parent=5 // pred_check
        %p267 = pneg %p266
      $region26: #{acmix_forward.3} parent=5 // pred_check_branch
        %269 = sbr.rel (%p267) target = $region28
      $region27: #{acmix_forward.3} parent=5 // pred_region
        // Predicated region
        $region29: #{acmix_forward.3} parent=27 // pred_check
          %p270 = pneg %p35
        $region30: #{acmix_forward.3} parent=27 // pred_check_branch
          %272 = sbr.rel (%p270) target = $region32
        $region31: #{acmix_forward.3} parent=27 // pred_region
          %p273 = scmp.lt.s32.totalorder %s15, 1
          %s274 = scalar_select %p273, %s15, 1
          %s275 = smul.addr %s274, 12
          %s276 = smul.addr %s275, 8
          %s277 = scalar_lea.vmem %s0, %s276
        $region32: #{acmix_forward.3} parent=27 // pred_fallthru
          _
        // Predicated region
        $region33: #{acmix_forward.3} parent=27 // pred_check
          %p278 = pneg %p61
        $region34: #{acmix_forward.3} parent=27 // pred_check_branch
          %280 = sbr.rel (%p278) target = $region36
        $region35: #{acmix_forward.3} parent=27 // pred_region
          %p281 = scmp.lt.s32.totalorder %s15, 1
          %s282 = scalar_select %p281, %s15, 1
          %s283 = smul.addr %s282, 224
          %s284 = smul.addr %s283, 8
          %s285 = scalar_lea.vmem %s1, %s284
        $region36: #{acmix_forward.3} parent=27 // pred_fallthru
          _
        // Predicated region
        $region37: #{acmix_forward.3} parent=27 // pred_check
          %p286 = pneg %p87
        $region38: #{acmix_forward.3} parent=27 // pred_check_branch
          %288 = sbr.rel (%p286) target = $region40
        $region39: #{acmix_forward.3} parent=27 // pred_region
          %p289 = scmp.lt.s32.totalorder %s15, 1
          %s290 = scalar_select %p289, %s15, 1
          %s291 = smul.addr %s290, 224
          %s292 = smul.addr %s291, 8
          %s293 = scalar_lea.vmem %s2, %s292
        $region40: #{acmix_forward.3} parent=27 // pred_fallthru
          _
        // Predicated region
        $region41: #{acmix_forward.3} parent=27 // pred_check
          %p294 = pneg %p134
        $region42: #{acmix_forward.3} parent=27 // pred_check_branch
          %296 = sbr.rel (%p294) target = $region44
        $region43: #{acmix_forward.3} parent=27 // pred_region
          %p297 = scmp.lt.s32.totalorder %s15, 1
          %s298 = scalar_select %p297, %s15, 1
          %s299 = smul.addr %s298, 2
          %s300 = smul.addr %s299, 4
          %s301 = scalar_lea.vmem %s4, %s300
        $region44: #{acmix_forward.3} parent=27 // pred_fallthru
          _
        // Predicated region
        $region45: #{acmix_forward.3} parent=27 // pred_check
          %p302 = pneg %p160
        $region46: #{acmix_forward.3} parent=27 // pred_check_branch
          %304 = sbr.rel (%p302) target = $region48
        $region47: #{acmix_forward.3} parent=27 // pred_region
          %p305 = scmp.lt.s32.totalorder %s15, 1
          %s306 = scalar_select %p305, %s15, 1
          %s307 = smul.addr %s306, 82
          %s308 = smul.addr %s307, 8
          %s309 = scalar_lea.vmem %s5, %s308
        $region48: #{acmix_forward.3} parent=27 // pred_fallthru
          _
      $region28: #{acmix_forward.3} parent=5 // pred_fallthru
        _
      %p310 = scmp.le.s32.totalorder 1, %s15
      %p311 = scmp.lt.s32.totalorder %s15, 3
      %p312 = pnand %p310, %p311
      %p313 = pneg %p312
      // Predicated region
      $region49: #{acmix_forward.3} parent=5 // pred_check
        _
      $region50: #{acmix_forward.3} parent=5 // pred_check_branch
        %315 = sbr.rel (%p312) target = $region52
      $region51: #{acmix_forward.3} parent=5 // pred_region
        %s316 = ssub.s32 %s15, 1
        // Predicated region
        $region53: #{acmix_forward.3} parent=51 // pred_check
          %p317 = pneg %p208
        $region54: #{acmix_forward.3} parent=51 // pred_check_branch
          %319 = sbr.rel (%p317) target = $region56
        $region55: #{acmix_forward.3} parent=51 // pred_region
          %320 = dma.done [#allocation3], 16
        $region56: #{acmix_forward.3} parent=51 // pred_fallthru
          _
        %321 = sfence
        %p322 = scmp.lt.s32.totalorder %s20, 1
        %s323 = scalar_select %p322, %s20, 1
        %s324 = smul.addr %s323, 12
        %s325 = smul.addr %s324, 8
        %s326 = scalar_lea.vmem %s0, %s325
        %p327 = pneg %p41
        %p328 = pneg %p38
        %p329 = scmp.lt.s32.totalorder %s20, 1
        %s330 = scalar_select %p329, %s20, 1
        %s331 = smul.addr %s330, 224
        %s332 = smul.addr %s331, 8
        %s333 = scalar_lea.vmem %s1, %s332
        %p334 = pneg %p67
        %p335 = pneg %p64
        %p336 = scmp.lt.s32.totalorder %s20, 1
        %s337 = scalar_select %p336, %s20, 1
        %s338 = smul.addr %s337, 224
        %s339 = smul.addr %s338, 8
        %s340 = scalar_lea.vmem %s2, %s339
        %p341 = pneg %p93
        %p342 = pneg %p90
        %p343 = pneg %p114
        %p344 = pneg %p111
        %p345 = scmp.lt.s32.totalorder %s20, 1
        %s346 = scalar_select %p345, %s20, 1
        %s347 = smul.addr %s346, 2
        %s348 = smul.addr %s347, 4
        %s349 = scalar_lea.vmem %s4, %s348
        %p350 = pneg %p140
        %p351 = pneg %p137
        %p352 = scmp.lt.s32.totalorder %s20, 1
        %s353 = scalar_select %p352, %s20, 1
        %s354 = smul.addr %s353, 82
        %s355 = smul.addr %s354, 8
        %s356 = scalar_lea.vmem %s5, %s355
        %p357 = pneg %p166
        %p358 = pneg %p163
        %p359 = pneg %p187
        %p360 = pneg %p184
        %p361 = pneg %p208
        %p362 = pneg %p205
        %p363 = pneg %p234
        %p364 = pneg %p231
        %p365 = scmp.lt.s32.totalorder %s20, 1
        %s366 = scalar_select %p365, %s20, 1
        %s367 = smul.addr %s366, 4
        %s368 = smul.addr %s367, 8
        %s369 = scalar_lea.vmem %s8, %s368
        %p370 = scmp.lt.s32.totalorder %s20, 1
        %s371 = scalar_select %p370, %s20, 1
        %s372 = smul.addr %s371, 12
        %s373 = smul.addr %s372, 8
        %s374 = scalar_lea.vmem %s0, %s373
        %p375 = scmp.lt.s32.totalorder %s20, 1
        %s376 = scalar_select %p375, %s20, 1
        %s377 = smul.addr %s376, 224
        %s378 = smul.addr %s377, 8
        %s379 = scalar_lea.vmem %s1, %s378
        %p380 = scmp.lt.s32.totalorder %s20, 1
        %s381 = scalar_select %p380, %s20, 1
        %s382 = smul.addr %s381, 224
        %s383 = smul.addr %s382, 8
        %s384 = scalar_lea.vmem %s2, %s383
        %p385 = scmp.lt.s32.totalorder %s20, 1
        %s386 = scalar_select %p385, %s20, 1
        %s387 = smul.addr %s386, 2
        %s388 = smul.addr %s387, 4
        %s389 = scalar_lea.vmem %s4, %s388
        %p390 = scmp.lt.s32.totalorder %s20, 1
        %s391 = scalar_select %p390, %s20, 1
        %s392 = smul.addr %s391, 82
        %s393 = smul.addr %s392, 8
        %s394 = scalar_lea.vmem %s5, %s393
        %p395 = scmp.lt.s32.totalorder %s20, 1
        %s396 = scalar_select %p395, %s20, 1
        %s397 = smul.addr %s396, 4
        %s398 = smul.addr %s397, 8
        %s399 = scalar_lea.vmem %s8, %s398
        %v400 = vld [vmem:[%s374] sm:$0xff]
        %v401 = vld [vmem:[%s374 + $0x8] sm:$0xff]
        %v402 = vld [vmem:[%s374 + $0x10] sm:$0xff]
        %v403 = vld [vmem:[%s374 + $0x18] sm:$0xff]
        %v404 = vmul.f32 %v400, 0.5
        %v405 = vmul.f32 %v401, 0.5
        %v406 = vmul.f32 %v402, 0.5
        %v407 = vmul.f32 %v403, 0.5
        %v408 = vld [vmem:[%s389] sm:$0xff]
        %v409 = vld [vmem:[%s3] sm:$0xff]
        %v410 = vld [vmem:[%s3 + $0x8] sm:$0xff]
        %v411 = vld [vmem:[%s3 + $0x10] sm:$0xff]
        %v412 = vld [vmem:[%s3 + $0x18] sm:$0xff]
        %v413 = vld [vmem:[%s3 + $0x20] sm:$0xff]
        %v414 = vld [vmem:[%s3 + $0x28] sm:$0xff]
        %v415 = vld [vmem:[%s3 + $0x30] sm:$0xff]
        %v416 = vld [vmem:[%s3 + $0x38] sm:$0xff]
        %v417 = vld [vmem:[%s3 + $0x40] sm:$0xff]
        %v418 = vld [vmem:[%s3 + $0x48] sm:$0xff]
        %v419 = vld [vmem:[%s3 + $0x50] sm:$0xff]
        %v420 = vld [vmem:[%s3 + $0x58] sm:$0xff]
        %v421 = vld [vmem:[%s3 + $0x60] sm:$0x1]
        %v422 = vld [vmem:[%s3 + $0x68] sm:$0x1]
        %v423 = vld [vmem:[%s3 + $0x70] sm:$0xff]
        %v424 = vld [vmem:[%s3 + $0x78] sm:$0xff]
        %v425 = vld [vmem:[%s3 + $0x80] sm:$0xff]
        %v426 = vld [vmem:[%s3 + $0x88] sm:$0xff]
        %v427 = vld [vmem:[%s3 + $0x90] sm:$0xff]
        %v428 = vld [vmem:[%s3 + $0x98] sm:$0xff]
        %v429 = vld [vmem:[%s3 + $0xa0] sm:$0xff]
        %v430 = vld [vmem:[%s3 + $0xa8] sm:$0xff]
        %v431 = vld [vmem:[%s3 + $0xb0] sm:$0xff]
        %v432 = vld [vmem:[%s3 + $0xb8] sm:$0xff]
        %v433 = vld [vmem:[%s3 + $0xc0] sm:$0xff]
        %v434 = vld [vmem:[%s3 + $0xc8] sm:$0xff]
        %v435 = vld [vmem:[%s3 + $0xd0] sm:$0x1]
        %v436 = vld [vmem:[%s3 + $0xd8] sm:$0x1]
        %v437 = vld [vmem:[%s3 + $0xe0] sm:$0xff]
        %v438 = vld [vmem:[%s3 + $0xe8] sm:$0xff]
        %v439 = vld [vmem:[%s3 + $0xf0] sm:$0xff]
        %v440 = vld [vmem:[%s3 + $0xf8] sm:$0xff]
        %v441 = vld [vmem:[%s3 + $0x100] sm:$0xff]
        %v442 = vld [vmem:[%s3 + $0x108] sm:$0xff]
        %v443 = vld [vmem:[%s3 + $0x110] sm:$0xff]
        %v444 = vld [vmem:[%s3 + $0x118] sm:$0xff]
        %v445 = vld [vmem:[%s3 + $0x120] sm:$0xff]
        %v446 = vld [vmem:[%s3 + $0x128] sm:$0xff]
        %v447 = vld [vmem:[%s3 + $0x130] sm:$0xff]
        %v448 = vld [vmem:[%s3 + $0x138] sm:$0xff]
        %v449 = vld [vmem:[%s3 + $0x140] sm:$0x1]
        %v450 = vld [vmem:[%s3 + $0x148] sm:$0x1]
        %v451 = vld [vmem:[%s3 + $0x150] sm:$0xff]
        %v452 = vld [vmem:[%s3 + $0x158] sm:$0xff]
        %v453 = vld [vmem:[%s3 + $0x160] sm:$0xff]
        %v454 = vld [vmem:[%s3 + $0x168] sm:$0xff]
        %v455 = vld [vmem:[%s3 + $0x170] sm:$0xff]
        %v456 = vld [vmem:[%s3 + $0x178] sm:$0xff]
        %v457 = vld [vmem:[%s3 + $0x180] sm:$0xff]
        %v458 = vld [vmem:[%s3 + $0x188] sm:$0xff]
        %v459 = vld [vmem:[%s3 + $0x190] sm:$0xff]
        %v460 = vld [vmem:[%s3 + $0x198] sm:$0xff]
        %v461 = vld [vmem:[%s3 + $0x1a0] sm:$0xff]
        %v462 = vld [vmem:[%s3 + $0x1a8] sm:$0xff]
        %v463 = vld [vmem:[%s3 + $0x1b0] sm:$0x1]
        %v464 = vld [vmem:[%s3 + $0x1b8] sm:$0x1]
        %v465 = vld [vmem:[%s379] sm:$0xff]
        %v466 = vld [vmem:[%s379 + $0x8] sm:$0xff]
        %v467 = vld [vmem:[%s379 + $0x10] sm:$0xff]
        %v468 = vld [vmem:[%s379 + $0x18] sm:$0xff]
        %v469 = vld [vmem:[%s379 + $0x20] sm:$0xff]
        %v470 = vld [vmem:[%s379 + $0x28] sm:$0xff]
        %v471 = vld [vmem:[%s379 + $0x30] sm:$0xff]
        %v472 = vld [vmem:[%s379 + $0x38] sm:$0xff]
        %v473 = vld [vmem:[%s379 + $0x40] sm:$0xff]
        %v474 = vld [vmem:[%s379 + $0x48] sm:$0xff]
        %v475 = vld [vmem:[%s379 + $0x50] sm:$0xff]
        %v476 = vld [vmem:[%s379 + $0x58] sm:$0xff]
        %v477 = vld [vmem:[%s379 + $0x60] sm:$0x1]
        %v478 = vld [vmem:[%s379 + $0x68] sm:$0x1]
        %v479 = vld [vmem:[%s379 + $0x70] sm:$0xff]
        %v480 = vld [vmem:[%s379 + $0x78] sm:$0xff]
        %v481 = vld [vmem:[%s379 + $0x80] sm:$0xff]
        %v482 = vld [vmem:[%s379 + $0x88] sm:$0xff]
        %v483 = vld [vmem:[%s379 + $0x90] sm:$0xff]
        %v484 = vld [vmem:[%s379 + $0x98] sm:$0xff]
        %v485 = vld [vmem:[%s379 + $0xa0] sm:$0xff]
        %v486 = vld [vmem:[%s379 + $0xa8] sm:$0xff]
        %v487 = vld [vmem:[%s379 + $0xb0] sm:$0xff]
        %v488 = vld [vmem:[%s379 + $0xb8] sm:$0xff]
        %v489 = vld [vmem:[%s379 + $0xc0] sm:$0xff]
        %v490 = vld [vmem:[%s379 + $0xc8] sm:$0xff]
        %v491 = vld [vmem:[%s379 + $0xd0] sm:$0x1]
        %v492 = vld [vmem:[%s379 + $0xd8] sm:$0x1]
        %v493 = vld [vmem:[%s379 + $0xe0] sm:$0xff]
        %v494 = vld [vmem:[%s379 + $0xe8] sm:$0xff]
        %v495 = vld [vmem:[%s379 + $0xf0] sm:$0xff]
        %v496 = vld [vmem:[%s379 + $0xf8] sm:$0xff]
        %v497 = vld [vmem:[%s379 + $0x100] sm:$0xff]
        %v498 = vld [vmem:[%s379 + $0x108] sm:$0xff]
        %v499 = vld [vmem:[%s379 + $0x110] sm:$0xff]
        %v500 = vld [vmem:[%s379 + $0x118] sm:$0xff]
        %v501 = vld [vmem:[%s379 + $0x120] sm:$0xff]
        %v502 = vld [vmem:[%s379 + $0x128] sm:$0xff]
        %v503 = vld [vmem:[%s379 + $0x130] sm:$0xff]
        %v504 = vld [vmem:[%s379 + $0x138] sm:$0xff]
        %v505 = vld [vmem:[%s379 + $0x140] sm:$0x1]
        %v506 = vld [vmem:[%s379 + $0x148] sm:$0x1]
        %v507 = vld [vmem:[%s379 + $0x150] sm:$0xff]
        %v508 = vld [vmem:[%s379 + $0x158] sm:$0xff]
        %v509 = vld [vmem:[%s379 + $0x160] sm:$0xff]
        %v510 = vld [vmem:[%s379 + $0x168] sm:$0xff]
        %v511 = vld [vmem:[%s379 + $0x170] sm:$0xff]
        %v512 = vld [vmem:[%s379 + $0x178] sm:$0xff]
        %v513 = vld [vmem:[%s379 + $0x180] sm:$0xff]
        %v514 = vld [vmem:[%s379 + $0x188] sm:$0xff]
        %v515 = vld [vmem:[%s379 + $0x190] sm:$0xff]
        %v516 = vld [vmem:[%s379 + $0x198] sm:$0xff]
        %v517 = vld [vmem:[%s379 + $0x1a0] sm:$0xff]
        %v518 = vld [vmem:[%s379 + $0x1a8] sm:$0xff]
        %v519 = vld [vmem:[%s379 + $0x1b0] sm:$0x1]
        %v520 = vld [vmem:[%s379 + $0x1b8] sm:$0x1]
        %v521 = vld [vmem:[%s384] sm:$0xff]
        %v522 = vld [vmem:[%s384 + $0x8] sm:$0xff]
        %v523 = vld [vmem:[%s384 + $0x10] sm:$0xff]
        %v524 = vld [vmem:[%s384 + $0x18] sm:$0xff]
        %v525 = vld [vmem:[%s384 + $0x20] sm:$0xff]
        %v526 = vld [vmem:[%s384 + $0x28] sm:$0xff]
        %v527 = vld [vmem:[%s384 + $0x30] sm:$0xff]
        %v528 = vld [vmem:[%s384 + $0x38] sm:$0xff]
        %v529 = vld [vmem:[%s384 + $0x40] sm:$0xff]
        %v530 = vld [vmem:[%s384 + $0x48] sm:$0xff]
        %v531 = vld [vmem:[%s384 + $0x50] sm:$0xff]
        %v532 = vld [vmem:[%s384 + $0x58] sm:$0xff]
        %v533 = vld [vmem:[%s384 + $0x60] sm:$0x1]
        %v534 = vld [vmem:[%s384 + $0x68] sm:$0x1]
        %v535 = vld [vmem:[%s384 + $0x70] sm:$0xff]
        %v536 = vld [vmem:[%s384 + $0x78] sm:$0xff]
        %v537 = vld [vmem:[%s384 + $0x80] sm:$0xff]
        %v538 = vld [vmem:[%s384 + $0x88] sm:$0xff]
        %v539 = vld [vmem:[%s384 + $0x90] sm:$0xff]
        %v540 = vld [vmem:[%s384 + $0x98] sm:$0xff]
        %v541 = vld [vmem:[%s384 + $0xa0] sm:$0xff]
        %v542 = vld [vmem:[%s384 + $0xa8] sm:$0xff]
        %v543 = vld [vmem:[%s384 + $0xb0] sm:$0xff]
        %v544 = vld [vmem:[%s384 + $0xb8] sm:$0xff]
        %v545 = vld [vmem:[%s384 + $0xc0] sm:$0xff]
        %v546 = vld [vmem:[%s384 + $0xc8] sm:$0xff]
        %v547 = vld [vmem:[%s384 + $0xd0] sm:$0x1]
        %v548 = vld [vmem:[%s384 + $0xd8] sm:$0x1]
        %v549 = vld [vmem:[%s384 + $0xe0] sm:$0xff]
        %v550 = vld [vmem:[%s384 + $0xe8] sm:$0xff]
        %v551 = vld [vmem:[%s384 + $0xf0] sm:$0xff]
        %v552 = vld [vmem:[%s384 + $0xf8] sm:$0xff]
        %v553 = vld [vmem:[%s384 + $0x100] sm:$0xff]
        %v554 = vld [vmem:[%s384 + $0x108] sm:$0xff]
        %v555 = vld [vmem:[%s384 + $0x110] sm:$0xff]
        %v556 = vld [vmem:[%s384 + $0x118] sm:$0xff]
        %v557 = vld [vmem:[%s384 + $0x120] sm:$0xff]
        %v558 = vld [vmem:[%s384 + $0x128] sm:$0xff]
        %v559 = vld [vmem:[%s384 + $0x130] sm:$0xff]
        %v560 = vld [vmem:[%s384 + $0x138] sm:$0xff]
        %v561 = vld [vmem:[%s384 + $0x140] sm:$0x1]
        %v562 = vld [vmem:[%s384 + $0x148] sm:$0x1]
        %v563 = vld [vmem:[%s384 + $0x150] sm:$0xff]
        %v564 = vld [vmem:[%s384 + $0x158] sm:$0xff]
        %v565 = vld [vmem:[%s384 + $0x160] sm:$0xff]
        %v566 = vld [vmem:[%s384 + $0x168] sm:$0xff]
        %v567 = vld [vmem:[%s384 + $0x170] sm:$0xff]
        %v568 = vld [vmem:[%s384 + $0x178] sm:$0xff]
        %v569 = vld [vmem:[%s384 + $0x180] sm:$0xff]
        %v570 = vld [vmem:[%s384 + $0x188] sm:$0xff]
        %v571 = vld [vmem:[%s384 + $0x190] sm:$0xff]
        %v572 = vld [vmem:[%s384 + $0x198] sm:$0xff]
        %v573 = vld [vmem:[%s384 + $0x1a0] sm:$0xff]
        %v574 = vld [vmem:[%s384 + $0x1a8] sm:$0xff]
        %v575 = vld [vmem:[%s384 + $0x1b0] sm:$0x1]
        %v576 = vld [vmem:[%s384 + $0x1b8] sm:$0x1]
        %v578 = vcombine.high %v408, %v408
        %v580 = vmul.f32 %v404, %v408
        %v581 = vmul.f32 %v405, %v578
        %vm582 = vcmask 1043456
        %v583 = vsel %vm582, %v580, 0.0
        %v584 = vrot.slane %v583, 4
        %v585 = vadd.f32 %v583, %v584
        %v586 = vrot.slane %v585, 2
        %v587 = vadd.f32 %v585, %v586
        %v588 = vrot.slane %v587, 1
        %v589 = vadd.f32 %v587, %v588
        %v590 = vsel %vm582, %v581, 0.0
        %v591 = vrot.slane %v590, 4
        %v592 = vadd.f32 %v590, %v591
        %v593 = vrot.slane %v592, 2
        %v594 = vadd.f32 %v592, %v593
        %v595 = vrot.slane %v594, 1
        %v596 = vadd.f32 %v594, %v595
        %v599 = vcombine.low %v404, %v405
        %v601 = vunpack.c.l.s4 1966171168
        %v602 = vunpack.c.0.s8 %v601
        %v603 = vlaneseq
        %v604 = vshrl.u32 %v603, 7
        %v605 = vsub.s32 %v602, %v604
        %v606 = vrot.slane %v599, %v605
        %v607 = vcombine.high %v606, %v606
        %v609 = vunpack.c.l.s4 1966171168
        %v610 = vunpack.c.0.s8 %v609
        %v611 = vlaneseq
        %v612 = vshrl.u32 %v611, 7
        %v613 = vsub.s32 %v610, %v612
        %v614 = vrot.slane %v606, %v613
        %v616 = vunpack.c.l.s4 1966171168
        %v617 = vunpack.c.0.s8 %v616
        %v618 = vlaneseq
        %v619 = vshrl.u32 %v618, 7
        %v620 = vsub.s32 %v617, %v619
        %v621 = vrot.slane %v607, %v620
        %v622 = vcombine.high %v614, %v614
        %v623 = vcombine.high %v621, %v621
        %v624 = vsub.f32 %v465, %v409
        %v625 = vsub.f32 %v466, %v410
        %v626 = vsub.f32 %v467, %v411
        %v627 = vsub.f32 %v468, %v412
        %v628 = vsub.f32 %v469, %v413
        %v629 = vsub.f32 %v470, %v414
        %v630 = vsub.f32 %v471, %v415
        %v631 = vsub.f32 %v472, %v416
        %v632 = vsub.f32 %v473, %v417
        %v633 = vsub.f32 %v474, %v418
        %v634 = vsub.f32 %v475, %v419
        %v635 = vsub.f32 %v476, %v420
        %v636 = vsub.f32 %v477, %v421
        %v637 = vsub.f32 %v478, %v422
        %v638 = vsub.f32 %v479, %v423
        %v639 = vsub.f32 %v480, %v424
        %v640 = vsub.f32 %v481, %v425
        %v641 = vsub.f32 %v482, %v426
        %v642 = vsub.f32 %v483, %v427
        %v643 = vsub.f32 %v484, %v428
        %v644 = vsub.f32 %v485, %v429
        %v645 = vsub.f32 %v486, %v430
        %v646 = vsub.f32 %v487, %v431
        %v647 = vsub.f32 %v488, %v432
        %v648 = vsub.f32 %v489, %v433
        %v649 = vsub.f32 %v490, %v434
        %v650 = vsub.f32 %v491, %v435
        %v651 = vsub.f32 %v492, %v436
        %v652 = vsub.f32 %v493, %v437
        %v653 = vsub.f32 %v494, %v438
        %v654 = vsub.f32 %v495, %v439
        %v655 = vsub.f32 %v496, %v440
        %v656 = vsub.f32 %v497, %v441
        %v657 = vsub.f32 %v498, %v442
        %v658 = vsub.f32 %v499, %v443
        %v659 = vsub.f32 %v500, %v444
        %v660 = vsub.f32 %v501, %v445
        %v661 = vsub.f32 %v502, %v446
        %v662 = vsub.f32 %v503, %v447
        %v663 = vsub.f32 %v504, %v448
        %v664 = vsub.f32 %v505, %v449
        %v665 = vsub.f32 %v506, %v450
        %v666 = vsub.f32 %v507, %v451
        %v667 = vsub.f32 %v508, %v452
        %v668 = vsub.f32 %v509, %v453
        %v669 = vsub.f32 %v510, %v454
        %v670 = vsub.f32 %v511, %v455
        %v671 = vsub.f32 %v512, %v456
        %v672 = vsub.f32 %v513, %v457
        %v673 = vsub.f32 %v514, %v458
        %v674 = vsub.f32 %v515, %v459
        %v675 = vsub.f32 %v516, %v460
        %v676 = vsub.f32 %v517, %v461
        %v677 = vsub.f32 %v518, %v462
        %v678 = vsub.f32 %v519, %v463
        %v679 = vsub.f32 %v520, %v464
        %v680 = vlaneseq
        %v681 = vshrl.u32 %v680, 7
        %v682 = vsub.s32 0, %v681
        %v683 = vrot.slane %v614, %v682
        %v684 = vlaneseq
        %v685 = vshrl.u32 %v684, 7
        %v686 = vsub.s32 1, %v685
        %v687 = vrot.slane %v614, %v686
        %v688 = vlaneseq
        %v689 = vshrl.u32 %v688, 7
        %v690 = vsub.s32 0, %v689
        %v691 = vrot.slane %v621, %v690
        %v692 = vlaneseq
        %v693 = vshrl.u32 %v692, 7
        %v694 = vsub.s32 1, %v693
        %v695 = vrot.slane %v621, %v694
        %v696 = vlaneseq
        %v697 = vshrl.u32 %v696, 7
        %v698 = vsub.s32 0, %v697
        %v699 = vrot.slane %v622, %v698
        %v700 = vlaneseq
        %v701 = vshrl.u32 %v700, 7
        %v702 = vsub.s32 1, %v701
        %v703 = vrot.slane %v622, %v702
        %v704 = vlaneseq
        %v705 = vshrl.u32 %v704, 7
        %v706 = vsub.s32 0, %v705
        %v707 = vrot.slane %v623, %v706
        %v708 = vlaneseq
        %v709 = vshrl.u32 %v708, 7
        %v710 = vsub.s32 1, %v709
        %v711 = vrot.slane %v623, %v710
        %v720 = vmul.f32 %v683, %v624
        %v721 = vmul.f32 %v687, %v625
        %v722 = vmul.f32 %v683, %v626
        %v723 = vmul.f32 %v687, %v627
        %v724 = vmul.f32 %v683, %v628
        %v725 = vmul.f32 %v687, %v629
        %v726 = vmul.f32 %v683, %v630
        %v727 = vmul.f32 %v687, %v631
        %v728 = vmul.f32 %v683, %v632
        %v729 = vmul.f32 %v687, %v633
        %v730 = vmul.f32 %v683, %v634
        %v731 = vmul.f32 %v687, %v635
        %v732 = vmul.f32 %v683, %v636
        %v733 = vmul.f32 %v687, %v637
        %v734 = vmul.f32 %v691, %v638
        %v735 = vmul.f32 %v695, %v639
        %v736 = vmul.f32 %v691, %v640
        %v737 = vmul.f32 %v695, %v641
        %v738 = vmul.f32 %v691, %v642
        %v739 = vmul.f32 %v695, %v643
        %v740 = vmul.f32 %v691, %v644
        %v741 = vmul.f32 %v695, %v645
        %v742 = vmul.f32 %v691, %v646
        %v743 = vmul.f32 %v695, %v647
        %v744 = vmul.f32 %v691, %v648
        %v745 = vmul.f32 %v695, %v649
        %v746 = vmul.f32 %v691, %v650
        %v747 = vmul.f32 %v695, %v651
        %v748 = vmul.f32 %v699, %v652
        %v749 = vmul.f32 %v703, %v653
        %v750 = vmul.f32 %v699, %v654
        %v751 = vmul.f32 %v703, %v655
        %v752 = vmul.f32 %v699, %v656
        %v753 = vmul.f32 %v703, %v657
        %v754 = vmul.f32 %v699, %v658
        %v755 = vmul.f32 %v703, %v659
        %v756 = vmul.f32 %v699, %v660
        %v757 = vmul.f32 %v703, %v661
        %v758 = vmul.f32 %v699, %v662
        %v759 = vmul.f32 %v703, %v663
        %v760 = vmul.f32 %v699, %v664
        %v761 = vmul.f32 %v703, %v665
        %v762 = vmul.f32 %v707, %v666
        %v763 = vmul.f32 %v711, %v667
        %v764 = vmul.f32 %v707, %v668
        %v765 = vmul.f32 %v711, %v669
        %v766 = vmul.f32 %v707, %v670
        %v767 = vmul.f32 %v711, %v671
        %v768 = vmul.f32 %v707, %v672
        %v769 = vmul.f32 %v711, %v673
        %v770 = vmul.f32 %v707, %v674
        %v771 = vmul.f32 %v711, %v675
        %v772 = vmul.f32 %v707, %v676
        %v773 = vmul.f32 %v711, %v677
        %v774 = vmul.f32 %v707, %v678
        %v775 = vmul.f32 %v711, %v679
        %v776 = vadd.f32 %v720, %v734
        %v777 = vadd.f32 %v776, %v748
        %v778 = vadd.f32 %v777, %v762
        %v779 = vadd.f32 %v721, %v735
        %v780 = vadd.f32 %v779, %v749
        %v781 = vadd.f32 %v780, %v763
        %v782 = vadd.f32 %v722, %v736
        %v783 = vadd.f32 %v782, %v750
        %v784 = vadd.f32 %v783, %v764
        %v785 = vadd.f32 %v723, %v737
        %v786 = vadd.f32 %v785, %v751
        %v787 = vadd.f32 %v786, %v765
        %v788 = vadd.f32 %v724, %v738
        %v789 = vadd.f32 %v788, %v752
        %v790 = vadd.f32 %v789, %v766
        %v791 = vadd.f32 %v725, %v739
        %v792 = vadd.f32 %v791, %v753
        %v793 = vadd.f32 %v792, %v767
        %v794 = vadd.f32 %v726, %v740
        %v795 = vadd.f32 %v794, %v754
        %v796 = vadd.f32 %v795, %v768
        %v797 = vadd.f32 %v727, %v741
        %v798 = vadd.f32 %v797, %v755
        %v799 = vadd.f32 %v798, %v769
        %v800 = vadd.f32 %v728, %v742
        %v801 = vadd.f32 %v800, %v756
        %v802 = vadd.f32 %v801, %v770
        %v803 = vadd.f32 %v729, %v743
        %v804 = vadd.f32 %v803, %v757
        %v805 = vadd.f32 %v804, %v771
        %v806 = vadd.f32 %v730, %v744
        %v807 = vadd.f32 %v806, %v758
        %v808 = vadd.f32 %v807, %v772
        %v809 = vadd.f32 %v731, %v745
        %v810 = vadd.f32 %v809, %v759
        %v811 = vadd.f32 %v810, %v773
        %vm812 = vcmask 1040384
        %v813 = vsel %vm812, %v732, 0.0
        %v814 = vsel %vm812, %v746, 0.0
        %v815 = vadd.f32 %v813, %v814
        %v816 = vsel %vm812, %v760, 0.0
        %v817 = vadd.f32 %v815, %v816
        %v818 = vsel %vm812, %v774, 0.0
        %v819 = vadd.f32 %v817, %v818
        %v820 = vsel %vm812, %v733, 0.0
        %v821 = vsel %vm812, %v747, 0.0
        %v822 = vadd.f32 %v820, %v821
        %v823 = vsel %vm812, %v761, 0.0
        %v824 = vadd.f32 %v822, %v823
        %v825 = vsel %vm812, %v775, 0.0
        %v826 = vadd.f32 %v824, %v825
        %v827 = vadd.f32 %v778, %v589
        %v828 = vadd.f32 %v781, %v596
        %v829 = vadd.f32 %v784, %v589
        %v830 = vadd.f32 %v787, %v596
        %v831 = vadd.f32 %v790, %v589
        %v832 = vadd.f32 %v793, %v596
        %v833 = vadd.f32 %v796, %v589
        %v834 = vadd.f32 %v799, %v596
        %v835 = vadd.f32 %v802, %v589
        %v836 = vadd.f32 %v805, %v596
        %v837 = vadd.f32 %v808, %v589
        %v838 = vadd.f32 %v811, %v596
        %v839 = vadd.f32 %v819, %v589
        %v840 = vadd.f32 %v826, %v596
        %v841 = vmax.f32 %v827, %v831
        %v842 = vmax.f32 %v829, %v833
        %v843 = vmax.f32 %v841, %v835
        %v844 = vmax.f32 %v842, %v837
        %v845 = vsel %vm812, %v839, -inf
        %v846 = vmax.f32 %v843, %v845
        %v847 = vmax.f32 %v846, %v844
        %v848 = vrot.slane %v847, 4
        %v849 = vmax.f32 %v847, %v848
        %v850 = vrot.slane %v849, 2
        %v851 = vmax.f32 %v849, %v850
        %v852 = vrot.slane %v851, 1
        %v853 = vmax.f32 %v851, %v852
        %v854 = vmax.f32 %v828, %v832
        %v855 = vmax.f32 %v830, %v834
        %v856 = vmax.f32 %v854, %v836
        %v857 = vmax.f32 %v855, %v838
        %v858 = vsel %vm812, %v840, -inf
        %v859 = vmax.f32 %v856, %v858
        %v860 = vmax.f32 %v859, %v857
        %v861 = vrot.slane %v860, 4
        %v862 = vmax.f32 %v860, %v861
        %v863 = vrot.slane %v862, 2
        %v864 = vmax.f32 %v862, %v863
        %v865 = vrot.slane %v864, 1
        %v866 = vmax.f32 %v864, %v865
        %v867 = vsub.f32 %v827, %v853
        %v868 = vsub.f32 %v828, %v866
        %v869 = vsub.f32 %v829, %v853
        %v870 = vsub.f32 %v830, %v866
        %v871 = vsub.f32 %v831, %v853
        %v872 = vsub.f32 %v832, %v866
        %v873 = vsub.f32 %v833, %v853
        %v874 = vsub.f32 %v834, %v866
        %v875 = vsub.f32 %v835, %v853
        %v876 = vsub.f32 %v836, %v866
        %v877 = vsub.f32 %v837, %v853
        %v878 = vsub.f32 %v838, %v866
        %v879 = vsub.f32 %v839, %v853
        %v880 = vsub.f32 %v840, %v866
        %v881 = vmul.f32 %v867, 1.442695
        %v882 = vpow.pop %v881
        %v883 = vmul.f32 %v868, 1.442695
        %v884 = vpow.pop %v883
        %v885 = vmul.f32 %v869, 1.442695
        %v886 = vpow.pop %v885
        %v887 = vmul.f32 %v870, 1.442695
        %v888 = vpow.pop %v887
        %v889 = vmul.f32 %v871, 1.442695
        %v890 = vpow.pop %v889
        %v891 = vmul.f32 %v872, 1.442695
        %v892 = vpow.pop %v891
        %v893 = vmul.f32 %v873, 1.442695
        %v894 = vpow.pop %v893
        %v895 = vmul.f32 %v874, 1.442695
        %v896 = vpow.pop %v895
        %v897 = vmul.f32 %v875, 1.442695
        %v898 = vpow.pop %v897
        %v899 = vmul.f32 %v876, 1.442695
        %v900 = vpow.pop %v899
        %v901 = vmul.f32 %v877, 1.442695
        %v902 = vpow.pop %v901
        %v903 = vmul.f32 %v878, 1.442695
        %v904 = vpow.pop %v903
        %v905 = vmul.f32 %v879, 1.442695
        %v906 = vpow.pop %v905
        %v907 = vmul.f32 %v880, 1.442695
        %v908 = vpow.pop %v907
        %v909 = vadd.f32 %v882, %v886
        %v910 = vadd.f32 %v909, %v890
        %v911 = vadd.f32 %v910, %v894
        %v912 = vadd.f32 %v911, %v898
        %v913 = vadd.f32 %v912, %v902
        %v914 = vsel %vm812, %v906, 0.0
        %v915 = vadd.f32 %v913, %v914
        %v916 = vrot.slane %v915, 4
        %v917 = vadd.f32 %v915, %v916
        %v918 = vrot.slane %v917, 2
        %v919 = vadd.f32 %v917, %v918
        %v920 = vrot.slane %v919, 1
        %v921 = vadd.f32 %v919, %v920
        %v922 = vadd.f32 %v884, %v888
        %v923 = vadd.f32 %v922, %v892
        %v924 = vadd.f32 %v923, %v896
        %v925 = vadd.f32 %v924, %v900
        %v926 = vadd.f32 %v925, %v904
        %v927 = vsel %vm812, %v908, 0.0
        %v928 = vadd.f32 %v926, %v927
        %v929 = vrot.slane %v928, 4
        %v930 = vadd.f32 %v928, %v929
        %v931 = vrot.slane %v930, 2
        %v932 = vadd.f32 %v930, %v931
        %v933 = vrot.slane %v932, 1
        %v934 = vadd.f32 %v932, %v933
        %v935 = vrcp.pop %v921
        %v936 = vmul.f32 %v882, %v935
        %v937 = vrcp.pop %v934
        %v938 = vmul.f32 %v884, %v937
        %v939 = vmul.f32 %v886, %v935
        %v940 = vmul.f32 %v888, %v937
        %v941 = vmul.f32 %v890, %v935
        %v942 = vmul.f32 %v892, %v937
        %v943 = vmul.f32 %v894, %v935
        %v944 = vmul.f32 %v896, %v937
        %v945 = vmul.f32 %v898, %v935
        %v946 = vmul.f32 %v900, %v937
        %v947 = vmul.f32 %v902, %v935
        %v948 = vmul.f32 %v904, %v937
        %v949 = vmul.f32 %v906, %v935
        %v950 = vmul.f32 %v908, %v937
        %v951 = vmul.f32 %v936, %v521
        %v952 = vmul.f32 %v938, %v522
        %v953 = vmul.f32 %v939, %v523
        %v954 = vmul.f32 %v940, %v524
        %v955 = vmul.f32 %v941, %v525
        %v956 = vmul.f32 %v942, %v526
        %v957 = vmul.f32 %v943, %v527
        %v958 = vmul.f32 %v944, %v528
        %v959 = vmul.f32 %v945, %v529
        %v960 = vmul.f32 %v946, %v530
        %v961 = vmul.f32 %v947, %v531
        %v962 = vmul.f32 %v948, %v532
        %v963 = vmul.f32 %v949, %v533
        %v964 = vmul.f32 %v950, %v534
        %v965 = vmul.f32 %v936, %v535
        %v966 = vmul.f32 %v938, %v536
        %v967 = vmul.f32 %v939, %v537
        %v968 = vmul.f32 %v940, %v538
        %v969 = vmul.f32 %v941, %v539
        %v970 = vmul.f32 %v942, %v540
        %v971 = vmul.f32 %v943, %v541
        %v972 = vmul.f32 %v944, %v542
        %v973 = vmul.f32 %v945, %v543
        %v974 = vmul.f32 %v946, %v544
        %v975 = vmul.f32 %v947, %v545
        %v976 = vmul.f32 %v948, %v546
        %v977 = vmul.f32 %v949, %v547
        %v978 = vmul.f32 %v950, %v548
        %v979 = vmul.f32 %v936, %v549
        %v980 = vmul.f32 %v938, %v550
        %v981 = vmul.f32 %v939, %v551
        %v982 = vmul.f32 %v940, %v552
        %v983 = vmul.f32 %v941, %v553
        %v984 = vmul.f32 %v942, %v554
        %v985 = vmul.f32 %v943, %v555
        %v986 = vmul.f32 %v944, %v556
        %v987 = vmul.f32 %v945, %v557
        %v988 = vmul.f32 %v946, %v558
        %v989 = vmul.f32 %v947, %v559
        %v990 = vmul.f32 %v948, %v560
        %v991 = vmul.f32 %v949, %v561
        %v992 = vmul.f32 %v950, %v562
        %v993 = vmul.f32 %v936, %v563
        %v994 = vmul.f32 %v938, %v564
        %v995 = vmul.f32 %v939, %v565
        %v996 = vmul.f32 %v940, %v566
        %v997 = vmul.f32 %v941, %v567
        %v998 = vmul.f32 %v942, %v568
        %v999 = vmul.f32 %v943, %v569
        %v1000 = vmul.f32 %v944, %v570
        %v1001 = vmul.f32 %v945, %v571
        %v1002 = vmul.f32 %v946, %v572
        %v1003 = vmul.f32 %v947, %v573
        %v1004 = vmul.f32 %v948, %v574
        %v1005 = vmul.f32 %v949, %v575
        %v1006 = vmul.f32 %v950, %v576
        %v1007 = vadd.f32 %v951, %v953
        %v1008 = vadd.f32 %v1007, %v955
        %v1009 = vadd.f32 %v1008, %v957
        %v1010 = vadd.f32 %v1009, %v959
        %v1011 = vadd.f32 %v1010, %v961
        %v1012 = vsel %vm812, %v963, 0.0
        %v1013 = vadd.f32 %v1011, %v1012
        %v1014 = vrot.slane %v1013, 4
        %v1015 = vadd.f32 %v1013, %v1014
        %v1016 = vrot.slane %v1015, 2
        %v1017 = vadd.f32 %v1015, %v1016
        %v1018 = vrot.slane %v1017, 1
        %v1019 = vadd.f32 %v1017, %v1018
        %v1020 = vadd.f32 %v952, %v954
        %v1021 = vadd.f32 %v1020, %v956
        %v1022 = vadd.f32 %v1021, %v958
        %v1023 = vadd.f32 %v1022, %v960
        %v1024 = vadd.f32 %v1023, %v962
        %v1025 = vsel %vm812, %v964, 0.0
        %v1026 = vadd.f32 %v1024, %v1025
        %v1027 = vrot.slane %v1026, 4
        %v1028 = vadd.f32 %v1026, %v1027
        %v1029 = vrot.slane %v1028, 2
        %v1030 = vadd.f32 %v1028, %v1029
        %v1031 = vrot.slane %v1030, 1
        %v1032 = vadd.f32 %v1030, %v1031
        %v1033 = vadd.f32 %v965, %v967
        %v1034 = vadd.f32 %v1033, %v969
        %v1035 = vadd.f32 %v1034, %v971
        %v1036 = vadd.f32 %v1035, %v973
        %v1037 = vadd.f32 %v1036, %v975
        %v1038 = vsel %vm812, %v977, 0.0
        %v1039 = vadd.f32 %v1037, %v1038
        %v1040 = vrot.slane %v1039, 4
        %v1041 = vadd.f32 %v1039, %v1040
        %v1042 = vrot.slane %v1041, 2
        %v1043 = vadd.f32 %v1041, %v1042
        %v1044 = vrot.slane %v1043, 1
        %v1045 = vadd.f32 %v1043, %v1044
        %v1046 = vadd.f32 %v966, %v968
        %v1047 = vadd.f32 %v1046, %v970
        %v1048 = vadd.f32 %v1047, %v972
        %v1049 = vadd.f32 %v1048, %v974
        %v1050 = vadd.f32 %v1049, %v976
        %v1051 = vsel %vm812, %v978, 0.0
        %v1052 = vadd.f32 %v1050, %v1051
        %v1053 = vrot.slane %v1052, 4
        %v1054 = vadd.f32 %v1052, %v1053
        %v1055 = vrot.slane %v1054, 2
        %v1056 = vadd.f32 %v1054, %v1055
        %v1057 = vrot.slane %v1056, 1
        %v1058 = vadd.f32 %v1056, %v1057
        %v1059 = vadd.f32 %v979, %v981
        %v1060 = vadd.f32 %v1059, %v983
        %v1061 = vadd.f32 %v1060, %v985
        %v1062 = vadd.f32 %v1061, %v987
        %v1063 = vadd.f32 %v1062, %v989
        %v1064 = vsel %vm812, %v991, 0.0
        %v1065 = vadd.f32 %v1063, %v1064
        %v1066 = vrot.slane %v1065, 4
        %v1067 = vadd.f32 %v1065, %v1066
        %v1068 = vrot.slane %v1067, 2
        %v1069 = vadd.f32 %v1067, %v1068
        %v1070 = vrot.slane %v1069, 1
        %v1071 = vadd.f32 %v1069, %v1070
        %v1072 = vadd.f32 %v980, %v982
        %v1073 = vadd.f32 %v1072, %v984
        %v1074 = vadd.f32 %v1073, %v986
        %v1075 = vadd.f32 %v1074, %v988
        %v1076 = vadd.f32 %v1075, %v990
        %v1077 = vsel %vm812, %v992, 0.0
        %v1078 = vadd.f32 %v1076, %v1077
        %v1079 = vrot.slane %v1078, 4
        %v1080 = vadd.f32 %v1078, %v1079
        %v1081 = vrot.slane %v1080, 2
        %v1082 = vadd.f32 %v1080, %v1081
        %v1083 = vrot.slane %v1082, 1
        %v1084 = vadd.f32 %v1082, %v1083
        %v1085 = vadd.f32 %v993, %v995
        %v1086 = vadd.f32 %v1085, %v997
        %v1087 = vadd.f32 %v1086, %v999
        %v1088 = vadd.f32 %v1087, %v1001
        %v1089 = vadd.f32 %v1088, %v1003
        %v1090 = vsel %vm812, %v1005, 0.0
        %v1091 = vadd.f32 %v1089, %v1090
        %v1092 = vrot.slane %v1091, 4
        %v1093 = vadd.f32 %v1091, %v1092
        %v1094 = vrot.slane %v1093, 2
        %v1095 = vadd.f32 %v1093, %v1094
        %v1096 = vrot.slane %v1095, 1
        %v1097 = vadd.f32 %v1095, %v1096
        %v1098 = vadd.f32 %v994, %v996
        %v1099 = vadd.f32 %v1098, %v998
        %v1100 = vadd.f32 %v1099, %v1000
        %v1101 = vadd.f32 %v1100, %v1002
        %v1102 = vadd.f32 %v1101, %v1004
        %v1103 = vsel %vm812, %v1006, 0.0
        %v1104 = vadd.f32 %v1102, %v1103
        %v1105 = vrot.slane %v1104, 4
        %v1106 = vadd.f32 %v1104, %v1105
        %v1107 = vrot.slane %v1106, 2
        %v1108 = vadd.f32 %v1106, %v1107
        %v1109 = vrot.slane %v1108, 1
        %v1110 = vadd.f32 %v1108, %v1109
        %s1111 = scalar_lea.vmem %s379, 448
        %v1112 = vld [vmem:[%s1111] sm:$0xff]
        %v1113 = vld [vmem:[%s1111 + $0x8] sm:$0xff]
        %v1114 = vld [vmem:[%s1111 + $0x10] sm:$0xff]
        %v1115 = vld [vmem:[%s1111 + $0x18] sm:$0xff]
        %v1116 = vld [vmem:[%s1111 + $0x20] sm:$0xff]
        %v1117 = vld [vmem:[%s1111 + $0x28] sm:$0xff]
        %v1118 = vld [vmem:[%s1111 + $0x30] sm:$0xff]
        %v1119 = vld [vmem:[%s1111 + $0x38] sm:$0xff]
        %v1120 = vld [vmem:[%s1111 + $0x40] sm:$0xff]
        %v1121 = vld [vmem:[%s1111 + $0x48] sm:$0xff]
        %v1122 = vld [vmem:[%s1111 + $0x50] sm:$0xff]
        %v1123 = vld [vmem:[%s1111 + $0x58] sm:$0xff]
        %v1124 = vld [vmem:[%s1111 + $0x60] sm:$0x1]
        %v1125 = vld [vmem:[%s1111 + $0x68] sm:$0x1]
        %v1126 = vld [vmem:[%s1111 + $0x70] sm:$0xff]
        %v1127 = vld [vmem:[%s1111 + $0x78] sm:$0xff]
        %v1128 = vld [vmem:[%s1111 + $0x80] sm:$0xff]
        %v1129 = vld [vmem:[%s1111 + $0x88] sm:$0xff]
        %v1130 = vld [vmem:[%s1111 + $0x90] sm:$0xff]
        %v1131 = vld [vmem:[%s1111 + $0x98] sm:$0xff]
        %v1132 = vld [vmem:[%s1111 + $0xa0] sm:$0xff]
        %v1133 = vld [vmem:[%s1111 + $0xa8] sm:$0xff]
        %v1134 = vld [vmem:[%s1111 + $0xb0] sm:$0xff]
        %v1135 = vld [vmem:[%s1111 + $0xb8] sm:$0xff]
        %v1136 = vld [vmem:[%s1111 + $0xc0] sm:$0xff]
        %v1137 = vld [vmem:[%s1111 + $0xc8] sm:$0xff]
        %v1138 = vld [vmem:[%s1111 + $0xd0] sm:$0x1]
        %v1139 = vld [vmem:[%s1111 + $0xd8] sm:$0x1]
        %v1140 = vld [vmem:[%s1111 + $0xe0] sm:$0xff]
        %v1141 = vld [vmem:[%s1111 + $0xe8] sm:$0xff]
        %v1142 = vld [vmem:[%s1111 + $0xf0] sm:$0xff]
        %v1143 = vld [vmem:[%s1111 + $0xf8] sm:$0xff]
        %v1144 = vld [vmem:[%s1111 + $0x100] sm:$0xff]
        %v1145 = vld [vmem:[%s1111 + $0x108] sm:$0xff]
        %v1146 = vld [vmem:[%s1111 + $0x110] sm:$0xff]
        %v1147 = vld [vmem:[%s1111 + $0x118] sm:$0xff]
        %v1148 = vld [vmem:[%s1111 + $0x120] sm:$0xff]
        %v1149 = vld [vmem:[%s1111 + $0x128] sm:$0xff]
        %v1150 = vld [vmem:[%s1111 + $0x130] sm:$0xff]
        %v1151 = vld [vmem:[%s1111 + $0x138] sm:$0xff]
        %v1152 = vld [vmem:[%s1111 + $0x140] sm:$0x1]
        %v1153 = vld [vmem:[%s1111 + $0x148] sm:$0x1]
        %v1154 = vld [vmem:[%s1111 + $0x150] sm:$0xff]
        %v1155 = vld [vmem:[%s1111 + $0x158] sm:$0xff]
        %v1156 = vld [vmem:[%s1111 + $0x160] sm:$0xff]
        %v1157 = vld [vmem:[%s1111 + $0x168] sm:$0xff]
        %v1158 = vld [vmem:[%s1111 + $0x170] sm:$0xff]
        %v1159 = vld [vmem:[%s1111 + $0x178] sm:$0xff]
        %v1160 = vld [vmem:[%s1111 + $0x180] sm:$0xff]
        %v1161 = vld [vmem:[%s1111 + $0x188] sm:$0xff]
        %v1162 = vld [vmem:[%s1111 + $0x190] sm:$0xff]
        %v1163 = vld [vmem:[%s1111 + $0x198] sm:$0xff]
        %v1164 = vld [vmem:[%s1111 + $0x1a0] sm:$0xff]
        %v1165 = vld [vmem:[%s1111 + $0x1a8] sm:$0xff]
        %v1166 = vld [vmem:[%s1111 + $0x1b0] sm:$0x1]
        %v1167 = vld [vmem:[%s1111 + $0x1b8] sm:$0x1]
        %s1168 = scalar_lea.vmem %s384, 448
        %v1169 = vld [vmem:[%s1168] sm:$0xff]
        %v1170 = vld [vmem:[%s1168 + $0x8] sm:$0xff]
        %v1171 = vld [vmem:[%s1168 + $0x10] sm:$0xff]
        %v1172 = vld [vmem:[%s1168 + $0x18] sm:$0xff]
        %v1173 = vld [vmem:[%s1168 + $0x20] sm:$0xff]
        %v1174 = vld [vmem:[%s1168 + $0x28] sm:$0xff]
        %v1175 = vld [vmem:[%s1168 + $0x30] sm:$0xff]
        %v1176 = vld [vmem:[%s1168 + $0x38] sm:$0xff]
        %v1177 = vld [vmem:[%s1168 + $0x40] sm:$0xff]
        %v1178 = vld [vmem:[%s1168 + $0x48] sm:$0xff]
        %v1179 = vld [vmem:[%s1168 + $0x50] sm:$0xff]
        %v1180 = vld [vmem:[%s1168 + $0x58] sm:$0xff]
        %v1181 = vld [vmem:[%s1168 + $0x60] sm:$0x1]
        %v1182 = vld [vmem:[%s1168 + $0x68] sm:$0x1]
        %v1183 = vld [vmem:[%s1168 + $0x70] sm:$0xff]
        %v1184 = vld [vmem:[%s1168 + $0x78] sm:$0xff]
        %v1185 = vld [vmem:[%s1168 + $0x80] sm:$0xff]
        %v1186 = vld [vmem:[%s1168 + $0x88] sm:$0xff]
        %v1187 = vld [vmem:[%s1168 + $0x90] sm:$0xff]
        %v1188 = vld [vmem:[%s1168 + $0x98] sm:$0xff]
        %v1189 = vld [vmem:[%s1168 + $0xa0] sm:$0xff]
        %v1190 = vld [vmem:[%s1168 + $0xa8] sm:$0xff]
        %v1191 = vld [vmem:[%s1168 + $0xb0] sm:$0xff]
        %v1192 = vld [vmem:[%s1168 + $0xb8] sm:$0xff]
        %v1193 = vld [vmem:[%s1168 + $0xc0] sm:$0xff]
        %v1194 = vld [vmem:[%s1168 + $0xc8] sm:$0xff]
        %v1195 = vld [vmem:[%s1168 + $0xd0] sm:$0x1]
        %v1196 = vld [vmem:[%s1168 + $0xd8] sm:$0x1]
        %v1197 = vld [vmem:[%s1168 + $0xe0] sm:$0xff]
        %v1198 = vld [vmem:[%s1168 + $0xe8] sm:$0xff]
        %v1199 = vld [vmem:[%s1168 + $0xf0] sm:$0xff]
        %v1200 = vld [vmem:[%s1168 + $0xf8] sm:$0xff]
        %v1201 = vld [vmem:[%s1168 + $0x100] sm:$0xff]
        %v1202 = vld [vmem:[%s1168 + $0x108] sm:$0xff]
        %v1203 = vld [vmem:[%s1168 + $0x110] sm:$0xff]
        %v1204 = vld [vmem:[%s1168 + $0x118] sm:$0xff]
        %v1205 = vld [vmem:[%s1168 + $0x120] sm:$0xff]
        %v1206 = vld [vmem:[%s1168 + $0x128] sm:$0xff]
        %v1207 = vld [vmem:[%s1168 + $0x130] sm:$0xff]
        %v1208 = vld [vmem:[%s1168 + $0x138] sm:$0xff]
        %v1209 = vld [vmem:[%s1168 + $0x140] sm:$0x1]
        %v1210 = vld [vmem:[%s1168 + $0x148] sm:$0x1]
        %v1211 = vld [vmem:[%s1168 + $0x150] sm:$0xff]
        %v1212 = vld [vmem:[%s1168 + $0x158] sm:$0xff]
        %v1213 = vld [vmem:[%s1168 + $0x160] sm:$0xff]
        %v1214 = vld [vmem:[%s1168 + $0x168] sm:$0xff]
        %v1215 = vld [vmem:[%s1168 + $0x170] sm:$0xff]
        %v1216 = vld [vmem:[%s1168 + $0x178] sm:$0xff]
        %v1217 = vld [vmem:[%s1168 + $0x180] sm:$0xff]
        %v1218 = vld [vmem:[%s1168 + $0x188] sm:$0xff]
        %v1219 = vld [vmem:[%s1168 + $0x190] sm:$0xff]
        %v1220 = vld [vmem:[%s1168 + $0x198] sm:$0xff]
        %v1221 = vld [vmem:[%s1168 + $0x1a0] sm:$0xff]
        %v1222 = vld [vmem:[%s1168 + $0x1a8] sm:$0xff]
        %v1223 = vld [vmem:[%s1168 + $0x1b0] sm:$0x1]
        %v1224 = vld [vmem:[%s1168 + $0x1b8] sm:$0x1]
        %v1225 = vcombine.low %v408, %v408
        %v1227 = vmul.f32 %v404, %v1225
        %v1228 = vmul.f32 %v405, %v408
        %v1231 = vrot.slane %v1227, 4
        %v1232 = vrot.slane %v1228, 4
        %v1235 = vsel %vm582, %v1231, 0.0
        %v1236 = vrot.slane %v1235, 4
        %v1237 = vadd.f32 %v1235, %v1236
        %v1238 = vrot.slane %v1237, 2
        %v1239 = vadd.f32 %v1237, %v1238
        %v1240 = vrot.slane %v1239, 1
        %v1241 = vadd.f32 %v1239, %v1240
        %v1242 = vsel %vm582, %v1232, 0.0
        %v1243 = vrot.slane %v1242, 4
        %v1244 = vadd.f32 %v1242, %v1243
        %v1245 = vrot.slane %v1244, 2
        %v1246 = vadd.f32 %v1244, %v1245
        %v1247 = vrot.slane %v1246, 1
        %v1248 = vadd.f32 %v1246, %v1247
        %v1249 = vcombine.high %v404, %v405
        %v1251 = vunpack.c.l.s4 1966171168
        %v1252 = vunpack.c.0.s8 %v1251
        %v1253 = vlaneseq
        %v1254 = vshrl.u32 %v1253, 7
        %v1255 = vsub.s32 %v1252, %v1254
        %v1256 = vrot.slane %v1249, %v1255
        %v1257 = vcombine.high %v1256, %v1256
        %v1259 = vunpack.c.l.s4 1966171168
        %v1260 = vunpack.c.0.s8 %v1259
        %v1261 = vlaneseq
        %v1262 = vshrl.u32 %v1261, 7
        %v1263 = vsub.s32 %v1260, %v1262
        %v1264 = vrot.slane %v1256, %v1263
        %v1266 = vunpack.c.l.s4 1966171168
        %v1267 = vunpack.c.0.s8 %v1266
        %v1268 = vlaneseq
        %v1269 = vshrl.u32 %v1268, 7
        %v1270 = vsub.s32 %v1267, %v1269
        %v1271 = vrot.slane %v1257, %v1270
        %v1272 = vcombine.high %v1264, %v1264
        %v1273 = vcombine.high %v1271, %v1271
        %v1274 = vsub.f32 %v1112, %v409
        %v1275 = vsub.f32 %v1113, %v410
        %v1276 = vsub.f32 %v1114, %v411
        %v1277 = vsub.f32 %v1115, %v412
        %v1278 = vsub.f32 %v1116, %v413
        %v1279 = vsub.f32 %v1117, %v414
        %v1280 = vsub.f32 %v1118, %v415
        %v1281 = vsub.f32 %v1119, %v416
        %v1282 = vsub.f32 %v1120, %v417
        %v1283 = vsub.f32 %v1121, %v418
        %v1284 = vsub.f32 %v1122, %v419
        %v1285 = vsub.f32 %v1123, %v420
        %v1286 = vsub.f32 %v1124, %v421
        %v1287 = vsub.f32 %v1125, %v422
        %v1288 = vsub.f32 %v1126, %v423
        %v1289 = vsub.f32 %v1127, %v424
        %v1290 = vsub.f32 %v1128, %v425
        %v1291 = vsub.f32 %v1129, %v426
        %v1292 = vsub.f32 %v1130, %v427
        %v1293 = vsub.f32 %v1131, %v428
        %v1294 = vsub.f32 %v1132, %v429
        %v1295 = vsub.f32 %v1133, %v430
        %v1296 = vsub.f32 %v1134, %v431
        %v1297 = vsub.f32 %v1135, %v432
        %v1298 = vsub.f32 %v1136, %v433
        %v1299 = vsub.f32 %v1137, %v434
        %v1300 = vsub.f32 %v1138, %v435
        %v1301 = vsub.f32 %v1139, %v436
        %v1302 = vsub.f32 %v1140, %v437
        %v1303 = vsub.f32 %v1141, %v438
        %v1304 = vsub.f32 %v1142, %v439
        %v1305 = vsub.f32 %v1143, %v440
        %v1306 = vsub.f32 %v1144, %v441
        %v1307 = vsub.f32 %v1145, %v442
        %v1308 = vsub.f32 %v1146, %v443
        %v1309 = vsub.f32 %v1147, %v444
        %v1310 = vsub.f32 %v1148, %v445
        %v1311 = vsub.f32 %v1149, %v446
        %v1312 = vsub.f32 %v1150, %v447
        %v1313 = vsub.f32 %v1151, %v448
        %v1314 = vsub.f32 %v1152, %v449
        %v1315 = vsub.f32 %v1153, %v450
        %v1316 = vsub.f32 %v1154, %v451
        %v1317 = vsub.f32 %v1155, %v452
        %v1318 = vsub.f32 %v1156, %v453
        %v1319 = vsub.f32 %v1157, %v454
        %v1320 = vsub.f32 %v1158, %v455
        %v1321 = vsub.f32 %v1159, %v456
        %v1322 = vsub.f32 %v1160, %v457
        %v1323 = vsub.f32 %v1161, %v458
        %v1324 = vsub.f32 %v1162, %v459
        %v1325 = vsub.f32 %v1163, %v460
        %v1326 = vsub.f32 %v1164, %v461
        %v1327 = vsub.f32 %v1165, %v462
        %v1328 = vsub.f32 %v1166, %v463
        %v1329 = vsub.f32 %v1167, %v464
        %v1330 = vlaneseq
        %v1331 = vshrl.u32 %v1330, 7
        %v1332 = vsub.s32 0, %v1331
        %v1333 = vrot.slane %v1264, %v1332
        %v1334 = vlaneseq
        %v1335 = vshrl.u32 %v1334, 7
        %v1336 = vsub.s32 1, %v1335
        %v1337 = vrot.slane %v1264, %v1336
        %v1338 = vlaneseq
        %v1339 = vshrl.u32 %v1338, 7
        %v1340 = vsub.s32 0, %v1339
        %v1341 = vrot.slane %v1271, %v1340
        %v1342 = vlaneseq
        %v1343 = vshrl.u32 %v1342, 7
        %v1344 = vsub.s32 1, %v1343
        %v1345 = vrot.slane %v1271, %v1344
        %v1346 = vlaneseq
        %v1347 = vshrl.u32 %v1346, 7
        %v1348 = vsub.s32 0, %v1347
        %v1349 = vrot.slane %v1272, %v1348
        %v1350 = vlaneseq
        %v1351 = vshrl.u32 %v1350, 7
        %v1352 = vsub.s32 1, %v1351
        %v1353 = vrot.slane %v1272, %v1352
        %v1354 = vlaneseq
        %v1355 = vshrl.u32 %v1354, 7
        %v1356 = vsub.s32 0, %v1355
        %v1357 = vrot.slane %v1273, %v1356
        %v1358 = vlaneseq
        %v1359 = vshrl.u32 %v1358, 7
        %v1360 = vsub.s32 1, %v1359
        %v1361 = vrot.slane %v1273, %v1360
        %v1370 = vmul.f32 %v1333, %v1274
        %v1371 = vmul.f32 %v1337, %v1275
        %v1372 = vmul.f32 %v1333, %v1276
        %v1373 = vmul.f32 %v1337, %v1277
        %v1374 = vmul.f32 %v1333, %v1278
        %v1375 = vmul.f32 %v1337, %v1279
        %v1376 = vmul.f32 %v1333, %v1280
        %v1377 = vmul.f32 %v1337, %v1281
        %v1378 = vmul.f32 %v1333, %v1282
        %v1379 = vmul.f32 %v1337, %v1283
        %v1380 = vmul.f32 %v1333, %v1284
        %v1381 = vmul.f32 %v1337, %v1285
        %v1382 = vmul.f32 %v1333, %v1286
        %v1383 = vmul.f32 %v1337, %v1287
        %v1384 = vmul.f32 %v1341, %v1288
        %v1385 = vmul.f32 %v1345, %v1289
        %v1386 = vmul.f32 %v1341, %v1290
        %v1387 = vmul.f32 %v1345, %v1291
        %v1388 = vmul.f32 %v1341, %v1292
        %v1389 = vmul.f32 %v1345, %v1293
        %v1390 = vmul.f32 %v1341, %v1294
        %v1391 = vmul.f32 %v1345, %v1295
        %v1392 = vmul.f32 %v1341, %v1296
        %v1393 = vmul.f32 %v1345, %v1297
        %v1394 = vmul.f32 %v1341, %v1298
        %v1395 = vmul.f32 %v1345, %v1299
        %v1396 = vmul.f32 %v1341, %v1300
        %v1397 = vmul.f32 %v1345, %v1301
        %v1398 = vmul.f32 %v1349, %v1302
        %v1399 = vmul.f32 %v1353, %v1303
        %v1400 = vmul.f32 %v1349, %v1304
        %v1401 = vmul.f32 %v1353, %v1305
        %v1402 = vmul.f32 %v1349, %v1306
        %v1403 = vmul.f32 %v1353, %v1307
        %v1404 = vmul.f32 %v1349, %v1308
        %v1405 = vmul.f32 %v1353, %v1309
        %v1406 = vmul.f32 %v1349, %v1310
        %v1407 = vmul.f32 %v1353, %v1311
        %v1408 = vmul.f32 %v1349, %v1312
        %v1409 = vmul.f32 %v1353, %v1313
        %v1410 = vmul.f32 %v1349, %v1314
        %v1411 = vmul.f32 %v1353, %v1315
        %v1412 = vmul.f32 %v1357, %v1316
        %v1413 = vmul.f32 %v1361, %v1317
        %v1414 = vmul.f32 %v1357, %v1318
        %v1415 = vmul.f32 %v1361, %v1319
        %v1416 = vmul.f32 %v1357, %v1320
        %v1417 = vmul.f32 %v1361, %v1321
        %v1418 = vmul.f32 %v1357, %v1322
        %v1419 = vmul.f32 %v1361, %v1323
        %v1420 = vmul.f32 %v1357, %v1324
        %v1421 = vmul.f32 %v1361, %v1325
        %v1422 = vmul.f32 %v1357, %v1326
        %v1423 = vmul.f32 %v1361, %v1327
        %v1424 = vmul.f32 %v1357, %v1328
        %v1425 = vmul.f32 %v1361, %v1329
        %v1426 = vadd.f32 %v1370, %v1384
        %v1427 = vadd.f32 %v1426, %v1398
        %v1428 = vadd.f32 %v1427, %v1412
        %v1429 = vadd.f32 %v1371, %v1385
        %v1430 = vadd.f32 %v1429, %v1399
        %v1431 = vadd.f32 %v1430, %v1413
        %v1432 = vadd.f32 %v1372, %v1386
        %v1433 = vadd.f32 %v1432, %v1400
        %v1434 = vadd.f32 %v1433, %v1414
        %v1435 = vadd.f32 %v1373, %v1387
        %v1436 = vadd.f32 %v1435, %v1401
        %v1437 = vadd.f32 %v1436, %v1415
        %v1438 = vadd.f32 %v1374, %v1388
        %v1439 = vadd.f32 %v1438, %v1402
        %v1440 = vadd.f32 %v1439, %v1416
        %v1441 = vadd.f32 %v1375, %v1389
        %v1442 = vadd.f32 %v1441, %v1403
        %v1443 = vadd.f32 %v1442, %v1417
        %v1444 = vadd.f32 %v1376, %v1390
        %v1445 = vadd.f32 %v1444, %v1404
        %v1446 = vadd.f32 %v1445, %v1418
        %v1447 = vadd.f32 %v1377, %v1391
        %v1448 = vadd.f32 %v1447, %v1405
        %v1449 = vadd.f32 %v1448, %v1419
        %v1450 = vadd.f32 %v1378, %v1392
        %v1451 = vadd.f32 %v1450, %v1406
        %v1452 = vadd.f32 %v1451, %v1420
        %v1453 = vadd.f32 %v1379, %v1393
        %v1454 = vadd.f32 %v1453, %v1407
        %v1455 = vadd.f32 %v1454, %v1421
        %v1456 = vadd.f32 %v1380, %v1394
        %v1457 = vadd.f32 %v1456, %v1408
        %v1458 = vadd.f32 %v1457, %v1422
        %v1459 = vadd.f32 %v1381, %v1395
        %v1460 = vadd.f32 %v1459, %v1409
        %v1461 = vadd.f32 %v1460, %v1423
        %v1462 = vsel %vm812, %v1382, 0.0
        %v1463 = vsel %vm812, %v1396, 0.0
        %v1464 = vadd.f32 %v1462, %v1463
        %v1465 = vsel %vm812, %v1410, 0.0
        %v1466 = vadd.f32 %v1464, %v1465
        %v1467 = vsel %vm812, %v1424, 0.0
        %v1468 = vadd.f32 %v1466, %v1467
        %v1469 = vsel %vm812, %v1383, 0.0
        %v1470 = vsel %vm812, %v1397, 0.0
        %v1471 = vadd.f32 %v1469, %v1470
        %v1472 = vsel %vm812, %v1411, 0.0
        %v1473 = vadd.f32 %v1471, %v1472
        %v1474 = vsel %vm812, %v1425, 0.0
        %v1475 = vadd.f32 %v1473, %v1474
        %v1476 = vadd.f32 %v1428, %v1241
        %v1477 = vadd.f32 %v1431, %v1248
        %v1478 = vadd.f32 %v1434, %v1241
        %v1479 = vadd.f32 %v1437, %v1248
        %v1480 = vadd.f32 %v1440, %v1241
        %v1481 = vadd.f32 %v1443, %v1248
        %v1482 = vadd.f32 %v1446, %v1241
        %v1483 = vadd.f32 %v1449, %v1248
        %v1484 = vadd.f32 %v1452, %v1241
        %v1485 = vadd.f32 %v1455, %v1248
        %v1486 = vadd.f32 %v1458, %v1241
        %v1487 = vadd.f32 %v1461, %v1248
        %v1488 = vadd.f32 %v1468, %v1241
        %v1489 = vadd.f32 %v1475, %v1248
        %v1490 = vmax.f32 %v1476, %v1480
        %v1491 = vmax.f32 %v1478, %v1482
        %v1492 = vmax.f32 %v1490, %v1484
        %v1493 = vmax.f32 %v1491, %v1486
        %v1494 = vsel %vm812, %v1488, -inf
        %v1495 = vmax.f32 %v1492, %v1494
        %v1496 = vmax.f32 %v1495, %v1493
        %v1497 = vrot.slane %v1496, 4
        %v1498 = vmax.f32 %v1496, %v1497
        %v1499 = vrot.slane %v1498, 2
        %v1500 = vmax.f32 %v1498, %v1499
        %v1501 = vrot.slane %v1500, 1
        %v1502 = vmax.f32 %v1500, %v1501
        %v1503 = vmax.f32 %v1477, %v1481
        %v1504 = vmax.f32 %v1479, %v1483
        %v1505 = vmax.f32 %v1503, %v1485
        %v1506 = vmax.f32 %v1504, %v1487
        %v1507 = vsel %vm812, %v1489, -inf
        %v1508 = vmax.f32 %v1505, %v1507
        %v1509 = vmax.f32 %v1508, %v1506
        %v1510 = vrot.slane %v1509, 4
        %v1511 = vmax.f32 %v1509, %v1510
        %v1512 = vrot.slane %v1511, 2
        %v1513 = vmax.f32 %v1511, %v1512
        %v1514 = vrot.slane %v1513, 1
        %v1515 = vmax.f32 %v1513, %v1514
        %v1516 = vsub.f32 %v1476, %v1502
        %v1517 = vsub.f32 %v1477, %v1515
        %v1518 = vsub.f32 %v1478, %v1502
        %v1519 = vsub.f32 %v1479, %v1515
        %v1520 = vsub.f32 %v1480, %v1502
        %v1521 = vsub.f32 %v1481, %v1515
        %v1522 = vsub.f32 %v1482, %v1502
        %v1523 = vsub.f32 %v1483, %v1515
        %v1524 = vsub.f32 %v1484, %v1502
        %v1525 = vsub.f32 %v1485, %v1515
        %v1526 = vsub.f32 %v1486, %v1502
        %v1527 = vsub.f32 %v1487, %v1515
        %v1528 = vsub.f32 %v1488, %v1502
        %v1529 = vsub.f32 %v1489, %v1515
        %v1530 = vmul.f32 %v1516, 1.442695
        %v1531 = vpow.pop %v1530
        %v1532 = vmul.f32 %v1517, 1.442695
        %v1533 = vpow.pop %v1532
        %v1534 = vmul.f32 %v1518, 1.442695
        %v1535 = vpow.pop %v1534
        %v1536 = vmul.f32 %v1519, 1.442695
        %v1537 = vpow.pop %v1536
        %v1538 = vmul.f32 %v1520, 1.442695
        %v1539 = vpow.pop %v1538
        %v1540 = vmul.f32 %v1521, 1.442695
        %v1541 = vpow.pop %v1540
        %v1542 = vmul.f32 %v1522, 1.442695
        %v1543 = vpow.pop %v1542
        %v1544 = vmul.f32 %v1523, 1.442695
        %v1545 = vpow.pop %v1544
        %v1546 = vmul.f32 %v1524, 1.442695
        %v1547 = vpow.pop %v1546
        %v1548 = vmul.f32 %v1525, 1.442695
        %v1549 = vpow.pop %v1548
        %v1550 = vmul.f32 %v1526, 1.442695
        %v1551 = vpow.pop %v1550
        %v1552 = vmul.f32 %v1527, 1.442695
        %v1553 = vpow.pop %v1552
        %v1554 = vmul.f32 %v1528, 1.442695
        %v1555 = vpow.pop %v1554
        %v1556 = vmul.f32 %v1529, 1.442695
        %v1557 = vpow.pop %v1556
        %v1558 = vadd.f32 %v1531, %v1535
        %v1559 = vadd.f32 %v1558, %v1539
        %v1560 = vadd.f32 %v1559, %v1543
        %v1561 = vadd.f32 %v1560, %v1547
        %v1562 = vadd.f32 %v1561, %v1551
        %v1563 = vsel %vm812, %v1555, 0.0
        %v1564 = vadd.f32 %v1562, %v1563
        %v1565 = vrot.slane %v1564, 4
        %v1566 = vadd.f32 %v1564, %v1565
        %v1567 = vrot.slane %v1566, 2
        %v1568 = vadd.f32 %v1566, %v1567
        %v1569 = vrot.slane %v1568, 1
        %v1570 = vadd.f32 %v1568, %v1569
        %v1571 = vadd.f32 %v1533, %v1537
        %v1572 = vadd.f32 %v1571, %v1541
        %v1573 = vadd.f32 %v1572, %v1545
        %v1574 = vadd.f32 %v1573, %v1549
        %v1575 = vadd.f32 %v1574, %v1553
        %v1576 = vsel %vm812, %v1557, 0.0
        %v1577 = vadd.f32 %v1575, %v1576
        %v1578 = vrot.slane %v1577, 4
        %v1579 = vadd.f32 %v1577, %v1578
        %v1580 = vrot.slane %v1579, 2
        %v1581 = vadd.f32 %v1579, %v1580
        %v1582 = vrot.slane %v1581, 1
        %v1583 = vadd.f32 %v1581, %v1582
        %v1584 = vrcp.pop %v1570
        %v1585 = vmul.f32 %v1531, %v1584
        %v1586 = vrcp.pop %v1583
        %v1587 = vmul.f32 %v1533, %v1586
        %v1588 = vmul.f32 %v1535, %v1584
        %v1589 = vmul.f32 %v1537, %v1586
        %v1590 = vmul.f32 %v1539, %v1584
        %v1591 = vmul.f32 %v1541, %v1586
        %v1592 = vmul.f32 %v1543, %v1584
        %v1593 = vmul.f32 %v1545, %v1586
        %v1594 = vmul.f32 %v1547, %v1584
        %v1595 = vmul.f32 %v1549, %v1586
        %v1596 = vmul.f32 %v1551, %v1584
        %v1597 = vmul.f32 %v1553, %v1586
        %v1598 = vmul.f32 %v1555, %v1584
        %v1599 = vmul.f32 %v1557, %v1586
        %v1600 = vmul.f32 %v1585, %v1169
        %v1601 = vmul.f32 %v1587, %v1170
        %v1602 = vmul.f32 %v1588, %v1171
        %v1603 = vmul.f32 %v1589, %v1172
        %v1604 = vmul.f32 %v1590, %v1173
        %v1605 = vmul.f32 %v1591, %v1174
        %v1606 = vmul.f32 %v1592, %v1175
        %v1607 = vmul.f32 %v1593, %v1176
        %v1608 = vmul.f32 %v1594, %v1177
        %v1609 = vmul.f32 %v1595, %v1178
        %v1610 = vmul.f32 %v1596, %v1179
        %v1611 = vmul.f32 %v1597, %v1180
        %v1612 = vmul.f32 %v1598, %v1181
        %v1613 = vmul.f32 %v1599, %v1182
        %v1614 = vmul.f32 %v1585, %v1183
        %v1615 = vmul.f32 %v1587, %v1184
        %v1616 = vmul.f32 %v1588, %v1185
        %v1617 = vmul.f32 %v1589, %v1186
        %v1618 = vmul.f32 %v1590, %v1187
        %v1619 = vmul.f32 %v1591, %v1188
        %v1620 = vmul.f32 %v1592, %v1189
        %v1621 = vmul.f32 %v1593, %v1190
        %v1622 = vmul.f32 %v1594, %v1191
        %v1623 = vmul.f32 %v1595, %v1192
        %v1624 = vmul.f32 %v1596, %v1193
        %v1625 = vmul.f32 %v1597, %v1194
        %v1626 = vmul.f32 %v1598, %v1195
        %v1627 = vmul.f32 %v1599, %v1196
        %v1628 = vmul.f32 %v1585, %v1197
        %v1629 = vmul.f32 %v1587, %v1198
        %v1630 = vmul.f32 %v1588, %v1199
        %v1631 = vmul.f32 %v1589, %v1200
        %v1632 = vmul.f32 %v1590, %v1201
        %v1633 = vmul.f32 %v1591, %v1202
        %v1634 = vmul.f32 %v1592, %v1203
        %v1635 = vmul.f32 %v1593, %v1204
        %v1636 = vmul.f32 %v1594, %v1205
        %v1637 = vmul.f32 %v1595, %v1206
        %v1638 = vmul.f32 %v1596, %v1207
        %v1639 = vmul.f32 %v1597, %v1208
        %v1640 = vmul.f32 %v1598, %v1209
        %v1641 = vmul.f32 %v1599, %v1210
        %v1642 = vmul.f32 %v1585, %v1211
        %v1643 = vmul.f32 %v1587, %v1212
        %v1644 = vmul.f32 %v1588, %v1213
        %v1645 = vmul.f32 %v1589, %v1214
        %v1646 = vmul.f32 %v1590, %v1215
        %v1647 = vmul.f32 %v1591, %v1216
        %v1648 = vmul.f32 %v1592, %v1217
        %v1649 = vmul.f32 %v1593, %v1218
        %v1650 = vmul.f32 %v1594, %v1219
        %v1651 = vmul.f32 %v1595, %v1220
        %v1652 = vmul.f32 %v1596, %v1221
        %v1653 = vmul.f32 %v1597, %v1222
        %v1654 = vmul.f32 %v1598, %v1223
        %v1655 = vmul.f32 %v1599, %v1224
        %v1656 = vadd.f32 %v1600, %v1602
        %v1657 = vadd.f32 %v1656, %v1604
        %v1658 = vadd.f32 %v1657, %v1606
        %v1659 = vadd.f32 %v1658, %v1608
        %v1660 = vadd.f32 %v1659, %v1610
        %v1661 = vsel %vm812, %v1612, 0.0
        %v1662 = vadd.f32 %v1660, %v1661
        %v1663 = vrot.slane %v1662, 4
        %v1664 = vadd.f32 %v1662, %v1663
        %v1665 = vrot.slane %v1664, 2
        %v1666 = vadd.f32 %v1664, %v1665
        %v1667 = vrot.slane %v1666, 1
        %v1668 = vadd.f32 %v1666, %v1667
        %v1669 = vadd.f32 %v1601, %v1603
        %v1670 = vadd.f32 %v1669, %v1605
        %v1671 = vadd.f32 %v1670, %v1607
        %v1672 = vadd.f32 %v1671, %v1609
        %v1673 = vadd.f32 %v1672, %v1611
        %v1674 = vsel %vm812, %v1613, 0.0
        %v1675 = vadd.f32 %v1673, %v1674
        %v1676 = vrot.slane %v1675, 4
        %v1677 = vadd.f32 %v1675, %v1676
        %v1678 = vrot.slane %v1677, 2
        %v1679 = vadd.f32 %v1677, %v1678
        %v1680 = vrot.slane %v1679, 1
        %v1681 = vadd.f32 %v1679, %v1680
        %v1682 = vadd.f32 %v1614, %v1616
        %v1683 = vadd.f32 %v1682, %v1618
        %v1684 = vadd.f32 %v1683, %v1620
        %v1685 = vadd.f32 %v1684, %v1622
        %v1686 = vadd.f32 %v1685, %v1624
        %v1687 = vsel %vm812, %v1626, 0.0
        %v1688 = vadd.f32 %v1686, %v1687
        %v1689 = vrot.slane %v1688, 4
        %v1690 = vadd.f32 %v1688, %v1689
        %v1691 = vrot.slane %v1690, 2
        %v1692 = vadd.f32 %v1690, %v1691
        %v1693 = vrot.slane %v1692, 1
        %v1694 = vadd.f32 %v1692, %v1693
        %v1695 = vadd.f32 %v1615, %v1617
        %v1696 = vadd.f32 %v1695, %v1619
        %v1697 = vadd.f32 %v1696, %v1621
        %v1698 = vadd.f32 %v1697, %v1623
        %v1699 = vadd.f32 %v1698, %v1625
        %v1700 = vsel %vm812, %v1627, 0.0
        %v1701 = vadd.f32 %v1699, %v1700
        %v1702 = vrot.slane %v1701, 4
        %v1703 = vadd.f32 %v1701, %v1702
        %v1704 = vrot.slane %v1703, 2
        %v1705 = vadd.f32 %v1703, %v1704
        %v1706 = vrot.slane %v1705, 1
        %v1707 = vadd.f32 %v1705, %v1706
        %v1708 = vadd.f32 %v1628, %v1630
        %v1709 = vadd.f32 %v1708, %v1632
        %v1710 = vadd.f32 %v1709, %v1634
        %v1711 = vadd.f32 %v1710, %v1636
        %v1712 = vadd.f32 %v1711, %v1638
        %v1713 = vsel %vm812, %v1640, 0.0
        %v1714 = vadd.f32 %v1712, %v1713
        %v1715 = vrot.slane %v1714, 4
        %v1716 = vadd.f32 %v1714, %v1715
        %v1717 = vrot.slane %v1716, 2
        %v1718 = vadd.f32 %v1716, %v1717
        %v1719 = vrot.slane %v1718, 1
        %v1720 = vadd.f32 %v1718, %v1719
        %v1721 = vadd.f32 %v1629, %v1631
        %v1722 = vadd.f32 %v1721, %v1633
        %v1723 = vadd.f32 %v1722, %v1635
        %v1724 = vadd.f32 %v1723, %v1637
        %v1725 = vadd.f32 %v1724, %v1639
        %v1726 = vsel %vm812, %v1641, 0.0
        %v1727 = vadd.f32 %v1725, %v1726
        %v1728 = vrot.slane %v1727, 4
        %v1729 = vadd.f32 %v1727, %v1728
        %v1730 = vrot.slane %v1729, 2
        %v1731 = vadd.f32 %v1729, %v1730
        %v1732 = vrot.slane %v1731, 1
        %v1733 = vadd.f32 %v1731, %v1732
        %v1734 = vadd.f32 %v1642, %v1644
        %v1735 = vadd.f32 %v1734, %v1646
        %v1736 = vadd.f32 %v1735, %v1648
        %v1737 = vadd.f32 %v1736, %v1650
        %v1738 = vadd.f32 %v1737, %v1652
        %v1739 = vsel %vm812, %v1654, 0.0
        %v1740 = vadd.f32 %v1738, %v1739
        %v1741 = vrot.slane %v1740, 4
        %v1742 = vadd.f32 %v1740, %v1741
        %v1743 = vrot.slane %v1742, 2
        %v1744 = vadd.f32 %v1742, %v1743
        %v1745 = vrot.slane %v1744, 1
        %v1746 = vadd.f32 %v1744, %v1745
        %v1747 = vadd.f32 %v1643, %v1645
        %v1748 = vadd.f32 %v1747, %v1647
        %v1749 = vadd.f32 %v1748, %v1649
        %v1750 = vadd.f32 %v1749, %v1651
        %v1751 = vadd.f32 %v1750, %v1653
        %v1752 = vsel %vm812, %v1655, 0.0
        %v1753 = vadd.f32 %v1751, %v1752
        %v1754 = vrot.slane %v1753, 4
        %v1755 = vadd.f32 %v1753, %v1754
        %v1756 = vrot.slane %v1755, 2
        %v1757 = vadd.f32 %v1755, %v1756
        %v1758 = vrot.slane %v1757, 1
        %v1759 = vadd.f32 %v1757, %v1758
        %s1760 = scalar_lea.vmem %s379, 896
        %v1761 = vld [vmem:[%s1760] sm:$0xff]
        %v1762 = vld [vmem:[%s1760 + $0x8] sm:$0xff]
        %v1763 = vld [vmem:[%s1760 + $0x10] sm:$0xff]
        %v1764 = vld [vmem:[%s1760 + $0x18] sm:$0xff]
        %v1765 = vld [vmem:[%s1760 + $0x20] sm:$0xff]
        %v1766 = vld [vmem:[%s1760 + $0x28] sm:$0xff]
        %v1767 = vld [vmem:[%s1760 + $0x30] sm:$0xff]
        %v1768 = vld [vmem:[%s1760 + $0x38] sm:$0xff]
        %v1769 = vld [vmem:[%s1760 + $0x40] sm:$0xff]
        %v1770 = vld [vmem:[%s1760 + $0x48] sm:$0xff]
        %v1771 = vld [vmem:[%s1760 + $0x50] sm:$0xff]
        %v1772 = vld [vmem:[%s1760 + $0x58] sm:$0xff]
        %v1773 = vld [vmem:[%s1760 + $0x60] sm:$0x1]
        %v1774 = vld [vmem:[%s1760 + $0x68] sm:$0x1]
        %v1775 = vld [vmem:[%s1760 + $0x70] sm:$0xff]
        %v1776 = vld [vmem:[%s1760 + $0x78] sm:$0xff]
        %v1777 = vld [vmem:[%s1760 + $0x80] sm:$0xff]
        %v1778 = vld [vmem:[%s1760 + $0x88] sm:$0xff]
        %v1779 = vld [vmem:[%s1760 + $0x90] sm:$0xff]
        %v1780 = vld [vmem:[%s1760 + $0x98] sm:$0xff]
        %v1781 = vld [vmem:[%s1760 + $0xa0] sm:$0xff]
        %v1782 = vld [vmem:[%s1760 + $0xa8] sm:$0xff]
        %v1783 = vld [vmem:[%s1760 + $0xb0] sm:$0xff]
        %v1784 = vld [vmem:[%s1760 + $0xb8] sm:$0xff]
        %v1785 = vld [vmem:[%s1760 + $0xc0] sm:$0xff]
        %v1786 = vld [vmem:[%s1760 + $0xc8] sm:$0xff]
        %v1787 = vld [vmem:[%s1760 + $0xd0] sm:$0x1]
        %v1788 = vld [vmem:[%s1760 + $0xd8] sm:$0x1]
        %v1789 = vld [vmem:[%s1760 + $0xe0] sm:$0xff]
        %v1790 = vld [vmem:[%s1760 + $0xe8] sm:$0xff]
        %v1791 = vld [vmem:[%s1760 + $0xf0] sm:$0xff]
        %v1792 = vld [vmem:[%s1760 + $0xf8] sm:$0xff]
        %v1793 = vld [vmem:[%s1760 + $0x100] sm:$0xff]
        %v1794 = vld [vmem:[%s1760 + $0x108] sm:$0xff]
        %v1795 = vld [vmem:[%s1760 + $0x110] sm:$0xff]
        %v1796 = vld [vmem:[%s1760 + $0x118] sm:$0xff]
        %v1797 = vld [vmem:[%s1760 + $0x120] sm:$0xff]
        %v1798 = vld [vmem:[%s1760 + $0x128] sm:$0xff]
        %v1799 = vld [vmem:[%s1760 + $0x130] sm:$0xff]
        %v1800 = vld [vmem:[%s1760 + $0x138] sm:$0xff]
        %v1801 = vld [vmem:[%s1760 + $0x140] sm:$0x1]
        %v1802 = vld [vmem:[%s1760 + $0x148] sm:$0x1]
        %v1803 = vld [vmem:[%s1760 + $0x150] sm:$0xff]
        %v1804 = vld [vmem:[%s1760 + $0x158] sm:$0xff]
        %v1805 = vld [vmem:[%s1760 + $0x160] sm:$0xff]
        %v1806 = vld [vmem:[%s1760 + $0x168] sm:$0xff]
        %v1807 = vld [vmem:[%s1760 + $0x170] sm:$0xff]
        %v1808 = vld [vmem:[%s1760 + $0x178] sm:$0xff]
        %v1809 = vld [vmem:[%s1760 + $0x180] sm:$0xff]
        %v1810 = vld [vmem:[%s1760 + $0x188] sm:$0xff]
        %v1811 = vld [vmem:[%s1760 + $0x190] sm:$0xff]
        %v1812 = vld [vmem:[%s1760 + $0x198] sm:$0xff]
        %v1813 = vld [vmem:[%s1760 + $0x1a0] sm:$0xff]
        %v1814 = vld [vmem:[%s1760 + $0x1a8] sm:$0xff]
        %v1815 = vld [vmem:[%s1760 + $0x1b0] sm:$0x1]
        %v1816 = vld [vmem:[%s1760 + $0x1b8] sm:$0x1]
        %s1817 = scalar_lea.vmem %s384, 896
        %v1818 = vld [vmem:[%s1817] sm:$0xff]
        %v1819 = vld [vmem:[%s1817 + $0x8] sm:$0xff]
        %v1820 = vld [vmem:[%s1817 + $0x10] sm:$0xff]
        %v1821 = vld [vmem:[%s1817 + $0x18] sm:$0xff]
        %v1822 = vld [vmem:[%s1817 + $0x20] sm:$0xff]
        %v1823 = vld [vmem:[%s1817 + $0x28] sm:$0xff]
        %v1824 = vld [vmem:[%s1817 + $0x30] sm:$0xff]
        %v1825 = vld [vmem:[%s1817 + $0x38] sm:$0xff]
        %v1826 = vld [vmem:[%s1817 + $0x40] sm:$0xff]
        %v1827 = vld [vmem:[%s1817 + $0x48] sm:$0xff]
        %v1828 = vld [vmem:[%s1817 + $0x50] sm:$0xff]
        %v1829 = vld [vmem:[%s1817 + $0x58] sm:$0xff]
        %v1830 = vld [vmem:[%s1817 + $0x60] sm:$0x1]
        %v1831 = vld [vmem:[%s1817 + $0x68] sm:$0x1]
        %v1832 = vld [vmem:[%s1817 + $0x70] sm:$0xff]
        %v1833 = vld [vmem:[%s1817 + $0x78] sm:$0xff]
        %v1834 = vld [vmem:[%s1817 + $0x80] sm:$0xff]
        %v1835 = vld [vmem:[%s1817 + $0x88] sm:$0xff]
        %v1836 = vld [vmem:[%s1817 + $0x90] sm:$0xff]
        %v1837 = vld [vmem:[%s1817 + $0x98] sm:$0xff]
        %v1838 = vld [vmem:[%s1817 + $0xa0] sm:$0xff]
        %v1839 = vld [vmem:[%s1817 + $0xa8] sm:$0xff]
        %v1840 = vld [vmem:[%s1817 + $0xb0] sm:$0xff]
        %v1841 = vld [vmem:[%s1817 + $0xb8] sm:$0xff]
        %v1842 = vld [vmem:[%s1817 + $0xc0] sm:$0xff]
        %v1843 = vld [vmem:[%s1817 + $0xc8] sm:$0xff]
        %v1844 = vld [vmem:[%s1817 + $0xd0] sm:$0x1]
        %v1845 = vld [vmem:[%s1817 + $0xd8] sm:$0x1]
        %v1846 = vld [vmem:[%s1817 + $0xe0] sm:$0xff]
        %v1847 = vld [vmem:[%s1817 + $0xe8] sm:$0xff]
        %v1848 = vld [vmem:[%s1817 + $0xf0] sm:$0xff]
        %v1849 = vld [vmem:[%s1817 + $0xf8] sm:$0xff]
        %v1850 = vld [vmem:[%s1817 + $0x100] sm:$0xff]
        %v1851 = vld [vmem:[%s1817 + $0x108] sm:$0xff]
        %v1852 = vld [vmem:[%s1817 + $0x110] sm:$0xff]
        %v1853 = vld [vmem:[%s1817 + $0x118] sm:$0xff]
        %v1854 = vld [vmem:[%s1817 + $0x120] sm:$0xff]
        %v1855 = vld [vmem:[%s1817 + $0x128] sm:$0xff]
        %v1856 = vld [vmem:[%s1817 + $0x130] sm:$0xff]
        %v1857 = vld [vmem:[%s1817 + $0x138] sm:$0xff]
        %v1858 = vld [vmem:[%s1817 + $0x140] sm:$0x1]
        %v1859 = vld [vmem:[%s1817 + $0x148] sm:$0x1]
        %v1860 = vld [vmem:[%s1817 + $0x150] sm:$0xff]
        %v1861 = vld [vmem:[%s1817 + $0x158] sm:$0xff]
        %v1862 = vld [vmem:[%s1817 + $0x160] sm:$0xff]
        %v1863 = vld [vmem:[%s1817 + $0x168] sm:$0xff]
        %v1864 = vld [vmem:[%s1817 + $0x170] sm:$0xff]
        %v1865 = vld [vmem:[%s1817 + $0x178] sm:$0xff]
        %v1866 = vld [vmem:[%s1817 + $0x180] sm:$0xff]
        %v1867 = vld [vmem:[%s1817 + $0x188] sm:$0xff]
        %v1868 = vld [vmem:[%s1817 + $0x190] sm:$0xff]
        %v1869 = vld [vmem:[%s1817 + $0x198] sm:$0xff]
        %v1870 = vld [vmem:[%s1817 + $0x1a0] sm:$0xff]
        %v1871 = vld [vmem:[%s1817 + $0x1a8] sm:$0xff]
        %v1872 = vld [vmem:[%s1817 + $0x1b0] sm:$0x1]
        %v1873 = vld [vmem:[%s1817 + $0x1b8] sm:$0x1]
        %v1874 = vmul.f32 %v406, %v408
        %v1875 = vmul.f32 %v407, %v578
        %v1876 = vsel %vm582, %v1874, 0.0
        %v1877 = vrot.slane %v1876, 4
        %v1878 = vadd.f32 %v1876, %v1877
        %v1879 = vrot.slane %v1878, 2
        %v1880 = vadd.f32 %v1878, %v1879
        %v1881 = vrot.slane %v1880, 1
        %v1882 = vadd.f32 %v1880, %v1881
        %v1883 = vsel %vm582, %v1875, 0.0
        %v1884 = vrot.slane %v1883, 4
        %v1885 = vadd.f32 %v1883, %v1884
        %v1886 = vrot.slane %v1885, 2
        %v1887 = vadd.f32 %v1885, %v1886
        %v1888 = vrot.slane %v1887, 1
        %v1889 = vadd.f32 %v1887, %v1888
        %v1892 = vcombine.low %v406, %v407
        %v1894 = vunpack.c.l.s4 1966171168
        %v1895 = vunpack.c.0.s8 %v1894
        %v1896 = vlaneseq
        %v1897 = vshrl.u32 %v1896, 7
        %v1898 = vsub.s32 %v1895, %v1897
        %v1899 = vrot.slane %v1892, %v1898
        %v1900 = vcombine.high %v1899, %v1899
        %v1902 = vunpack.c.l.s4 1966171168
        %v1903 = vunpack.c.0.s8 %v1902
        %v1904 = vlaneseq
        %v1905 = vshrl.u32 %v1904, 7
        %v1906 = vsub.s32 %v1903, %v1905
        %v1907 = vrot.slane %v1899, %v1906
        %v1909 = vunpack.c.l.s4 1966171168
        %v1910 = vunpack.c.0.s8 %v1909
        %v1911 = vlaneseq
        %v1912 = vshrl.u32 %v1911, 7
        %v1913 = vsub.s32 %v1910, %v1912
        %v1914 = vrot.slane %v1900, %v1913
        %v1915 = vcombine.high %v1907, %v1907
        %v1916 = vcombine.high %v1914, %v1914
        %v1917 = vsub.f32 %v1761, %v409
        %v1918 = vsub.f32 %v1762, %v410
        %v1919 = vsub.f32 %v1763, %v411
        %v1920 = vsub.f32 %v1764, %v412
        %v1921 = vsub.f32 %v1765, %v413
        %v1922 = vsub.f32 %v1766, %v414
        %v1923 = vsub.f32 %v1767, %v415
        %v1924 = vsub.f32 %v1768, %v416
        %v1925 = vsub.f32 %v1769, %v417
        %v1926 = vsub.f32 %v1770, %v418
        %v1927 = vsub.f32 %v1771, %v419
        %v1928 = vsub.f32 %v1772, %v420
        %v1929 = vsub.f32 %v1773, %v421
        %v1930 = vsub.f32 %v1774, %v422
        %v1931 = vsub.f32 %v1775, %v423
        %v1932 = vsub.f32 %v1776, %v424
        %v1933 = vsub.f32 %v1777, %v425
        %v1934 = vsub.f32 %v1778, %v426
        %v1935 = vsub.f32 %v1779, %v427
        %v1936 = vsub.f32 %v1780, %v428
        %v1937 = vsub.f32 %v1781, %v429
        %v1938 = vsub.f32 %v1782, %v430
        %v1939 = vsub.f32 %v1783, %v431
        %v1940 = vsub.f32 %v1784, %v432
        %v1941 = vsub.f32 %v1785, %v433
        %v1942 = vsub.f32 %v1786, %v434
        %v1943 = vsub.f32 %v1787, %v435
        %v1944 = vsub.f32 %v1788, %v436
        %v1945 = vsub.f32 %v1789, %v437
        %v1946 = vsub.f32 %v1790, %v438
        %v1947 = vsub.f32 %v1791, %v439
        %v1948 = vsub.f32 %v1792, %v440
        %v1949 = vsub.f32 %v1793, %v441
        %v1950 = vsub.f32 %v1794, %v442
        %v1951 = vsub.f32 %v1795, %v443
        %v1952 = vsub.f32 %v1796, %v444
        %v1953 = vsub.f32 %v1797, %v445
        %v1954 = vsub.f32 %v1798, %v446
        %v1955 = vsub.f32 %v1799, %v447
        %v1956 = vsub.f32 %v1800, %v448
        %v1957 = vsub.f32 %v1801, %v449
        %v1958 = vsub.f32 %v1802, %v450
        %v1959 = vsub.f32 %v1803, %v451
        %v1960 = vsub.f32 %v1804, %v452
        %v1961 = vsub.f32 %v1805, %v453
        %v1962 = vsub.f32 %v1806, %v454
        %v1963 = vsub.f32 %v1807, %v455
        %v1964 = vsub.f32 %v1808, %v456
        %v1965 = vsub.f32 %v1809, %v457
        %v1966 = vsub.f32 %v1810, %v458
        %v1967 = vsub.f32 %v1811, %v459
        %v1968 = vsub.f32 %v1812, %v460
        %v1969 = vsub.f32 %v1813, %v461
        %v1970 = vsub.f32 %v1814, %v462
        %v1971 = vsub.f32 %v1815, %v463
        %v1972 = vsub.f32 %v1816, %v464
        %v1973 = vlaneseq
        %v1974 = vshrl.u32 %v1973, 7
        %v1975 = vsub.s32 0, %v1974
        %v1976 = vrot.slane %v1907, %v1975
        %v1977 = vlaneseq
        %v1978 = vshrl.u32 %v1977, 7
        %v1979 = vsub.s32 1, %v1978
        %v1980 = vrot.slane %v1907, %v1979
        %v1981 = vlaneseq
        %v1982 = vshrl.u32 %v1981, 7
        %v1983 = vsub.s32 0, %v1982
        %v1984 = vrot.slane %v1914, %v1983
        %v1985 = vlaneseq
        %v1986 = vshrl.u32 %v1985, 7
        %v1987 = vsub.s32 1, %v1986
        %v1988 = vrot.slane %v1914, %v1987
        %v1989 = vlaneseq
        %v1990 = vshrl.u32 %v1989, 7
        %v1991 = vsub.s32 0, %v1990
        %v1992 = vrot.slane %v1915, %v1991
        %v1993 = vlaneseq
        %v1994 = vshrl.u32 %v1993, 7
        %v1995 = vsub.s32 1, %v1994
        %v1996 = vrot.slane %v1915, %v1995
        %v1997 = vlaneseq
        %v1998 = vshrl.u32 %v1997, 7
        %v1999 = vsub.s32 0, %v1998
        %v2000 = vrot.slane %v1916, %v1999
        %v2001 = vlaneseq
        %v2002 = vshrl.u32 %v2001, 7
        %v2003 = vsub.s32 1, %v2002
        %v2004 = vrot.slane %v1916, %v2003
        %v2013 = vmul.f32 %v1976, %v1917
        %v2014 = vmul.f32 %v1980, %v1918
        %v2015 = vmul.f32 %v1976, %v1919
        %v2016 = vmul.f32 %v1980, %v1920
        %v2017 = vmul.f32 %v1976, %v1921
        %v2018 = vmul.f32 %v1980, %v1922
        %v2019 = vmul.f32 %v1976, %v1923
        %v2020 = vmul.f32 %v1980, %v1924
        %v2021 = vmul.f32 %v1976, %v1925
        %v2022 = vmul.f32 %v1980, %v1926
        %v2023 = vmul.f32 %v1976, %v1927
        %v2024 = vmul.f32 %v1980, %v1928
        %v2025 = vmul.f32 %v1976, %v1929
        %v2026 = vmul.f32 %v1980, %v1930
        %v2027 = vmul.f32 %v1984, %v1931
        %v2028 = vmul.f32 %v1988, %v1932
        %v2029 = vmul.f32 %v1984, %v1933
        %v2030 = vmul.f32 %v1988, %v1934
        %v2031 = vmul.f32 %v1984, %v1935
        %v2032 = vmul.f32 %v1988, %v1936
        %v2033 = vmul.f32 %v1984, %v1937
        %v2034 = vmul.f32 %v1988, %v1938
        %v2035 = vmul.f32 %v1984, %v1939
        %v2036 = vmul.f32 %v1988, %v1940
        %v2037 = vmul.f32 %v1984, %v1941
        %v2038 = vmul.f32 %v1988, %v1942
        %v2039 = vmul.f32 %v1984, %v1943
        %v2040 = vmul.f32 %v1988, %v1944
        %v2041 = vmul.f32 %v1992, %v1945
        %v2042 = vmul.f32 %v1996, %v1946
        %v2043 = vmul.f32 %v1992, %v1947
        %v2044 = vmul.f32 %v1996, %v1948
        %v2045 = vmul.f32 %v1992, %v1949
        %v2046 = vmul.f32 %v1996, %v1950
        %v2047 = vmul.f32 %v1992, %v1951
        %v2048 = vmul.f32 %v1996, %v1952
        %v2049 = vmul.f32 %v1992, %v1953
        %v2050 = vmul.f32 %v1996, %v1954
        %v2051 = vmul.f32 %v1992, %v1955
        %v2052 = vmul.f32 %v1996, %v1956
        %v2053 = vmul.f32 %v1992, %v1957
        %v2054 = vmul.f32 %v1996, %v1958
        %v2055 = vmul.f32 %v2000, %v1959
        %v2056 = vmul.f32 %v2004, %v1960
        %v2057 = vmul.f32 %v2000, %v1961
        %v2058 = vmul.f32 %v2004, %v1962
        %v2059 = vmul.f32 %v2000, %v1963
        %v2060 = vmul.f32 %v2004, %v1964
        %v2061 = vmul.f32 %v2000, %v1965
        %v2062 = vmul.f32 %v2004, %v1966
        %v2063 = vmul.f32 %v2000, %v1967
        %v2064 = vmul.f32 %v2004, %v1968
        %v2065 = vmul.f32 %v2000, %v1969
        %v2066 = vmul.f32 %v2004, %v1970
        %v2067 = vmul.f32 %v2000, %v1971
        %v2068 = vmul.f32 %v2004, %v1972
        %v2069 = vadd.f32 %v2013, %v2027
        %v2070 = vadd.f32 %v2069, %v2041
        %v2071 = vadd.f32 %v2070, %v2055
        %v2072 = vadd.f32 %v2014, %v2028
        %v2073 = vadd.f32 %v2072, %v2042
        %v2074 = vadd.f32 %v2073, %v2056
        %v2075 = vadd.f32 %v2015, %v2029
        %v2076 = vadd.f32 %v2075, %v2043
        %v2077 = vadd.f32 %v2076, %v2057
        %v2078 = vadd.f32 %v2016, %v2030
        %v2079 = vadd.f32 %v2078, %v2044
        %v2080 = vadd.f32 %v2079, %v2058
        %v2081 = vadd.f32 %v2017, %v2031
        %v2082 = vadd.f32 %v2081, %v2045
        %v2083 = vadd.f32 %v2082, %v2059
        %v2084 = vadd.f32 %v2018, %v2032
        %v2085 = vadd.f32 %v2084, %v2046
        %v2086 = vadd.f32 %v2085, %v2060
        %v2087 = vadd.f32 %v2019, %v2033
        %v2088 = vadd.f32 %v2087, %v2047
        %v2089 = vadd.f32 %v2088, %v2061
        %v2090 = vadd.f32 %v2020, %v2034
        %v2091 = vadd.f32 %v2090, %v2048
        %v2092 = vadd.f32 %v2091, %v2062
        %v2093 = vadd.f32 %v2021, %v2035
        %v2094 = vadd.f32 %v2093, %v2049
        %v2095 = vadd.f32 %v2094, %v2063
        %v2096 = vadd.f32 %v2022, %v2036
        %v2097 = vadd.f32 %v2096, %v2050
        %v2098 = vadd.f32 %v2097, %v2064
        %v2099 = vadd.f32 %v2023, %v2037
        %v2100 = vadd.f32 %v2099, %v2051
        %v2101 = vadd.f32 %v2100, %v2065
        %v2102 = vadd.f32 %v2024, %v2038
        %v2103 = vadd.f32 %v2102, %v2052
        %v2104 = vadd.f32 %v2103, %v2066
        %v2105 = vsel %vm812, %v2025, 0.0
        %v2106 = vsel %vm812, %v2039, 0.0
        %v2107 = vadd.f32 %v2105, %v2106
        %v2108 = vsel %vm812, %v2053, 0.0
        %v2109 = vadd.f32 %v2107, %v2108
        %v2110 = vsel %vm812, %v2067, 0.0
        %v2111 = vadd.f32 %v2109, %v2110
        %v2112 = vsel %vm812, %v2026, 0.0
        %v2113 = vsel %vm812, %v2040, 0.0
        %v2114 = vadd.f32 %v2112, %v2113
        %v2115 = vsel %vm812, %v2054, 0.0
        %v2116 = vadd.f32 %v2114, %v2115
        %v2117 = vsel %vm812, %v2068, 0.0
        %v2118 = vadd.f32 %v2116, %v2117
        %v2119 = vadd.f32 %v2071, %v1882
        %v2120 = vadd.f32 %v2074, %v1889
        %v2121 = vadd.f32 %v2077, %v1882
        %v2122 = vadd.f32 %v2080, %v1889
        %v2123 = vadd.f32 %v2083, %v1882
        %v2124 = vadd.f32 %v2086, %v1889
        %v2125 = vadd.f32 %v2089, %v1882
        %v2126 = vadd.f32 %v2092, %v1889
        %v2127 = vadd.f32 %v2095, %v1882
        %v2128 = vadd.f32 %v2098, %v1889
        %v2129 = vadd.f32 %v2101, %v1882
        %v2130 = vadd.f32 %v2104, %v1889
        %v2131 = vadd.f32 %v2111, %v1882
        %v2132 = vadd.f32 %v2118, %v1889
        %v2133 = vmax.f32 %v2119, %v2123
        %v2134 = vmax.f32 %v2121, %v2125
        %v2135 = vmax.f32 %v2133, %v2127
        %v2136 = vmax.f32 %v2134, %v2129
        %v2137 = vsel %vm812, %v2131, -inf
        %v2138 = vmax.f32 %v2135, %v2137
        %v2139 = vmax.f32 %v2138, %v2136
        %v2140 = vrot.slane %v2139, 4
        %v2141 = vmax.f32 %v2139, %v2140
        %v2142 = vrot.slane %v2141, 2
        %v2143 = vmax.f32 %v2141, %v2142
        %v2144 = vrot.slane %v2143, 1
        %v2145 = vmax.f32 %v2143, %v2144
        %v2146 = vmax.f32 %v2120, %v2124
        %v2147 = vmax.f32 %v2122, %v2126
        %v2148 = vmax.f32 %v2146, %v2128
        %v2149 = vmax.f32 %v2147, %v2130
        %v2150 = vsel %vm812, %v2132, -inf
        %v2151 = vmax.f32 %v2148, %v2150
        %v2152 = vmax.f32 %v2151, %v2149
        %v2153 = vrot.slane %v2152, 4
        %v2154 = vmax.f32 %v2152, %v2153
        %v2155 = vrot.slane %v2154, 2
        %v2156 = vmax.f32 %v2154, %v2155
        %v2157 = vrot.slane %v2156, 1
        %v2158 = vmax.f32 %v2156, %v2157
        %v2159 = vsub.f32 %v2119, %v2145
        %v2160 = vsub.f32 %v2120, %v2158
        %v2161 = vsub.f32 %v2121, %v2145
        %v2162 = vsub.f32 %v2122, %v2158
        %v2163 = vsub.f32 %v2123, %v2145
        %v2164 = vsub.f32 %v2124, %v2158
        %v2165 = vsub.f32 %v2125, %v2145
        %v2166 = vsub.f32 %v2126, %v2158
        %v2167 = vsub.f32 %v2127, %v2145
        %v2168 = vsub.f32 %v2128, %v2158
        %v2169 = vsub.f32 %v2129, %v2145
        %v2170 = vsub.f32 %v2130, %v2158
        %v2171 = vsub.f32 %v2131, %v2145
        %v2172 = vsub.f32 %v2132, %v2158
        %v2173 = vmul.f32 %v2159, 1.442695
        %v2174 = vpow.pop %v2173
        %v2175 = vmul.f32 %v2160, 1.442695
        %v2176 = vpow.pop %v2175
        %v2177 = vmul.f32 %v2161, 1.442695
        %v2178 = vpow.pop %v2177
        %v2179 = vmul.f32 %v2162, 1.442695
        %v2180 = vpow.pop %v2179
        %v2181 = vmul.f32 %v2163, 1.442695
        %v2182 = vpow.pop %v2181
        %v2183 = vmul.f32 %v2164, 1.442695
        %v2184 = vpow.pop %v2183
        %v2185 = vmul.f32 %v2165, 1.442695
        %v2186 = vpow.pop %v2185
        %v2187 = vmul.f32 %v2166, 1.442695
        %v2188 = vpow.pop %v2187
        %v2189 = vmul.f32 %v2167, 1.442695
        %v2190 = vpow.pop %v2189
        %v2191 = vmul.f32 %v2168, 1.442695
        %v2192 = vpow.pop %v2191
        %v2193 = vmul.f32 %v2169, 1.442695
        %v2194 = vpow.pop %v2193
        %v2195 = vmul.f32 %v2170, 1.442695
        %v2196 = vpow.pop %v2195
        %v2197 = vmul.f32 %v2171, 1.442695
        %v2198 = vpow.pop %v2197
        %v2199 = vmul.f32 %v2172, 1.442695
        %v2200 = vpow.pop %v2199
        %v2201 = vadd.f32 %v2174, %v2178
        %v2202 = vadd.f32 %v2201, %v2182
        %v2203 = vadd.f32 %v2202, %v2186
        %v2204 = vadd.f32 %v2203, %v2190
        %v2205 = vadd.f32 %v2204, %v2194
        %v2206 = vsel %vm812, %v2198, 0.0
        %v2207 = vadd.f32 %v2205, %v2206
        %v2208 = vrot.slane %v2207, 4
        %v2209 = vadd.f32 %v2207, %v2208
        %v2210 = vrot.slane %v2209, 2
        %v2211 = vadd.f32 %v2209, %v2210
        %v2212 = vrot.slane %v2211, 1
        %v2213 = vadd.f32 %v2211, %v2212
        %v2214 = vadd.f32 %v2176, %v2180
        %v2215 = vadd.f32 %v2214, %v2184
        %v2216 = vadd.f32 %v2215, %v2188
        %v2217 = vadd.f32 %v2216, %v2192
        %v2218 = vadd.f32 %v2217, %v2196
        %v2219 = vsel %vm812, %v2200, 0.0
        %v2220 = vadd.f32 %v2218, %v2219
        %v2221 = vrot.slane %v2220, 4
        %v2222 = vadd.f32 %v2220, %v2221
        %v2223 = vrot.slane %v2222, 2
        %v2224 = vadd.f32 %v2222, %v2223
        %v2225 = vrot.slane %v2224, 1
        %v2226 = vadd.f32 %v2224, %v2225
        %v2227 = vrcp.pop %v2213
        %v2228 = vmul.f32 %v2174, %v2227
        %v2229 = vrcp.pop %v2226
        %v2230 = vmul.f32 %v2176, %v2229
        %v2231 = vmul.f32 %v2178, %v2227
        %v2232 = vmul.f32 %v2180, %v2229
        %v2233 = vmul.f32 %v2182, %v2227
        %v2234 = vmul.f32 %v2184, %v2229
        %v2235 = vmul.f32 %v2186, %v2227
        %v2236 = vmul.f32 %v2188, %v2229
        %v2237 = vmul.f32 %v2190, %v2227
        %v2238 = vmul.f32 %v2192, %v2229
        %v2239 = vmul.f32 %v2194, %v2227
        %v2240 = vmul.f32 %v2196, %v2229
        %v2241 = vmul.f32 %v2198, %v2227
        %v2242 = vmul.f32 %v2200, %v2229
        %v2243 = vmul.f32 %v2228, %v1818
        %v2244 = vmul.f32 %v2230, %v1819
        %v2245 = vmul.f32 %v2231, %v1820
        %v2246 = vmul.f32 %v2232, %v1821
        %v2247 = vmul.f32 %v2233, %v1822
        %v2248 = vmul.f32 %v2234, %v1823
        %v2249 = vmul.f32 %v2235, %v1824
        %v2250 = vmul.f32 %v2236, %v1825
        %v2251 = vmul.f32 %v2237, %v1826
        %v2252 = vmul.f32 %v2238, %v1827
        %v2253 = vmul.f32 %v2239, %v1828
        %v2254 = vmul.f32 %v2240, %v1829
        %v2255 = vmul.f32 %v2241, %v1830
        %v2256 = vmul.f32 %v2242, %v1831
        %v2257 = vmul.f32 %v2228, %v1832
        %v2258 = vmul.f32 %v2230, %v1833
        %v2259 = vmul.f32 %v2231, %v1834
        %v2260 = vmul.f32 %v2232, %v1835
        %v2261 = vmul.f32 %v2233, %v1836
        %v2262 = vmul.f32 %v2234, %v1837
        %v2263 = vmul.f32 %v2235, %v1838
        %v2264 = vmul.f32 %v2236, %v1839
        %v2265 = vmul.f32 %v2237, %v1840
        %v2266 = vmul.f32 %v2238, %v1841
        %v2267 = vmul.f32 %v2239, %v1842
        %v2268 = vmul.f32 %v2240, %v1843
        %v2269 = vmul.f32 %v2241, %v1844
        %v2270 = vmul.f32 %v2242, %v1845
        %v2271 = vmul.f32 %v2228, %v1846
        %v2272 = vmul.f32 %v2230, %v1847
        %v2273 = vmul.f32 %v2231, %v1848
        %v2274 = vmul.f32 %v2232, %v1849
        %v2275 = vmul.f32 %v2233, %v1850
        %v2276 = vmul.f32 %v2234, %v1851
        %v2277 = vmul.f32 %v2235, %v1852
        %v2278 = vmul.f32 %v2236, %v1853
        %v2279 = vmul.f32 %v2237, %v1854
        %v2280 = vmul.f32 %v2238, %v1855
        %v2281 = vmul.f32 %v2239, %v1856
        %v2282 = vmul.f32 %v2240, %v1857
        %v2283 = vmul.f32 %v2241, %v1858
        %v2284 = vmul.f32 %v2242, %v1859
        %v2285 = vmul.f32 %v2228, %v1860
        %v2286 = vmul.f32 %v2230, %v1861
        %v2287 = vmul.f32 %v2231, %v1862
        %v2288 = vmul.f32 %v2232, %v1863
        %v2289 = vmul.f32 %v2233, %v1864
        %v2290 = vmul.f32 %v2234, %v1865
        %v2291 = vmul.f32 %v2235, %v1866
        %v2292 = vmul.f32 %v2236, %v1867
        %v2293 = vmul.f32 %v2237, %v1868
        %v2294 = vmul.f32 %v2238, %v1869
        %v2295 = vmul.f32 %v2239, %v1870
        %v2296 = vmul.f32 %v2240, %v1871
        %v2297 = vmul.f32 %v2241, %v1872
        %v2298 = vmul.f32 %v2242, %v1873
        %v2299 = vadd.f32 %v2243, %v2245
        %v2300 = vadd.f32 %v2299, %v2247
        %v2301 = vadd.f32 %v2300, %v2249
        %v2302 = vadd.f32 %v2301, %v2251
        %v2303 = vadd.f32 %v2302, %v2253
        %v2304 = vsel %vm812, %v2255, 0.0
        %v2305 = vadd.f32 %v2303, %v2304
        %v2306 = vrot.slane %v2305, 4
        %v2307 = vadd.f32 %v2305, %v2306
        %v2308 = vrot.slane %v2307, 2
        %v2309 = vadd.f32 %v2307, %v2308
        %v2310 = vrot.slane %v2309, 1
        %v2311 = vadd.f32 %v2309, %v2310
        %v2312 = vadd.f32 %v2244, %v2246
        %v2313 = vadd.f32 %v2312, %v2248
        %v2314 = vadd.f32 %v2313, %v2250
        %v2315 = vadd.f32 %v2314, %v2252
        %v2316 = vadd.f32 %v2315, %v2254
        %v2317 = vsel %vm812, %v2256, 0.0
        %v2318 = vadd.f32 %v2316, %v2317
        %v2319 = vrot.slane %v2318, 4
        %v2320 = vadd.f32 %v2318, %v2319
        %v2321 = vrot.slane %v2320, 2
        %v2322 = vadd.f32 %v2320, %v2321
        %v2323 = vrot.slane %v2322, 1
        %v2324 = vadd.f32 %v2322, %v2323
        %v2325 = vadd.f32 %v2257, %v2259
        %v2326 = vadd.f32 %v2325, %v2261
        %v2327 = vadd.f32 %v2326, %v2263
        %v2328 = vadd.f32 %v2327, %v2265
        %v2329 = vadd.f32 %v2328, %v2267
        %v2330 = vsel %vm812, %v2269, 0.0
        %v2331 = vadd.f32 %v2329, %v2330
        %v2332 = vrot.slane %v2331, 4
        %v2333 = vadd.f32 %v2331, %v2332
        %v2334 = vrot.slane %v2333, 2
        %v2335 = vadd.f32 %v2333, %v2334
        %v2336 = vrot.slane %v2335, 1
        %v2337 = vadd.f32 %v2335, %v2336
        %v2338 = vadd.f32 %v2258, %v2260
        %v2339 = vadd.f32 %v2338, %v2262
        %v2340 = vadd.f32 %v2339, %v2264
        %v2341 = vadd.f32 %v2340, %v2266
        %v2342 = vadd.f32 %v2341, %v2268
        %v2343 = vsel %vm812, %v2270, 0.0
        %v2344 = vadd.f32 %v2342, %v2343
        %v2345 = vrot.slane %v2344, 4
        %v2346 = vadd.f32 %v2344, %v2345
        %v2347 = vrot.slane %v2346, 2
        %v2348 = vadd.f32 %v2346, %v2347
        %v2349 = vrot.slane %v2348, 1
        %v2350 = vadd.f32 %v2348, %v2349
        %v2351 = vadd.f32 %v2271, %v2273
        %v2352 = vadd.f32 %v2351, %v2275
        %v2353 = vadd.f32 %v2352, %v2277
        %v2354 = vadd.f32 %v2353, %v2279
        %v2355 = vadd.f32 %v2354, %v2281
        %v2356 = vsel %vm812, %v2283, 0.0
        %v2357 = vadd.f32 %v2355, %v2356
        %v2358 = vrot.slane %v2357, 4
        %v2359 = vadd.f32 %v2357, %v2358
        %v2360 = vrot.slane %v2359, 2
        %v2361 = vadd.f32 %v2359, %v2360
        %v2362 = vrot.slane %v2361, 1
        %v2363 = vadd.f32 %v2361, %v2362
        %v2364 = vadd.f32 %v2272, %v2274
        %v2365 = vadd.f32 %v2364, %v2276
        %v2366 = vadd.f32 %v2365, %v2278
        %v2367 = vadd.f32 %v2366, %v2280
        %v2368 = vadd.f32 %v2367, %v2282
        %v2369 = vsel %vm812, %v2284, 0.0
        %v2370 = vadd.f32 %v2368, %v2369
        %v2371 = vrot.slane %v2370, 4
        %v2372 = vadd.f32 %v2370, %v2371
        %v2373 = vrot.slane %v2372, 2
        %v2374 = vadd.f32 %v2372, %v2373
        %v2375 = vrot.slane %v2374, 1
        %v2376 = vadd.f32 %v2374, %v2375
        %v2377 = vadd.f32 %v2285, %v2287
        %v2378 = vadd.f32 %v2377, %v2289
        %v2379 = vadd.f32 %v2378, %v2291
        %v2380 = vadd.f32 %v2379, %v2293
        %v2381 = vadd.f32 %v2380, %v2295
        %v2382 = vsel %vm812, %v2297, 0.0
        %v2383 = vadd.f32 %v2381, %v2382
        %v2384 = vrot.slane %v2383, 4
        %v2385 = vadd.f32 %v2383, %v2384
        %v2386 = vrot.slane %v2385, 2
        %v2387 = vadd.f32 %v2385, %v2386
        %v2388 = vrot.slane %v2387, 1
        %v2389 = vadd.f32 %v2387, %v2388
        %v2390 = vadd.f32 %v2286, %v2288
        %v2391 = vadd.f32 %v2390, %v2290
        %v2392 = vadd.f32 %v2391, %v2292
        %v2393 = vadd.f32 %v2392, %v2294
        %v2394 = vadd.f32 %v2393, %v2296
        %v2395 = vsel %vm812, %v2298, 0.0
        %v2396 = vadd.f32 %v2394, %v2395
        %v2397 = vrot.slane %v2396, 4
        %v2398 = vadd.f32 %v2396, %v2397
        %v2399 = vrot.slane %v2398, 2
        %v2400 = vadd.f32 %v2398, %v2399
        %v2401 = vrot.slane %v2400, 1
        %v2402 = vadd.f32 %v2400, %v2401
        %s2403 = scalar_lea.vmem %s379, 1344
        %v2404 = vld [vmem:[%s2403] sm:$0xff]
        %v2405 = vld [vmem:[%s2403 + $0x8] sm:$0xff]
        %v2406 = vld [vmem:[%s2403 + $0x10] sm:$0xff]
        %v2407 = vld [vmem:[%s2403 + $0x18] sm:$0xff]
        %v2408 = vld [vmem:[%s2403 + $0x20] sm:$0xff]
        %v2409 = vld [vmem:[%s2403 + $0x28] sm:$0xff]
        %v2410 = vld [vmem:[%s2403 + $0x30] sm:$0xff]
        %v2411 = vld [vmem:[%s2403 + $0x38] sm:$0xff]
        %v2412 = vld [vmem:[%s2403 + $0x40] sm:$0xff]
        %v2413 = vld [vmem:[%s2403 + $0x48] sm:$0xff]
        %v2414 = vld [vmem:[%s2403 + $0x50] sm:$0xff]
        %v2415 = vld [vmem:[%s2403 + $0x58] sm:$0xff]
        %v2416 = vld [vmem:[%s2403 + $0x60] sm:$0x1]
        %v2417 = vld [vmem:[%s2403 + $0x68] sm:$0x1]
        %v2418 = vld [vmem:[%s2403 + $0x70] sm:$0xff]
        %v2419 = vld [vmem:[%s2403 + $0x78] sm:$0xff]
        %v2420 = vld [vmem:[%s2403 + $0x80] sm:$0xff]
        %v2421 = vld [vmem:[%s2403 + $0x88] sm:$0xff]
        %v2422 = vld [vmem:[%s2403 + $0x90] sm:$0xff]
        %v2423 = vld [vmem:[%s2403 + $0x98] sm:$0xff]
        %v2424 = vld [vmem:[%s2403 + $0xa0] sm:$0xff]
        %v2425 = vld [vmem:[%s2403 + $0xa8] sm:$0xff]
        %v2426 = vld [vmem:[%s2403 + $0xb0] sm:$0xff]
        %v2427 = vld [vmem:[%s2403 + $0xb8] sm:$0xff]
        %v2428 = vld [vmem:[%s2403 + $0xc0] sm:$0xff]
        %v2429 = vld [vmem:[%s2403 + $0xc8] sm:$0xff]
        %v2430 = vld [vmem:[%s2403 + $0xd0] sm:$0x1]
        %v2431 = vld [vmem:[%s2403 + $0xd8] sm:$0x1]
        %v2432 = vld [vmem:[%s2403 + $0xe0] sm:$0xff]
        %v2433 = vld [vmem:[%s2403 + $0xe8] sm:$0xff]
        %v2434 = vld [vmem:[%s2403 + $0xf0] sm:$0xff]
        %v2435 = vld [vmem:[%s2403 + $0xf8] sm:$0xff]
        %v2436 = vld [vmem:[%s2403 + $0x100] sm:$0xff]
        %v2437 = vld [vmem:[%s2403 + $0x108] sm:$0xff]
        %v2438 = vld [vmem:[%s2403 + $0x110] sm:$0xff]
        %v2439 = vld [vmem:[%s2403 + $0x118] sm:$0xff]
        %v2440 = vld [vmem:[%s2403 + $0x120] sm:$0xff]
        %v2441 = vld [vmem:[%s2403 + $0x128] sm:$0xff]
        %v2442 = vld [vmem:[%s2403 + $0x130] sm:$0xff]
        %v2443 = vld [vmem:[%s2403 + $0x138] sm:$0xff]
        %v2444 = vld [vmem:[%s2403 + $0x140] sm:$0x1]
        %v2445 = vld [vmem:[%s2403 + $0x148] sm:$0x1]
        %v2446 = vld [vmem:[%s2403 + $0x150] sm:$0xff]
        %v2447 = vld [vmem:[%s2403 + $0x158] sm:$0xff]
        %v2448 = vld [vmem:[%s2403 + $0x160] sm:$0xff]
        %v2449 = vld [vmem:[%s2403 + $0x168] sm:$0xff]
        %v2450 = vld [vmem:[%s2403 + $0x170] sm:$0xff]
        %v2451 = vld [vmem:[%s2403 + $0x178] sm:$0xff]
        %v2452 = vld [vmem:[%s2403 + $0x180] sm:$0xff]
        %v2453 = vld [vmem:[%s2403 + $0x188] sm:$0xff]
        %v2454 = vld [vmem:[%s2403 + $0x190] sm:$0xff]
        %v2455 = vld [vmem:[%s2403 + $0x198] sm:$0xff]
        %v2456 = vld [vmem:[%s2403 + $0x1a0] sm:$0xff]
        %v2457 = vld [vmem:[%s2403 + $0x1a8] sm:$0xff]
        %v2458 = vld [vmem:[%s2403 + $0x1b0] sm:$0x1]
        %v2459 = vld [vmem:[%s2403 + $0x1b8] sm:$0x1]
        %s2460 = scalar_lea.vmem %s384, 1344
        %v2461 = vld [vmem:[%s2460] sm:$0xff]
        %v2462 = vld [vmem:[%s2460 + $0x8] sm:$0xff]
        %v2463 = vld [vmem:[%s2460 + $0x10] sm:$0xff]
        %v2464 = vld [vmem:[%s2460 + $0x18] sm:$0xff]
        %v2465 = vld [vmem:[%s2460 + $0x20] sm:$0xff]
        %v2466 = vld [vmem:[%s2460 + $0x28] sm:$0xff]
        %v2467 = vld [vmem:[%s2460 + $0x30] sm:$0xff]
        %v2468 = vld [vmem:[%s2460 + $0x38] sm:$0xff]
        %v2469 = vld [vmem:[%s2460 + $0x40] sm:$0xff]
        %v2470 = vld [vmem:[%s2460 + $0x48] sm:$0xff]
        %v2471 = vld [vmem:[%s2460 + $0x50] sm:$0xff]
        %v2472 = vld [vmem:[%s2460 + $0x58] sm:$0xff]
        %v2473 = vld [vmem:[%s2460 + $0x60] sm:$0x1]
        %v2474 = vld [vmem:[%s2460 + $0x68] sm:$0x1]
        %v2475 = vld [vmem:[%s2460 + $0x70] sm:$0xff]
        %v2476 = vld [vmem:[%s2460 + $0x78] sm:$0xff]
        %v2477 = vld [vmem:[%s2460 + $0x80] sm:$0xff]
        %v2478 = vld [vmem:[%s2460 + $0x88] sm:$0xff]
        %v2479 = vld [vmem:[%s2460 + $0x90] sm:$0xff]
        %v2480 = vld [vmem:[%s2460 + $0x98] sm:$0xff]
        %v2481 = vld [vmem:[%s2460 + $0xa0] sm:$0xff]
        %v2482 = vld [vmem:[%s2460 + $0xa8] sm:$0xff]
        %v2483 = vld [vmem:[%s2460 + $0xb0] sm:$0xff]
        %v2484 = vld [vmem:[%s2460 + $0xb8] sm:$0xff]
        %v2485 = vld [vmem:[%s2460 + $0xc0] sm:$0xff]
        %v2486 = vld [vmem:[%s2460 + $0xc8] sm:$0xff]
        %v2487 = vld [vmem:[%s2460 + $0xd0] sm:$0x1]
        %v2488 = vld [vmem:[%s2460 + $0xd8] sm:$0x1]
        %v2489 = vld [vmem:[%s2460 + $0xe0] sm:$0xff]
        %v2490 = vld [vmem:[%s2460 + $0xe8] sm:$0xff]
        %v2491 = vld [vmem:[%s2460 + $0xf0] sm:$0xff]
        %v2492 = vld [vmem:[%s2460 + $0xf8] sm:$0xff]
        %v2493 = vld [vmem:[%s2460 + $0x100] sm:$0xff]
        %v2494 = vld [vmem:[%s2460 + $0x108] sm:$0xff]
        %v2495 = vld [vmem:[%s2460 + $0x110] sm:$0xff]
        %v2496 = vld [vmem:[%s2460 + $0x118] sm:$0xff]
        %v2497 = vld [vmem:[%s2460 + $0x120] sm:$0xff]
        %v2498 = vld [vmem:[%s2460 + $0x128] sm:$0xff]
        %v2499 = vld [vmem:[%s2460 + $0x130] sm:$0xff]
        %v2500 = vld [vmem:[%s2460 + $0x138] sm:$0xff]
        %v2501 = vld [vmem:[%s2460 + $0x140] sm:$0x1]
        %v2502 = vld [vmem:[%s2460 + $0x148] sm:$0x1]
        %v2503 = vld [vmem:[%s2460 + $0x150] sm:$0xff]
        %v2504 = vld [vmem:[%s2460 + $0x158] sm:$0xff]
        %v2505 = vld [vmem:[%s2460 + $0x160] sm:$0xff]
        %v2506 = vld [vmem:[%s2460 + $0x168] sm:$0xff]
        %v2507 = vld [vmem:[%s2460 + $0x170] sm:$0xff]
        %v2508 = vld [vmem:[%s2460 + $0x178] sm:$0xff]
        %v2509 = vld [vmem:[%s2460 + $0x180] sm:$0xff]
        %v2510 = vld [vmem:[%s2460 + $0x188] sm:$0xff]
        %v2511 = vld [vmem:[%s2460 + $0x190] sm:$0xff]
        %v2512 = vld [vmem:[%s2460 + $0x198] sm:$0xff]
        %v2513 = vld [vmem:[%s2460 + $0x1a0] sm:$0xff]
        %v2514 = vld [vmem:[%s2460 + $0x1a8] sm:$0xff]
        %v2515 = vld [vmem:[%s2460 + $0x1b0] sm:$0x1]
        %v2516 = vld [vmem:[%s2460 + $0x1b8] sm:$0x1]
        %v2517 = vmul.f32 %v406, %v1225
        %v2518 = vmul.f32 %v407, %v408
        %v2521 = vrot.slane %v2517, 4
        %v2522 = vrot.slane %v2518, 4
        %v2525 = vsel %vm582, %v2521, 0.0
        %v2526 = vrot.slane %v2525, 4
        %v2527 = vadd.f32 %v2525, %v2526
        %v2528 = vrot.slane %v2527, 2
        %v2529 = vadd.f32 %v2527, %v2528
        %v2530 = vrot.slane %v2529, 1
        %v2531 = vadd.f32 %v2529, %v2530
        %v2532 = vsel %vm582, %v2522, 0.0
        %v2533 = vrot.slane %v2532, 4
        %v2534 = vadd.f32 %v2532, %v2533
        %v2535 = vrot.slane %v2534, 2
        %v2536 = vadd.f32 %v2534, %v2535
        %v2537 = vrot.slane %v2536, 1
        %v2538 = vadd.f32 %v2536, %v2537
        %v2539 = vcombine.high %v406, %v407
        %v2541 = vunpack.c.l.s4 1966171168
        %v2542 = vunpack.c.0.s8 %v2541
        %v2543 = vlaneseq
        %v2544 = vshrl.u32 %v2543, 7
        %v2545 = vsub.s32 %v2542, %v2544
        %v2546 = vrot.slane %v2539, %v2545
        %v2547 = vcombine.high %v2546, %v2546
        %v2549 = vunpack.c.l.s4 1966171168
        %v2550 = vunpack.c.0.s8 %v2549
        %v2551 = vlaneseq
        %v2552 = vshrl.u32 %v2551, 7
        %v2553 = vsub.s32 %v2550, %v2552
        %v2554 = vrot.slane %v2546, %v2553
        %v2556 = vunpack.c.l.s4 1966171168
        %v2557 = vunpack.c.0.s8 %v2556
        %v2558 = vlaneseq
        %v2559 = vshrl.u32 %v2558, 7
        %v2560 = vsub.s32 %v2557, %v2559
        %v2561 = vrot.slane %v2547, %v2560
        %v2562 = vcombine.high %v2554, %v2554
        %v2563 = vcombine.high %v2561, %v2561
        %v2564 = vsub.f32 %v2404, %v409
        %v2565 = vsub.f32 %v2405, %v410
        %v2566 = vsub.f32 %v2406, %v411
        %v2567 = vsub.f32 %v2407, %v412
        %v2568 = vsub.f32 %v2408, %v413
        %v2569 = vsub.f32 %v2409, %v414
        %v2570 = vsub.f32 %v2410, %v415
        %v2571 = vsub.f32 %v2411, %v416
        %v2572 = vsub.f32 %v2412, %v417
        %v2573 = vsub.f32 %v2413, %v418
        %v2574 = vsub.f32 %v2414, %v419
        %v2575 = vsub.f32 %v2415, %v420
        %v2576 = vsub.f32 %v2416, %v421
        %v2577 = vsub.f32 %v2417, %v422
        %v2578 = vsub.f32 %v2418, %v423
        %v2579 = vsub.f32 %v2419, %v424
        %v2580 = vsub.f32 %v2420, %v425
        %v2581 = vsub.f32 %v2421, %v426
        %v2582 = vsub.f32 %v2422, %v427
        %v2583 = vsub.f32 %v2423, %v428
        %v2584 = vsub.f32 %v2424, %v429
        %v2585 = vsub.f32 %v2425, %v430
        %v2586 = vsub.f32 %v2426, %v431
        %v2587 = vsub.f32 %v2427, %v432
        %v2588 = vsub.f32 %v2428, %v433
        %v2589 = vsub.f32 %v2429, %v434
        %v2590 = vsub.f32 %v2430, %v435
        %v2591 = vsub.f32 %v2431, %v436
        %v2592 = vsub.f32 %v2432, %v437
        %v2593 = vsub.f32 %v2433, %v438
        %v2594 = vsub.f32 %v2434, %v439
        %v2595 = vsub.f32 %v2435, %v440
        %v2596 = vsub.f32 %v2436, %v441
        %v2597 = vsub.f32 %v2437, %v442
        %v2598 = vsub.f32 %v2438, %v443
        %v2599 = vsub.f32 %v2439, %v444
        %v2600 = vsub.f32 %v2440, %v445
        %v2601 = vsub.f32 %v2441, %v446
        %v2602 = vsub.f32 %v2442, %v447
        %v2603 = vsub.f32 %v2443, %v448
        %v2604 = vsub.f32 %v2444, %v449
        %v2605 = vsub.f32 %v2445, %v450
        %v2606 = vsub.f32 %v2446, %v451
        %v2607 = vsub.f32 %v2447, %v452
        %v2608 = vsub.f32 %v2448, %v453
        %v2609 = vsub.f32 %v2449, %v454
        %v2610 = vsub.f32 %v2450, %v455
        %v2611 = vsub.f32 %v2451, %v456
        %v2612 = vsub.f32 %v2452, %v457
        %v2613 = vsub.f32 %v2453, %v458
        %v2614 = vsub.f32 %v2454, %v459
        %v2615 = vsub.f32 %v2455, %v460
        %v2616 = vsub.f32 %v2456, %v461
        %v2617 = vsub.f32 %v2457, %v462
        %v2618 = vsub.f32 %v2458, %v463
        %v2619 = vsub.f32 %v2459, %v464
        %v2620 = vlaneseq
        %v2621 = vshrl.u32 %v2620, 7
        %v2622 = vsub.s32 0, %v2621
        %v2623 = vrot.slane %v2554, %v2622
        %v2624 = vlaneseq
        %v2625 = vshrl.u32 %v2624, 7
        %v2626 = vsub.s32 1, %v2625
        %v2627 = vrot.slane %v2554, %v2626
        %v2628 = vlaneseq
        %v2629 = vshrl.u32 %v2628, 7
        %v2630 = vsub.s32 0, %v2629
        %v2631 = vrot.slane %v2561, %v2630
        %v2632 = vlaneseq
        %v2633 = vshrl.u32 %v2632, 7
        %v2634 = vsub.s32 1, %v2633
        %v2635 = vrot.slane %v2561, %v2634
        %v2636 = vlaneseq
        %v2637 = vshrl.u32 %v2636, 7
        %v2638 = vsub.s32 0, %v2637
        %v2639 = vrot.slane %v2562, %v2638
        %v2640 = vlaneseq
        %v2641 = vshrl.u32 %v2640, 7
        %v2642 = vsub.s32 1, %v2641
        %v2643 = vrot.slane %v2562, %v2642
        %v2644 = vlaneseq
        %v2645 = vshrl.u32 %v2644, 7
        %v2646 = vsub.s32 0, %v2645
        %v2647 = vrot.slane %v2563, %v2646
        %v2648 = vlaneseq
        %v2649 = vshrl.u32 %v2648, 7
        %v2650 = vsub.s32 1, %v2649
        %v2651 = vrot.slane %v2563, %v2650
        %v2660 = vmul.f32 %v2623, %v2564
        %v2661 = vmul.f32 %v2627, %v2565
        %v2662 = vmul.f32 %v2623, %v2566
        %v2663 = vmul.f32 %v2627, %v2567
        %v2664 = vmul.f32 %v2623, %v2568
        %v2665 = vmul.f32 %v2627, %v2569
        %v2666 = vmul.f32 %v2623, %v2570
        %v2667 = vmul.f32 %v2627, %v2571
        %v2668 = vmul.f32 %v2623, %v2572
        %v2669 = vmul.f32 %v2627, %v2573
        %v2670 = vmul.f32 %v2623, %v2574
        %v2671 = vmul.f32 %v2627, %v2575
        %v2672 = vmul.f32 %v2623, %v2576
        %v2673 = vmul.f32 %v2627, %v2577
        %v2674 = vmul.f32 %v2631, %v2578
        %v2675 = vmul.f32 %v2635, %v2579
        %v2676 = vmul.f32 %v2631, %v2580
        %v2677 = vmul.f32 %v2635, %v2581
        %v2678 = vmul.f32 %v2631, %v2582
        %v2679 = vmul.f32 %v2635, %v2583
        %v2680 = vmul.f32 %v2631, %v2584
        %v2681 = vmul.f32 %v2635, %v2585
        %v2682 = vmul.f32 %v2631, %v2586
        %v2683 = vmul.f32 %v2635, %v2587
        %v2684 = vmul.f32 %v2631, %v2588
        %v2685 = vmul.f32 %v2635, %v2589
        %v2686 = vmul.f32 %v2631, %v2590
        %v2687 = vmul.f32 %v2635, %v2591
        %v2688 = vmul.f32 %v2639, %v2592
        %v2689 = vmul.f32 %v2643, %v2593
        %v2690 = vmul.f32 %v2639, %v2594
        %v2691 = vmul.f32 %v2643, %v2595
        %v2692 = vmul.f32 %v2639, %v2596
        %v2693 = vmul.f32 %v2643, %v2597
        %v2694 = vmul.f32 %v2639, %v2598
        %v2695 = vmul.f32 %v2643, %v2599
        %v2696 = vmul.f32 %v2639, %v2600
        %v2697 = vmul.f32 %v2643, %v2601
        %v2698 = vmul.f32 %v2639, %v2602
        %v2699 = vmul.f32 %v2643, %v2603
        %v2700 = vmul.f32 %v2639, %v2604
        %v2701 = vmul.f32 %v2643, %v2605
        %v2702 = vmul.f32 %v2647, %v2606
        %v2703 = vmul.f32 %v2651, %v2607
        %v2704 = vmul.f32 %v2647, %v2608
        %v2705 = vmul.f32 %v2651, %v2609
        %v2706 = vmul.f32 %v2647, %v2610
        %v2707 = vmul.f32 %v2651, %v2611
        %v2708 = vmul.f32 %v2647, %v2612
        %v2709 = vmul.f32 %v2651, %v2613
        %v2710 = vmul.f32 %v2647, %v2614
        %v2711 = vmul.f32 %v2651, %v2615
        %v2712 = vmul.f32 %v2647, %v2616
        %v2713 = vmul.f32 %v2651, %v2617
        %v2714 = vmul.f32 %v2647, %v2618
        %v2715 = vmul.f32 %v2651, %v2619
        %v2716 = vadd.f32 %v2660, %v2674
        %v2717 = vadd.f32 %v2716, %v2688
        %v2718 = vadd.f32 %v2717, %v2702
        %v2719 = vadd.f32 %v2661, %v2675
        %v2720 = vadd.f32 %v2719, %v2689
        %v2721 = vadd.f32 %v2720, %v2703
        %v2722 = vadd.f32 %v2662, %v2676
        %v2723 = vadd.f32 %v2722, %v2690
        %v2724 = vadd.f32 %v2723, %v2704
        %v2725 = vadd.f32 %v2663, %v2677
        %v2726 = vadd.f32 %v2725, %v2691
        %v2727 = vadd.f32 %v2726, %v2705
        %v2728 = vadd.f32 %v2664, %v2678
        %v2729 = vadd.f32 %v2728, %v2692
        %v2730 = vadd.f32 %v2729, %v2706
        %v2731 = vadd.f32 %v2665, %v2679
        %v2732 = vadd.f32 %v2731, %v2693
        %v2733 = vadd.f32 %v2732, %v2707
        %v2734 = vadd.f32 %v2666, %v2680
        %v2735 = vadd.f32 %v2734, %v2694
        %v2736 = vadd.f32 %v2735, %v2708
        %v2737 = vadd.f32 %v2667, %v2681
        %v2738 = vadd.f32 %v2737, %v2695
        %v2739 = vadd.f32 %v2738, %v2709
        %v2740 = vadd.f32 %v2668, %v2682
        %v2741 = vadd.f32 %v2740, %v2696
        %v2742 = vadd.f32 %v2741, %v2710
        %v2743 = vadd.f32 %v2669, %v2683
        %v2744 = vadd.f32 %v2743, %v2697
        %v2745 = vadd.f32 %v2744, %v2711
        %v2746 = vadd.f32 %v2670, %v2684
        %v2747 = vadd.f32 %v2746, %v2698
        %v2748 = vadd.f32 %v2747, %v2712
        %v2749 = vadd.f32 %v2671, %v2685
        %v2750 = vadd.f32 %v2749, %v2699
        %v2751 = vadd.f32 %v2750, %v2713
        %v2752 = vsel %vm812, %v2672, 0.0
        %v2753 = vsel %vm812, %v2686, 0.0
        %v2754 = vadd.f32 %v2752, %v2753
        %v2755 = vsel %vm812, %v2700, 0.0
        %v2756 = vadd.f32 %v2754, %v2755
        %v2757 = vsel %vm812, %v2714, 0.0
        %v2758 = vadd.f32 %v2756, %v2757
        %v2759 = vsel %vm812, %v2673, 0.0
        %v2760 = vsel %vm812, %v2687, 0.0
        %v2761 = vadd.f32 %v2759, %v2760
        %v2762 = vsel %vm812, %v2701, 0.0
        %v2763 = vadd.f32 %v2761, %v2762
        %v2764 = vsel %vm812, %v2715, 0.0
        %v2765 = vadd.f32 %v2763, %v2764
        %v2766 = vadd.f32 %v2718, %v2531
        %v2767 = vadd.f32 %v2721, %v2538
        %v2768 = vadd.f32 %v2724, %v2531
        %v2769 = vadd.f32 %v2727, %v2538
        %v2770 = vadd.f32 %v2730, %v2531
        %v2771 = vadd.f32 %v2733, %v2538
        %v2772 = vadd.f32 %v2736, %v2531
        %v2773 = vadd.f32 %v2739, %v2538
        %v2774 = vadd.f32 %v2742, %v2531
        %v2775 = vadd.f32 %v2745, %v2538
        %v2776 = vadd.f32 %v2748, %v2531
        %v2777 = vadd.f32 %v2751, %v2538
        %v2778 = vadd.f32 %v2758, %v2531
        %v2779 = vadd.f32 %v2765, %v2538
        %v2780 = vmax.f32 %v2766, %v2770
        %v2781 = vmax.f32 %v2768, %v2772
        %v2782 = vmax.f32 %v2780, %v2774
        %v2783 = vmax.f32 %v2781, %v2776
        %v2784 = vsel %vm812, %v2778, -inf
        %v2785 = vmax.f32 %v2782, %v2784
        %v2786 = vmax.f32 %v2785, %v2783
        %v2787 = vrot.slane %v2786, 4
        %v2788 = vmax.f32 %v2786, %v2787
        %v2789 = vrot.slane %v2788, 2
        %v2790 = vmax.f32 %v2788, %v2789
        %v2791 = vrot.slane %v2790, 1
        %v2792 = vmax.f32 %v2790, %v2791
        %v2793 = vmax.f32 %v2767, %v2771
        %v2794 = vmax.f32 %v2769, %v2773
        %v2795 = vmax.f32 %v2793, %v2775
        %v2796 = vmax.f32 %v2794, %v2777
        %v2797 = vsel %vm812, %v2779, -inf
        %v2798 = vmax.f32 %v2795, %v2797
        %v2799 = vmax.f32 %v2798, %v2796
        %v2800 = vrot.slane %v2799, 4
        %v2801 = vmax.f32 %v2799, %v2800
        %v2802 = vrot.slane %v2801, 2
        %v2803 = vmax.f32 %v2801, %v2802
        %v2804 = vrot.slane %v2803, 1
        %v2805 = vmax.f32 %v2803, %v2804
        %v2806 = vsub.f32 %v2766, %v2792
        %v2807 = vsub.f32 %v2767, %v2805
        %v2808 = vsub.f32 %v2768, %v2792
        %v2809 = vsub.f32 %v2769, %v2805
        %v2810 = vsub.f32 %v2770, %v2792
        %v2811 = vsub.f32 %v2771, %v2805
        %v2812 = vsub.f32 %v2772, %v2792
        %v2813 = vsub.f32 %v2773, %v2805
        %v2814 = vsub.f32 %v2774, %v2792
        %v2815 = vsub.f32 %v2775, %v2805
        %v2816 = vsub.f32 %v2776, %v2792
        %v2817 = vsub.f32 %v2777, %v2805
        %v2818 = vsub.f32 %v2778, %v2792
        %v2819 = vsub.f32 %v2779, %v2805
        %v2820 = vmul.f32 %v2806, 1.442695
        %v2821 = vpow.pop %v2820
        %v2822 = vmul.f32 %v2807, 1.442695
        %v2823 = vpow.pop %v2822
        %v2824 = vmul.f32 %v2808, 1.442695
        %v2825 = vpow.pop %v2824
        %v2826 = vmul.f32 %v2809, 1.442695
        %v2827 = vpow.pop %v2826
        %v2828 = vmul.f32 %v2810, 1.442695
        %v2829 = vpow.pop %v2828
        %v2830 = vmul.f32 %v2811, 1.442695
        %v2831 = vpow.pop %v2830
        %v2832 = vmul.f32 %v2812, 1.442695
        %v2833 = vpow.pop %v2832
        %v2834 = vmul.f32 %v2813, 1.442695
        %v2835 = vpow.pop %v2834
        %v2836 = vmul.f32 %v2814, 1.442695
        %v2837 = vpow.pop %v2836
        %v2838 = vmul.f32 %v2815, 1.442695
        %v2839 = vpow.pop %v2838
        %v2840 = vmul.f32 %v2816, 1.442695
        %v2841 = vpow.pop %v2840
        %v2842 = vmul.f32 %v2817, 1.442695
        %v2843 = vpow.pop %v2842
        %v2844 = vmul.f32 %v2818, 1.442695
        %v2845 = vpow.pop %v2844
        %v2846 = vmul.f32 %v2819, 1.442695
        %v2847 = vpow.pop %v2846
        %v2848 = vadd.f32 %v2821, %v2825
        %v2849 = vadd.f32 %v2848, %v2829
        %v2850 = vadd.f32 %v2849, %v2833
        %v2851 = vadd.f32 %v2850, %v2837
        %v2852 = vadd.f32 %v2851, %v2841
        %v2853 = vsel %vm812, %v2845, 0.0
        %v2854 = vadd.f32 %v2852, %v2853
        %v2855 = vrot.slane %v2854, 4
        %v2856 = vadd.f32 %v2854, %v2855
        %v2857 = vrot.slane %v2856, 2
        %v2858 = vadd.f32 %v2856, %v2857
        %v2859 = vrot.slane %v2858, 1
        %v2860 = vadd.f32 %v2858, %v2859
        %v2861 = vadd.f32 %v2823, %v2827
        %v2862 = vadd.f32 %v2861, %v2831
        %v2863 = vadd.f32 %v2862, %v2835
        %v2864 = vadd.f32 %v2863, %v2839
        %v2865 = vadd.f32 %v2864, %v2843
        %v2866 = vsel %vm812, %v2847, 0.0
        %v2867 = vadd.f32 %v2865, %v2866
        %v2868 = vrot.slane %v2867, 4
        %v2869 = vadd.f32 %v2867, %v2868
        %v2870 = vrot.slane %v2869, 2
        %v2871 = vadd.f32 %v2869, %v2870
        %v2872 = vrot.slane %v2871, 1
        %v2873 = vadd.f32 %v2871, %v2872
        %v2874 = vrcp.pop %v2860
        %v2875 = vmul.f32 %v2821, %v2874
        %v2876 = vrcp.pop %v2873
        %v2877 = vmul.f32 %v2823, %v2876
        %v2878 = vmul.f32 %v2825, %v2874
        %v2879 = vmul.f32 %v2827, %v2876
        %v2880 = vmul.f32 %v2829, %v2874
        %v2881 = vmul.f32 %v2831, %v2876
        %v2882 = vmul.f32 %v2833, %v2874
        %v2883 = vmul.f32 %v2835, %v2876
        %v2884 = vmul.f32 %v2837, %v2874
        %v2885 = vmul.f32 %v2839, %v2876
        %v2886 = vmul.f32 %v2841, %v2874
        %v2887 = vmul.f32 %v2843, %v2876
        %v2888 = vmul.f32 %v2845, %v2874
        %v2889 = vmul.f32 %v2847, %v2876
        %v2890 = vmul.f32 %v2875, %v2461
        %v2891 = vmul.f32 %v2877, %v2462
        %v2892 = vmul.f32 %v2878, %v2463
        %v2893 = vmul.f32 %v2879, %v2464
        %v2894 = vmul.f32 %v2880, %v2465
        %v2895 = vmul.f32 %v2881, %v2466
        %v2896 = vmul.f32 %v2882, %v2467
        %v2897 = vmul.f32 %v2883, %v2468
        %v2898 = vmul.f32 %v2884, %v2469
        %v2899 = vmul.f32 %v2885, %v2470
        %v2900 = vmul.f32 %v2886, %v2471
        %v2901 = vmul.f32 %v2887, %v2472
        %v2902 = vmul.f32 %v2888, %v2473
        %v2903 = vmul.f32 %v2889, %v2474
        %v2904 = vmul.f32 %v2875, %v2475
        %v2905 = vmul.f32 %v2877, %v2476
        %v2906 = vmul.f32 %v2878, %v2477
        %v2907 = vmul.f32 %v2879, %v2478
        %v2908 = vmul.f32 %v2880, %v2479
        %v2909 = vmul.f32 %v2881, %v2480
        %v2910 = vmul.f32 %v2882, %v2481
        %v2911 = vmul.f32 %v2883, %v2482
        %v2912 = vmul.f32 %v2884, %v2483
        %v2913 = vmul.f32 %v2885, %v2484
        %v2914 = vmul.f32 %v2886, %v2485
        %v2915 = vmul.f32 %v2887, %v2486
        %v2916 = vmul.f32 %v2888, %v2487
        %v2917 = vmul.f32 %v2889, %v2488
        %v2918 = vmul.f32 %v2875, %v2489
        %v2919 = vmul.f32 %v2877, %v2490
        %v2920 = vmul.f32 %v2878, %v2491
        %v2921 = vmul.f32 %v2879, %v2492
        %v2922 = vmul.f32 %v2880, %v2493
        %v2923 = vmul.f32 %v2881, %v2494
        %v2924 = vmul.f32 %v2882, %v2495
        %v2925 = vmul.f32 %v2883, %v2496
        %v2926 = vmul.f32 %v2884, %v2497
        %v2927 = vmul.f32 %v2885, %v2498
        %v2928 = vmul.f32 %v2886, %v2499
        %v2929 = vmul.f32 %v2887, %v2500
        %v2930 = vmul.f32 %v2888, %v2501
        %v2931 = vmul.f32 %v2889, %v2502
        %v2932 = vmul.f32 %v2875, %v2503
        %v2933 = vmul.f32 %v2877, %v2504
        %v2934 = vmul.f32 %v2878, %v2505
        %v2935 = vmul.f32 %v2879, %v2506
        %v2936 = vmul.f32 %v2880, %v2507
        %v2937 = vmul.f32 %v2881, %v2508
        %v2938 = vmul.f32 %v2882, %v2509
        %v2939 = vmul.f32 %v2883, %v2510
        %v2940 = vmul.f32 %v2884, %v2511
        %v2941 = vmul.f32 %v2885, %v2512
        %v2942 = vmul.f32 %v2886, %v2513
        %v2943 = vmul.f32 %v2887, %v2514
        %v2944 = vmul.f32 %v2888, %v2515
        %v2945 = vmul.f32 %v2889, %v2516
        %v2946 = vadd.f32 %v2890, %v2892
        %v2947 = vadd.f32 %v2946, %v2894
        %v2948 = vadd.f32 %v2947, %v2896
        %v2949 = vadd.f32 %v2948, %v2898
        %v2950 = vadd.f32 %v2949, %v2900
        %v2951 = vsel %vm812, %v2902, 0.0
        %v2952 = vadd.f32 %v2950, %v2951
        %v2953 = vrot.slane %v2952, 4
        %v2954 = vadd.f32 %v2952, %v2953
        %v2955 = vrot.slane %v2954, 2
        %v2956 = vadd.f32 %v2954, %v2955
        %v2957 = vrot.slane %v2956, 1
        %v2958 = vadd.f32 %v2956, %v2957
        %v2959 = vadd.f32 %v2891, %v2893
        %v2960 = vadd.f32 %v2959, %v2895
        %v2961 = vadd.f32 %v2960, %v2897
        %v2962 = vadd.f32 %v2961, %v2899
        %v2963 = vadd.f32 %v2962, %v2901
        %v2964 = vsel %vm812, %v2903, 0.0
        %v2965 = vadd.f32 %v2963, %v2964
        %v2966 = vrot.slane %v2965, 4
        %v2967 = vadd.f32 %v2965, %v2966
        %v2968 = vrot.slane %v2967, 2
        %v2969 = vadd.f32 %v2967, %v2968
        %v2970 = vrot.slane %v2969, 1
        %v2971 = vadd.f32 %v2969, %v2970
        %v2972 = vadd.f32 %v2904, %v2906
        %v2973 = vadd.f32 %v2972, %v2908
        %v2974 = vadd.f32 %v2973, %v2910
        %v2975 = vadd.f32 %v2974, %v2912
        %v2976 = vadd.f32 %v2975, %v2914
        %v2977 = vsel %vm812, %v2916, 0.0
        %v2978 = vadd.f32 %v2976, %v2977
        %v2979 = vrot.slane %v2978, 4
        %v2980 = vadd.f32 %v2978, %v2979
        %v2981 = vrot.slane %v2980, 2
        %v2982 = vadd.f32 %v2980, %v2981
        %v2983 = vrot.slane %v2982, 1
        %v2984 = vadd.f32 %v2982, %v2983
        %v2985 = vadd.f32 %v2905, %v2907
        %v2986 = vadd.f32 %v2985, %v2909
        %v2987 = vadd.f32 %v2986, %v2911
        %v2988 = vadd.f32 %v2987, %v2913
        %v2989 = vadd.f32 %v2988, %v2915
        %v2990 = vsel %vm812, %v2917, 0.0
        %v2991 = vadd.f32 %v2989, %v2990
        %v2992 = vrot.slane %v2991, 4
        %v2993 = vadd.f32 %v2991, %v2992
        %v2994 = vrot.slane %v2993, 2
        %v2995 = vadd.f32 %v2993, %v2994
        %v2996 = vrot.slane %v2995, 1
        %v2997 = vadd.f32 %v2995, %v2996
        %v2998 = vadd.f32 %v2918, %v2920
        %v2999 = vadd.f32 %v2998, %v2922
        %v3000 = vadd.f32 %v2999, %v2924
        %v3001 = vadd.f32 %v3000, %v2926
        %v3002 = vadd.f32 %v3001, %v2928
        %v3003 = vsel %vm812, %v2930, 0.0
        %v3004 = vadd.f32 %v3002, %v3003
        %v3005 = vrot.slane %v3004, 4
        %v3006 = vadd.f32 %v3004, %v3005
        %v3007 = vrot.slane %v3006, 2
        %v3008 = vadd.f32 %v3006, %v3007
        %v3009 = vrot.slane %v3008, 1
        %v3010 = vadd.f32 %v3008, %v3009
        %v3011 = vadd.f32 %v2919, %v2921
        %v3012 = vadd.f32 %v3011, %v2923
        %v3013 = vadd.f32 %v3012, %v2925
        %v3014 = vadd.f32 %v3013, %v2927
        %v3015 = vadd.f32 %v3014, %v2929
        %v3016 = vsel %vm812, %v2931, 0.0
        %v3017 = vadd.f32 %v3015, %v3016
        %v3018 = vrot.slane %v3017, 4
        %v3019 = vadd.f32 %v3017, %v3018
        %v3020 = vrot.slane %v3019, 2
        %v3021 = vadd.f32 %v3019, %v3020
        %v3022 = vrot.slane %v3021, 1
        %v3023 = vadd.f32 %v3021, %v3022
        %v3024 = vadd.f32 %v2932, %v2934
        %v3025 = vadd.f32 %v3024, %v2936
        %v3026 = vadd.f32 %v3025, %v2938
        %v3027 = vadd.f32 %v3026, %v2940
        %v3028 = vadd.f32 %v3027, %v2942
        %v3029 = vsel %vm812, %v2944, 0.0
        %v3030 = vadd.f32 %v3028, %v3029
        %v3031 = vrot.slane %v3030, 4
        %v3032 = vadd.f32 %v3030, %v3031
        %v3033 = vrot.slane %v3032, 2
        %v3034 = vadd.f32 %v3032, %v3033
        %v3035 = vrot.slane %v3034, 1
        %v3036 = vadd.f32 %v3034, %v3035
        %v3037 = vadd.f32 %v2933, %v2935
        %v3038 = vadd.f32 %v3037, %v2937
        %v3039 = vadd.f32 %v3038, %v2939
        %v3040 = vadd.f32 %v3039, %v2941
        %v3041 = vadd.f32 %v3040, %v2943
        %v3042 = vsel %vm812, %v2945, 0.0
        %v3043 = vadd.f32 %v3041, %v3042
        %v3044 = vrot.slane %v3043, 4
        %v3045 = vadd.f32 %v3043, %v3044
        %v3046 = vrot.slane %v3045, 2
        %v3047 = vadd.f32 %v3045, %v3046
        %v3048 = vrot.slane %v3047, 1
        %v3049 = vadd.f32 %v3047, %v3048
        %vm3058 = vcmask 1041409
        %v3059 = vsel %vm3058, %v1045, %v1019
        %vm3060 = vcmask 1042434
        %v3061 = vsel %vm3060, %v1071, %v3059
        %vm3062 = vcmask 1043459
        %v3063 = vsel %vm3062, %v1097, %v3061
        %v3064 = vsel %vm3058, %v1058, %v1032
        %v3065 = vsel %vm3060, %v1084, %v3064
        %v3066 = vsel %vm3062, %v1110, %v3065
        %vm3077 = vcmask 1045509
        %v3078 = vsel %vm3077, %v1694, %v1668
        %vm3079 = vcmask 1046534
        %v3080 = vsel %vm3079, %v1720, %v3078
        %vm3081 = vcmask 1047559
        %v3082 = vsel %vm3081, %v1746, %v3080
        %v3083 = vsel %vm3077, %v1707, %v1681
        %v3084 = vsel %vm3079, %v1733, %v3083
        %v3085 = vsel %vm3081, %v1759, %v3084
        %v3096 = vsel %vm3058, %v2337, %v2311
        %v3097 = vsel %vm3060, %v2363, %v3096
        %v3098 = vsel %vm3062, %v2389, %v3097
        %v3099 = vsel %vm3058, %v2350, %v2324
        %v3100 = vsel %vm3060, %v2376, %v3099
        %v3101 = vsel %vm3062, %v2402, %v3100
        %v3112 = vsel %vm3077, %v2984, %v2958
        %v3113 = vsel %vm3079, %v3010, %v3112
        %v3114 = vsel %vm3081, %v3036, %v3113
        %v3115 = vsel %vm3077, %v2997, %v2971
        %v3116 = vsel %vm3079, %v3023, %v3115
        %v3117 = vsel %vm3081, %v3049, %v3116
        %v3120 = vsel %vm582, %v3063, %v3082
        %v3121 = vsel %vm582, %v3066, %v3085
        %v3122 = vsel %vm582, %v3098, %v3114
        %v3123 = vsel %vm582, %v3101, %v3117
        %v3124 = vld [vmem:[%s6] sm:$0xff]
        %v3125 = vld [vmem:[%s6 + $0x8] sm:$0xff]
        %v3126 = vld [vmem:[%s6 + $0x10] sm:$0xff]
        %v3127 = vld [vmem:[%s6 + $0x18] sm:$0xff]
        %v3128 = vld [vmem:[%s6 + $0x20] sm:$0xff]
        %v3129 = vld [vmem:[%s6 + $0x28] sm:$0xff]
        %v3130 = vld [vmem:[%s394] sm:$0xff]
        %v3131 = vld [vmem:[%s394 + $0x8] sm:$0xff]
        %v3132 = vld [vmem:[%s394 + $0x10] sm:$0xff]
        %v3133 = vld [vmem:[%s394 + $0x18] sm:$0xff]
        %v3134 = vld [vmem:[%s394 + $0x20] sm:$0xff]
        %v3135 = vld [vmem:[%s394 + $0x28] sm:$0xff]
        %v3136 = vld [vmem:[%s394 + $0x30] sm:$0xff]
        %v3137 = vld [vmem:[%s394 + $0x38] sm:$0xff]
        %v3138 = vld [vmem:[%s394 + $0x40] sm:$0xff]
        %v3139 = vld [vmem:[%s394 + $0x48] sm:$0xff]
        %v3140 = vld [vmem:[%s394 + $0x50] sm:$0xff]
        %v3141 = vld [vmem:[%s394 + $0x58] sm:$0xff]
        %v3142 = vld [vmem:[%s394 + $0x60] sm:$0xff]
        %v3143 = vld [vmem:[%s394 + $0x68] sm:$0xff]
        %v3144 = vld [vmem:[%s394 + $0x70] sm:$0xff]
        %v3145 = vld [vmem:[%s394 + $0x78] sm:$0xff]
        %v3146 = vld [vmem:[%s394 + $0x80] sm:$0xff]
        %v3147 = vld [vmem:[%s394 + $0x88] sm:$0xff]
        %v3148 = vld [vmem:[%s394 + $0x90] sm:$0xff]
        %v3149 = vld [vmem:[%s394 + $0x98] sm:$0xff]
        %v3150 = vld [vmem:[%s394 + $0xa0] sm:$0xff]
        %v3151 = vld [vmem:[%s394 + $0xa8] sm:$0xff]
        %v3152 = vld [vmem:[%s394 + $0xb0] sm:$0xff]
        %v3153 = vld [vmem:[%s394 + $0xb8] sm:$0xff]
        %v3154 = vld [vmem:[%s394 + $0xc0] sm:$0xff]
        %v3155 = vld [vmem:[%s394 + $0xc8] sm:$0xff]
        %v3156 = vld [vmem:[%s394 + $0xd0] sm:$0xff]
        %v3157 = vld [vmem:[%s394 + $0xd8] sm:$0xff]
        %v3158 = vld [vmem:[%s394 + $0xe0] sm:$0xff]
        %v3159 = vld [vmem:[%s394 + $0xe8] sm:$0xff]
        %v3160 = vld [vmem:[%s394 + $0xf0] sm:$0xff]
        %v3161 = vld [vmem:[%s394 + $0xf8] sm:$0xff]
        %v3162 = vld [vmem:[%s394 + $0x100] sm:$0xff]
        %v3163 = vld [vmem:[%s394 + $0x108] sm:$0xff]
        %v3164 = vld [vmem:[%s394 + $0x110] sm:$0xff]
        %v3165 = vld [vmem:[%s394 + $0x118] sm:$0xff]
        %v3166 = vld [vmem:[%s394 + $0x120] sm:$0xff]
        %v3167 = vld [vmem:[%s394 + $0x128] sm:$0xff]
        %v3168 = vld [vmem:[%s394 + $0x130] sm:$0xff]
        %v3169 = vld [vmem:[%s394 + $0x138] sm:$0xff]
        %v3170 = vld [vmem:[%s394 + $0x140] sm:$0xff]
        %v3171 = vld [vmem:[%s394 + $0x148] sm:$0xff]
        %v3172 = vld [vmem:[%s394 + $0x150] sm:$0xff]
        %v3173 = vld [vmem:[%s394 + $0x158] sm:$0xff]
        %v3174 = vld [vmem:[%s394 + $0x160] sm:$0xff]
        %v3175 = vld [vmem:[%s394 + $0x168] sm:$0xff]
        %v3176 = vld [vmem:[%s394 + $0x170] sm:$0xff]
        %v3177 = vld [vmem:[%s394 + $0x178] sm:$0xff]
        %v3178 = vld [vmem:[%s394 + $0x180] sm:$0xff]
        %v3179 = vld [vmem:[%s394 + $0x188] sm:$0xff]
        %v3180 = vld [vmem:[%s394 + $0x190] sm:$0xff]
        %v3181 = vld [vmem:[%s394 + $0x198] sm:$0xff]
        %v3182 = vld [vmem:[%s394 + $0x1a0] sm:$0xff]
        %v3183 = vld [vmem:[%s394 + $0x1a8] sm:$0xff]
        %v3184 = vld [vmem:[%s394 + $0x1b0] sm:$0xff]
        %v3185 = vld [vmem:[%s394 + $0x1b8] sm:$0xff]
        %v3186 = vld [vmem:[%s394 + $0x1c0] sm:$0xff]
        %v3187 = vld [vmem:[%s394 + $0x1c8] sm:$0xff]
        %v3188 = vld [vmem:[%s394 + $0x1d0] sm:$0xff]
        %v3189 = vld [vmem:[%s394 + $0x1d8] sm:$0xff]
        %v3190 = vld [vmem:[%s394 + $0x1e0] sm:$0xff]
        %v3191 = vld [vmem:[%s394 + $0x1e8] sm:$0xff]
        %v3192 = vld [vmem:[%s394 + $0x1f0] sm:$0xff]
        %v3193 = vld [vmem:[%s394 + $0x1f8] sm:$0xff]
        %v3194 = vld [vmem:[%s394 + $0x200] sm:$0xff]
        %v3195 = vld [vmem:[%s394 + $0x208] sm:$0xff]
        %v3196 = vld [vmem:[%s394 + $0x210] sm:$0xff]
        %v3197 = vld [vmem:[%s394 + $0x218] sm:$0xff]
        %v3198 = vld [vmem:[%s394 + $0x220] sm:$0xff]
        %v3199 = vld [vmem:[%s394 + $0x228] sm:$0xff]
        %v3200 = vld [vmem:[%s394 + $0x230] sm:$0xff]
        %v3201 = vld [vmem:[%s394 + $0x238] sm:$0xff]
        %v3202 = vld [vmem:[%s394 + $0x240] sm:$0xff]
        %v3203 = vld [vmem:[%s394 + $0x248] sm:$0xff]
        %v3204 = vld [vmem:[%s394 + $0x250] sm:$0xff]
        %v3205 = vld [vmem:[%s394 + $0x258] sm:$0xff]
        %v3206 = vld [vmem:[%s394 + $0x260] sm:$0xff]
        %v3207 = vld [vmem:[%s394 + $0x268] sm:$0xff]
        %v3208 = vld [vmem:[%s394 + $0x270] sm:$0xff]
        %v3209 = vld [vmem:[%s394 + $0x278] sm:$0xff]
        %v3210 = vld [vmem:[%s394 + $0x280] sm:$0xf]
        %v3211 = vld [vmem:[%s394 + $0x288] sm:$0xf]
        %vm3212 = vcmask 556032
        %v3214 = vsel %vm3212, %v3126, 0
        %v3217 = vsel %vm3212, %v3129, 0
        %v3220 = vsel %vm582, %v3210, 0
        %v3223 = vsel %vm582, %v3211, 0
        %3225 = vmatprep.subr.mxu0 %v3131
        %3226 = vmatpush1.msra.mxu0 %v3130
        %3227 = vmatprep.subr.mxu0 %v3133
        %3228 = vmatpush1.msra.mxu0 %v3132
        %3229 = vmatprep.subr.mxu0 %v3135
        %3230 = vmatpush1.msra.mxu0 %v3134
        %3231 = vmatprep.subr.mxu0 %v3137
        %3232 = vmatpush1.msra.mxu0 %v3136
        %3233 = vmatprep.subr.mxu0 %v3139
        %3234 = vmatpush1.msra.mxu0 %v3138
        %3235 = vmatprep.subr.mxu0 %v3141
        %3236 = vmatpush1.msra.mxu0 %v3140
        %3237 = vmatprep.subr.mxu0 %v3143
        %3238 = vmatpush1.msra.mxu0 %v3142
        %3239 = vmatprep.subr.mxu0 %v3145
        %3240 = vmatpush1.msra.mxu0 %v3144
        %3241 = vmatprep.subr.mxu0 %v3147
        %3242 = vmatpush1.msra.mxu0 %v3146
        %3243 = vmatprep.subr.mxu0 %v3149
        %3244 = vmatpush1.msra.mxu0 %v3148
        %3245 = vmatprep.subr.mxu0 %v3151
        %3246 = vmatpush1.msra.mxu0 %v3150
        %3247 = vmatprep.subr.mxu0 %v3153
        %3248 = vmatpush1.msra.mxu0 %v3152
        %3249 = vmatprep.subr.mxu0 %v3155
        %3250 = vmatpush1.msra.mxu0 %v3154
        %3251 = vmatprep.subr.mxu0 %v3157
        %3252 = vmatpush1.msra.mxu0 %v3156
        %3253 = vmatprep.subr.mxu0 %v3159
        %3254 = vmatpush1.msra.mxu0 %v3158
        %3255 = vmatprep.subr.mxu0 %v3161
        %3256 = vmatpush1.msra.mxu0 %v3160
        %3257 = vmatprep.subr.mxu0 %v3163
        %3258 = vmatpush1.msra.mxu0 %v3162
        %3259 = vmatprep.subr.mxu0 %v3165
        %3260 = vmatpush1.msra.mxu0 %v3164
        %3261 = vmatprep.subr.mxu0 %v3167
        %3262 = vmatpush1.msra.mxu0 %v3166
        %3263 = vmatprep.subr.mxu0 %v3169
        %3264 = vmatpush1.msra.mxu0 %v3168
        %3265 = vmatprep.subr.mxu0 %v3171
        %3266 = vmatpush1.msra.mxu0 %v3170
        %3267 = vmatprep.subr.mxu0 %v3173
        %3268 = vmatpush1.msra.mxu0 %v3172
        %3269 = vmatprep.subr.mxu0 %v3175
        %3270 = vmatpush1.msra.mxu0 %v3174
        %3271 = vmatprep.subr.mxu0 %v3177
        %3272 = vmatpush1.msra.mxu0 %v3176
        %3273 = vmatprep.subr.mxu0 %v3179
        %3274 = vmatpush1.msra.mxu0 %v3178
        %3275 = vmatprep.subr.mxu0 %v3181
        %3276 = vmatpush1.msra.mxu0 %v3180
        %3277 = vmatprep.subr.mxu0 %v3183
        %3278 = vmatpush1.msra.mxu0 %v3182
        %3279 = vmatprep.subr.mxu0 %v3185
        %3280 = vmatpush1.msra.mxu0 %v3184
        %3281 = vmatprep.subr.mxu0 %v3187
        %3282 = vmatpush1.msra.mxu0 %v3186
        %3283 = vmatprep.subr.mxu0 %v3189
        %3284 = vmatpush1.msra.mxu0 %v3188
        %3285 = vmatprep.subr.mxu0 %v3191
        %3286 = vmatpush1.msra.mxu0 %v3190
        %3287 = vmatprep.subr.mxu0 %v3193
        %3288 = vmatpush1.msra.mxu0 %v3192
        %3289 = vmatprep.mubr.f32.mxu0 %v3125
        %3290 = vmatmul.mubr.f32.gmra.mrb[0].mxu0 %v3124
        %v3291 = vpop.f32.mrb[0].mxu0
        %v3292 = vadd.f32 0.0, %v3291
        %v3293 = vpop.f32.mrb[0].mxu0
        %v3294 = vadd.f32 0.0, %v3293
        %3295 = vmatprep.mubr.f32.mxu0 %v3128
        %3296 = vmatmul.mubr.f32.gmra.mrb[0].mxu0 %v3127
        %v3297 = vpop.f32.mrb[0].mxu0
        %v3298 = vadd.f32 0.0, %v3297
        %v3299 = vpop.f32.mrb[0].mxu0
        %v3300 = vadd.f32 0.0, %v3299
        %3301 = vdwg.mxu0
        %3302 = vmatprep.subr.mxu0 %v3195
        %3303 = vmatpush1.msra.mxu0 %v3194
        %3304 = vmatprep.subr.mxu0 %v3197
        %3305 = vmatpush1.msra.mxu0 %v3196
        %3306 = vmatprep.subr.mxu0 %v3199
        %3307 = vmatpush1.msra.mxu0 %v3198
        %3308 = vmatprep.subr.mxu0 %v3201
        %3309 = vmatpush1.msra.mxu0 %v3200
        %3310 = vmatprep.subr.mxu0 %v3203
        %3311 = vmatpush1.msra.mxu0 %v3202
        %3312 = vmatprep.subr.mxu0 %v3205
        %3313 = vmatpush1.msra.mxu0 %v3204
        %3314 = vmatprep.subr.mxu0 %v3207
        %3315 = vmatpush1.msra.mxu0 %v3206
        %3316 = vmatprep.subr.mxu0 %v3209
        %3317 = vmatpush1.msra.mxu0 %v3208
        %3318 = vmatprep.subr.mxu0 %v3223
        %3319 = vmatpush1.msra.mxu0 %v3220
        %3320 = vmatprep.subr.mxu0 0.0
        %3321 = vmatpush1.msra.mxu0 0.0
        %3322 = vmatprep.subr.mxu0 0.0
        %3323 = vmatpush1.msra.mxu0 0.0
        %3324 = vmatprep.subr.mxu0 0.0
        %3325 = vmatpush1.msra.mxu0 0.0
        %3326 = vmatprep.subr.mxu0 0.0
        %3327 = vmatpush1.msra.mxu0 0.0
        %3328 = vmatprep.subr.mxu0 0.0
        %3329 = vmatpush1.msra.mxu0 0.0
        %3330 = vmatprep.subr.mxu0 0.0
        %3331 = vmatpush1.msra.mxu0 0.0
        %3332 = vmatprep.subr.mxu0 0.0
        %3333 = vmatpush1.msra.mxu0 0.0
        %3334 = vmatprep.subr.mxu0 0.0
        %3335 = vmatpush1.msra.mxu0 0.0
        %3336 = vmatprep.subr.mxu0 0.0
        %3337 = vmatpush1.msra.mxu0 0.0
        %3338 = vmatprep.subr.mxu0 0.0
        %3339 = vmatpush1.msra.mxu0 0.0
        %3340 = vmatprep.subr.mxu0 0.0
        %3341 = vmatpush1.msra.mxu0 0.0
        %3342 = vmatprep.subr.mxu0 0.0
        %3343 = vmatpush1.msra.mxu0 0.0
        %3344 = vmatprep.subr.mxu0 0.0
        %3345 = vmatpush1.msra.mxu0 0.0
        %3346 = vmatprep.subr.mxu0 0.0
        %3347 = vmatpush1.msra.mxu0 0.0
        %3348 = vmatprep.subr.mxu0 0.0
        %3349 = vmatpush1.msra.mxu0 0.0
        %3350 = vmatprep.subr.mxu0 0.0
        %3351 = vmatpush1.msra.mxu0 0.0
        %3352 = vmatprep.subr.mxu0 0.0
        %3353 = vmatpush1.msra.mxu0 0.0
        %3354 = vmatprep.subr.mxu0 0.0
        %3355 = vmatpush1.msra.mxu0 0.0
        %3356 = vmatprep.subr.mxu0 0.0
        %3357 = vmatpush1.msra.mxu0 0.0
        %3358 = vmatprep.subr.mxu0 0.0
        %3359 = vmatpush1.msra.mxu0 0.0
        %3360 = vmatprep.subr.mxu0 0.0
        %3361 = vmatpush1.msra.mxu0 0.0
        %3362 = vmatprep.subr.mxu0 0.0
        %3363 = vmatpush1.msra.mxu0 0.0
        %3364 = vmatprep.subr.mxu0 0.0
        %3365 = vmatpush1.msra.mxu0 0.0
        %3366 = vmatprep.mubr.f32.mxu0 0.0
        %3367 = vmatmul.mubr.f32.gmra.mrb[0].mxu0 %v3214
        %v3368 = vpop.f32.mrb[0].mxu0
        %v3369 = vadd.f32 %v3292, %v3368
        %v3370 = vpop.f32.mrb[0].mxu0
        %v3371 = vadd.f32 %v3294, %v3370
        %3372 = vmatprep.mubr.f32.mxu0 0.0
        %3373 = vmatmul.mubr.f32.gmra.mrb[0].mxu0 %v3217
        %v3374 = vpop.f32.mrb[0].mxu0
        %v3375 = vadd.f32 %v3298, %v3374
        %v3376 = vpop.f32.mrb[0].mxu0
        %v3377 = vadd.f32 %v3300, %v3376
        %3378 = vdwg.mxu0
        %s3379 = sld [smem:[#allocation2]]
        %v3380 = vstv %s3379
        %v3381 = vmul.f32 %v3380, %v3120
        %v3382 = vmul.f32 %v3380, %v3121
        %v3383 = vmul.f32 %v3380, %v3122
        %v3384 = vmul.f32 %v3380, %v3123
        %s3385 = sld [smem:[#allocation2 + $0x1]]
        %v3386 = vstv %s3385
        %v3387 = vmul.f32 %v3386, %v3369
        %v3388 = vmul.f32 %v3386, %v3371
        %v3389 = vmul.f32 %v3386, %v3375
        %v3390 = vmul.f32 %v3386, %v3377
        %v3391 = vadd.f32 %v3381, %v3387
        %v3392 = vadd.f32 %v3382, %v3388
        %v3393 = vadd.f32 %v3383, %v3389
        %v3394 = vadd.f32 %v3384, %v3390
        %3395 = vst [vmem:[%s399] sm:$0xff] %v3391
        %3396 = vst [vmem:[%s399 + $0x8] sm:$0xff] %v3392
        %3397 = vst [vmem:[%s399 + $0x10] sm:$0xff] %v3393
        %3398 = vst [vmem:[%s399 + $0x18] sm:$0xff] %v3394
        %p3399 = scmp.lt.s32.totalorder %s20, 1
        %s3400 = scalar_select %p3399, %s20, 1
        %s3401 = smul.addr %s3400, 4
        %s3402 = smul.addr %s3401, 8
        %s3403 = scalar_lea.vmem %s8, %s3402
        // Predicated region
        $region57: #{acmix_forward.3} parent=51 // pred_check
          %p3404 = pneg %p231
        $region58: #{acmix_forward.3} parent=51 // pred_check_branch
          %3406 = sbr.rel (%p3404) target = $region60
        $region59: #{acmix_forward.3} parent=51 // pred_region
          _
        $region60: #{acmix_forward.3} parent=51 // pred_fallthru
          _
      $region52: #{acmix_forward.3} parent=5 // pred_fallthru
        _
      %p3407 = scmp.le.s32.totalorder 2, %s15
      // Predicated region
      $region61: #{acmix_forward.3} parent=5 // pred_check
        %p3408 = pneg %p3407
      $region62: #{acmix_forward.3} parent=5 // pred_check_branch
        %3410 = sbr.rel (%p3408) target = $region64
      $region63: #{acmix_forward.3} parent=5 // pred_region
        %s3411 = ssub.s32 %s15, 2
        // Predicated region
        $region65: #{acmix_forward.3} parent=63 // pred_check
          %p3412 = pneg %p237
        $region66: #{acmix_forward.3} parent=63 // pred_check_branch
          %3414 = sbr.rel (%p3412) target = $region68
        $region67: #{acmix_forward.3} parent=63 // pred_region
          %p3415 = scmp.lt.s32.totalorder %s21, 1
          %s3416 = scalar_select %p3415, %s21, 1
          %s3417 = smul.addr %s3416, 4
          %s3418 = smul.addr %s3417, 8
          %s3419 = scalar_lea.vmem %s8, %s3418
        $region68: #{acmix_forward.3} parent=63 // pred_fallthru
          _
      $region64: #{acmix_forward.3} parent=5 // pred_fallthru
        _
    $region6: #{acmix_forward.3} parent=1 // loop_footer
      %s19 = sadd.s32 1, %s15
    $region7: #{acmix_forward.3} parent=1 // loop_footer_branch
      %14 = sbr.rel target = $region3
    $region8: #{acmix_forward.3} parent=1 // loop_exit
      _
    %3420 = vsyncpa [#allocation3], 1
    %s3421 = scalar_lea.sflag [#allocation3], 1
    %3422 = vsyncpa %s3421, 1

</llo_original>
